<compile_context>
chip_gen: v5e
topology: v5e:2x2
jax: 0.10.0
libtpu: 0.0.40
codegen_flags: <defaults>
</compile_context>

<pallas_src>
import jax
import jax.numpy as jnp
from jax.experimental import pallas as pl
from jax.experimental.pallas import tpu as pltpu


# ---------------------------------------------------------------------------
# Fused kernel: BT images per grid step, everything resident in VMEM.
# ---------------------------------------------------------------------------
def mmnist_fused_kernel(
    x_ref,                                   # (BT, 28, 28) f32
    w1e_ref, w1o_ref, b1_ref,                # conv1: (140,120) bf16 x2, (1,120) f32
    w2e_ref, w2o_ref, b2_ref,                # conv2: (600, 80) bf16 x2, (1, 80) f32
    wf1_ref, bf1_ref,                        # fc1: (4,80,128) bf16, (1,128) f32
    wf2_ref, bf2_ref,                        # fc2: (128,128) bf16, (1,128) f32
    out_ref,                                 # (BT, 128) f32 log-probs (padded)
    s1_ref, h1_ref, s2_ref, h2_ref,          # VMEM scratch
):
    f32 = jnp.float32
    bf16 = jnp.bfloat16
    BT = x_ref.shape[0]

    # ---- conv1 (5x5, 1->10): K-fused banded matmul, K = 5*28 = 140 --------
    # LHS rows = (image, out_row); K = (band di, input col j).
    l1 = jnp.concatenate([x_ref[:, di:di + 24, :] for di in range(5)], axis=-1)
    l1 = l1.reshape(BT * 24, 140).astype(bf16)
    c1e = jnp.dot(l1, w1e_ref[...], preferred_element_type=f32)   # even out cols
    c1o = jnp.dot(l1, w1o_ref[...], preferred_element_type=f32)   # odd  out cols

    # ---- 2x2 max-pool + relu: width pool = VPU max(even, odd) -------------
    p1 = jnp.maximum(c1e, c1o) + b1_ref[...]                      # (BT*24, 120)
    s1_ref[...] = p1.reshape(BT, 24, 120)
    # height pool: stride-2 sublane reads from scratch, then max + relu.
    h1_ref[...] = jnp.maximum(
        jnp.maximum(s1_ref[:, pl.ds(0, 12, 2), :],
                    s1_ref[:, pl.ds(1, 12, 2), :]),
        0.0)                                                      # (BT, 12, 120)

    # ---- conv2 (5x5, 10->20): K-fused banded matmul, K = 5*120 = 600 -------
    # TODO(synk): Dropout2d skipped (eval mode).
    l2 = jnp.concatenate([h1_ref[:, di:di + 8, :] for di in range(5)], axis=-1)
    l2 = l2.reshape(BT * 8, 600).astype(bf16)
    c2e = jnp.dot(l2, w2e_ref[...], preferred_element_type=f32)   # (BT*8, 80)
    c2o = jnp.dot(l2, w2o_ref[...], preferred_element_type=f32)

    p2 = jnp.maximum(c2e, c2o) + b2_ref[...]
    s2_ref[...] = p2.reshape(BT, 8, 80)
    h2_ref[...] = jnp.maximum(
        jnp.maximum(s2_ref[:, pl.ds(0, 4, 2), :],
                    s2_ref[:, pl.ds(1, 4, 2), :]),
        0.0)                                                      # (BT, 4, 80)

    # ---- fc1 + relu (4 partials over pooled rows; weights pre-permuted so
    # torch's NCHW flatten needs no activation transpose) --------------------
    f1 = bf1_ref[...]                                             # (1, 128) bcast
    for i in range(4):
        f1 = f1 + jnp.dot(h2_ref[:, i, :].astype(bf16), wf1_ref[i],
                          preferred_element_type=f32)
    f1 = jnp.maximum(f1, 0.0)                                     # (BT, 128)
    # TODO(synk): F.dropout skipped (eval mode).

    # ---- fc2 + log_softmax (padded class lanes have bias -1e9 -> exp == 0) -
    logits = (jnp.dot(f1.astype(bf16), wf2_ref[...],
                      preferred_element_type=f32) + bf2_ref[...])
    mx = jnp.max(logits, axis=-1, keepdims=True)
    lse = jnp.log(jnp.sum(jnp.exp(logits - mx), axis=-1, keepdims=True))
    out_ref[...] = (logits - mx - lse).astype(out_ref.dtype)


# ---------------------------------------------------------------------------
# Weight packing (plain JAX, init-time only).  Inputs are in PyTorch layout.
# ---------------------------------------------------------------------------
def _pack_conv1(w, b):
    """w: (10,1,5,5), b: (10,) -> even/odd (140,120) slabs + bias row (1,120)."""
    ker = jnp.transpose(w[:, 0], (1, 2, 0)).astype(jnp.float32)   # (di, dj, oc)
    we = jnp.zeros((5, 28, 120), jnp.float32)
    wo = jnp.zeros((5, 28, 120), jnp.float32)
    for wh in range(12):                                          # pooled width idx
        we = we.at[:, 2 * wh:2 * wh + 5, wh * 10:(wh + 1) * 10].set(ker)
        wo = wo.at[:, 2 * wh + 1:2 * wh + 6, wh * 10:(wh + 1) * 10].set(ker)
    bias = jnp.tile(b.astype(jnp.float32), 12).reshape(1, 120)
    return we.reshape(140, 120), wo.reshape(140, 120), bias


def _pack_conv2(w, b):
    """w: (20,10,5,5), b: (20,) -> even/odd (600,80) slabs + bias row (1,80)."""
    ker = jnp.transpose(w, (2, 3, 1, 0)).astype(jnp.float32)      # (di, dj, ic, oc)
    we = jnp.zeros((5, 12, 10, 80), jnp.float32)
    wo = jnp.zeros((5, 12, 10, 80), jnp.float32)
    for jh in range(4):                                           # pooled width idx
        we = we.at[:, 2 * jh:2 * jh + 5, :, jh * 20:(jh + 1) * 20].set(ker)
        wo = wo.at[:, 2 * jh + 1:2 * jh + 6, :, jh * 20:(jh + 1) * 20].set(ker)
    bias = jnp.tile(b.astype(jnp.float32), 4).reshape(1, 80)
    return we.reshape(600, 80), wo.reshape(600, 80), bias


def _pack_fc1(w, b):
    """w: (50,320) over torch NCHW flatten (16*oc + 4*i + j) -> (4, 80, 128)."""
    t = jnp.transpose(w.reshape(50, 20, 4, 4), (2, 3, 1, 0)).reshape(4, 80, 50)
    wf1 = jnp.zeros((4, 80, 128), jnp.float32).at[:, :, :50].set(t)
    bf1 = jnp.zeros((1, 128), jnp.float32).at[0, :50].set(b)
    return wf1, bf1


def _pack_fc2(w, b):
    """w: (10,50) -> (128,128); padded class lanes get bias -1e9."""
    wf2 = jnp.zeros((128, 128), jnp.float32).at[:50, :10].set(w.T)
    bf2 = jnp.full((1, 128), -1e9, jnp.float32).at[0, :10].set(b)
    return wf2, bf2


def pack_params(p):
    bf = jnp.bfloat16
    w1e, w1o, b1 = _pack_conv1(p["conv1_w"], p["conv1_b"])
    w2e, w2o, b2 = _pack_conv2(p["conv2_w"], p["conv2_b"])
    wf1, bf1 = _pack_fc1(p["fc1_w"], p["fc1_b"])
    wf2, bf2 = _pack_fc2(p["fc2_w"], p["fc2_b"])
    return (w1e.astype(bf), w1o.astype(bf), b1,
            w2e.astype(bf), w2o.astype(bf), b2,
            wf1.astype(bf), bf1,
            wf2.astype(bf), bf2)


# ---------------------------------------------------------------------------
# Parameters (PyTorch-default uniform init, stored in PyTorch layouts).
# ---------------------------------------------------------------------------
def init_torch_params(key):
    ks = jax.random.split(key, 8)

    def u(k, shape, fan_in):
        bound = float(fan_in) ** -0.5
        return jax.random.uniform(k, shape, jnp.float32, -bound, bound)

    return dict(
        conv1_w=u(ks[0], (10, 1, 5, 5), 25),   conv1_b=u(ks[1], (10,), 25),
        conv2_w=u(ks[2], (20, 10, 5, 5), 250), conv2_b=u(ks[3], (20,), 250),
        fc1_w=u(ks[4], (50, 320), 320),        fc1_b=u(ks[5], (50,), 320),
        fc2_w=u(ks[6], (10, 50), 50),          fc2_b=u(ks[7], (10,), 50))


# ---------------------------------------------------------------------------
# Forward wrapper: one fused pallas_call, BT images per grid step.
# ---------------------------------------------------------------------------
def mmnist_forward(x_nchw, packed, *, block_b=8):
    B = x_nchw.shape[0]
    Bp = ((B + block_b - 1) // block_b) * block_b
    x = x_nchw[:, 0, :, :].astype(jnp.float32)                    # (B, 28, 28)
    if Bp != B:
        x = jnp.pad(x, ((0, Bp - B), (0, 0), (0, 0)))

    def const_spec(a):
        return pl.BlockSpec(a.shape, lambda g, nd=a.ndim: (0,) * nd)

    out = pl.pallas_call(
        mmnist_fused_kernel,
        out_shape=jax.ShapeDtypeStruct((Bp, 128), jnp.float32),
        grid=(Bp // block_b,),
        in_specs=[pl.BlockSpec((block_b, 28, 28), lambda g: (g, 0, 0))]
                + [const_spec(a) for a in packed],
        out_specs=pl.BlockSpec((block_b, 128), lambda g: (g, 0)),
        scratch_shapes=[
            pltpu.VMEM((block_b, 24, 120), jnp.float32),   # conv1 pre-height-pool
            pltpu.VMEM((block_b, 12, 120), jnp.float32),   # pooled h1
            pltpu.VMEM((block_b, 8, 80), jnp.float32),     # conv2 pre-height-pool
            pltpu.VMEM((block_b, 4, 80), jnp.float32),     # pooled h2
        ],
        compiler_params=pltpu.CompilerParams(
            dimension_semantics=("parallel",)),
    )(x, *packed)
    return out[:B, :10]                                           # (B, 10)


# ---------------------------------------------------------------------------
# Pure-JAX reference (eval mode, default TPU precision) for a sanity check.
# ---------------------------------------------------------------------------
def mmnist_reference(x_nchw, p):
    def conv(x, w, b):
        y = jax.lax.conv_general_dilated(
            x, w, window_strides=(1, 1), padding="VALID",
            dimension_numbers=("NCHW", "OIHW", "NCHW"))
        return y + b[None, :, None, None]

    def pool2(x):
        return jax.lax.reduce_window(x, -jnp.inf, jax.lax.max,
                                     (1, 1, 2, 2), (1, 1, 2, 2), "VALID")

    x = x_nchw.astype(jnp.float32)
    h = jax.nn.relu(pool2(conv(x, p["conv1_w"], p["conv1_b"])))
    h = jax.nn.relu(pool2(conv(h, p["conv2_w"], p["conv2_b"])))
    h = h.reshape(h.shape[0], -1)                                 # (B, 320) NCHW order
    h = jax.nn.relu(jnp.matmul(h, p["fc1_w"].T) + p["fc1_b"])
    logits = jnp.matmul(h, p["fc2_w"].T) + p["fc2_b"]
    return jax.nn.log_softmax(logits, axis=-1)


if __name__ == "__main__":
    key = jax.random.PRNGKey(0)
    k_param, k_x = jax.random.split(key)
    params = init_torch_params(k_param)
    packed = pack_params(params)

    # MNIST-shaped input implied by the 320-feature flatten: (B, 1, 28, 28).
    # B=16 with block_b=8 -> 2 grid steps (even; both v7x cores busy).
    x = jax.random.normal(k_x, (16, 1, 28, 28), dtype=jnp.float32)

    out = jax.jit(mmnist_forward)(x, packed)
    out = jax.block_until_ready(out)

    assert out.shape == (16, 10)
    # log_softmax rows should exponentiate-sum to ~1
    row_sums = jnp.exp(out).sum(axis=1)
    assert bool(jnp.all(jnp.abs(row_sums - 1.0) < 1e-4))
    # match the pure-JAX reference forward pass (default/bf16-MXU precision)
    ref = mmnist_reference(x, params)
    max_err = float(jnp.max(jnp.abs(out - ref)))
    assert max_err < 5e-2, f"mismatch vs reference: {max_err}"
    print("KERNEL_OK")
</pallas_src>

<mosaic_0001>
module attributes {stable_mosaic.version = 11 : i64} {
  func.func @mmnist_fused_kernel(%arg0: i32, %arg1: memref<8x28x28xf32, #tpu.memory_space<vmem>>, %arg2: memref<140x120xbf16, #tpu.memory_space<vmem>>, %arg3: memref<140x120xbf16, #tpu.memory_space<vmem>>, %arg4: memref<1x120xf32, #tpu.memory_space<vmem>>, %arg5: memref<600x80xbf16, #tpu.memory_space<vmem>>, %arg6: memref<600x80xbf16, #tpu.memory_space<vmem>>, %arg7: memref<1x80xf32, #tpu.memory_space<vmem>>, %arg8: memref<4x80x128xbf16, #tpu.memory_space<vmem>>, %arg9: memref<1x128xf32, #tpu.memory_space<vmem>>, %arg10: memref<128x128xbf16, #tpu.memory_space<vmem>>, %arg11: memref<1x128xf32, #tpu.memory_space<vmem>>, %arg12: memref<8x128xf32, #tpu.memory_space<vmem>>, %arg13: memref<8x24x120xf32, #tpu.memory_space<vmem>>, %arg14: memref<8x12x120xf32, #tpu.memory_space<vmem>>, %arg15: memref<8x8x80xf32, #tpu.memory_space<vmem>>, %arg16: memref<8x4x80xf32, #tpu.memory_space<vmem>>) attributes {dimension_semantics = [#tpu.dimension_semantics<parallel>], iteration_bounds = array<i64: 2>, scalar_prefetch = 0 : i64, scratch_operands = 4 : i64, tpu.core_type = #tpu.core_type<tc>, window_params = [{transform_indices = @transform_0, window_bounds = array<i64: 8, 28, 28>}, {pipeline_mode = #tpu.pipeline_mode<synchronous>, transform_indices = @transform_1, window_bounds = array<i64: 140, 120>}, {pipeline_mode = #tpu.pipeline_mode<synchronous>, transform_indices = @transform_2, window_bounds = array<i64: 140, 120>}, {pipeline_mode = #tpu.pipeline_mode<synchronous>, transform_indices = @transform_3, window_bounds = array<i64: 1, 120>}, {pipeline_mode = #tpu.pipeline_mode<synchronous>, transform_indices = @transform_4, window_bounds = array<i64: 600, 80>}, {pipeline_mode = #tpu.pipeline_mode<synchronous>, transform_indices = @transform_5, window_bounds = array<i64: 600, 80>}, {pipeline_mode = #tpu.pipeline_mode<synchronous>, transform_indices = @transform_6, window_bounds = array<i64: 1, 80>}, {pipeline_mode = #tpu.pipeline_mode<synchronous>, transform_indices = @transform_7, window_bounds = array<i64: 4, 80, 128>}, {pipeline_mode = #tpu.pipeline_mode<synchronous>, transform_indices = @transform_8, window_bounds = array<i64: 1, 128>}, {pipeline_mode = #tpu.pipeline_mode<synchronous>, transform_indices = @transform_9, window_bounds = array<i64: 128, 128>}, {pipeline_mode = #tpu.pipeline_mode<synchronous>, transform_indices = @transform_10, window_bounds = array<i64: 1, 128>}, {transform_indices = @transform_11, window_bounds = array<i64: 8, 128>}]} {
    %c0 = arith.constant 0 : index
    %c0_0 = arith.constant 0 : index
    %c0_1 = arith.constant 0 : index
    %0 = vector.load %arg1[%c0, %c0_0, %c0_1] : memref<8x28x28xf32, #tpu.memory_space<vmem>>, vector<8x24x28xf32>
    %c0_2 = arith.constant 0 : index
    %c1 = arith.constant 1 : index
    %c0_3 = arith.constant 0 : index
    %1 = vector.load %arg1[%c0_2, %c1, %c0_3] : memref<8x28x28xf32, #tpu.memory_space<vmem>>, vector<8x24x28xf32>
    %c0_4 = arith.constant 0 : index
    %c2 = arith.constant 2 : index
    %c0_5 = arith.constant 0 : index
    %2 = vector.load %arg1[%c0_4, %c2, %c0_5] : memref<8x28x28xf32, #tpu.memory_space<vmem>>, vector<8x24x28xf32>
    %c0_6 = arith.constant 0 : index
    %c3 = arith.constant 3 : index
    %c0_7 = arith.constant 0 : index
    %3 = vector.load %arg1[%c0_6, %c3, %c0_7] : memref<8x28x28xf32, #tpu.memory_space<vmem>>, vector<8x24x28xf32>
    %c0_8 = arith.constant 0 : index
    %c4 = arith.constant 4 : index
    %c0_9 = arith.constant 0 : index
    %4 = vector.load %arg1[%c0_8, %c4, %c0_9] : memref<8x28x28xf32, #tpu.memory_space<vmem>>, vector<8x24x28xf32>
    %5 = tpu.concatenate %0, %1, %2, %3, %4 in 2 : vector<8x24x28xf32>, vector<8x24x28xf32>, vector<8x24x28xf32>, vector<8x24x28xf32>, vector<8x24x28xf32> -> vector<8x24x140xf32>
    %6 = vector.shape_cast %5 : vector<8x24x140xf32> to vector<192x140xf32>
    %7 = arith.truncf %6 : vector<192x140xf32> to vector<192x140xbf16>
    %c0_10 = arith.constant 0 : index
    %c0_11 = arith.constant 0 : index
    %8 = vector.load %arg2[%c0_10, %c0_11] : memref<140x120xbf16, #tpu.memory_space<vmem>>, vector<140x120xbf16>
    %cst = arith.constant dense<0.000000e+00> : vector<192x120xf32>
    %9 = tpu.matmul %7, %8, %cst {dimension_numbers = #tpu.dot_dimension_numbers<[1], [0], [0], [1], [0, 0, 1, 1], [], []>} : vector<192x140xbf16>, vector<140x120xbf16>, vector<192x120xf32> -> vector<192x120xf32>
    %c0_12 = arith.constant 0 : index
    %c0_13 = arith.constant 0 : index
    %10 = vector.load %arg3[%c0_12, %c0_13] : memref<140x120xbf16, #tpu.memory_space<vmem>>, vector<140x120xbf16>
    %cst_14 = arith.constant dense<0.000000e+00> : vector<192x120xf32>
    %11 = tpu.matmul %7, %10, %cst_14 {dimension_numbers = #tpu.dot_dimension_numbers<[1], [0], [0], [1], [0, 0, 1, 1], [], []>} : vector<192x140xbf16>, vector<140x120xbf16>, vector<192x120xf32> -> vector<192x120xf32>
    %12 = arith.maximumf %9, %11 : vector<192x120xf32>
    %c0_15 = arith.constant 0 : index
    %c0_16 = arith.constant 0 : index
    %13 = vector.load %arg4[%c0_15, %c0_16] : memref<1x120xf32, #tpu.memory_space<vmem>>, vector<1x120xf32>
    %14 = vector.broadcast %13 : vector<1x120xf32> to vector<192x120xf32>
    %15 = arith.addf %12, %14 : vector<192x120xf32>
    %16 = vector.shape_cast %15 : vector<192x120xf32> to vector<8x24x120xf32>
    %c0_17 = arith.constant 0 : index
    %c0_18 = arith.constant 0 : index
    %c0_19 = arith.constant 0 : index
    %17 = vector.load %arg13[%c0_17, %c0_18, %c0_19] : memref<8x24x120xf32, #tpu.memory_space<vmem>>, vector<8x24x120xf32>
    tpu.vector_store %arg13[%c0_17, %c0_18, %c0_19], %16 {strides = array<i32>} : memref<8x24x120xf32, #tpu.memory_space<vmem>>, vector<8x24x120xf32>,
    %c0_20 = arith.constant 0 : index
    %c0_21 = arith.constant 0 : index
    %c0_22 = arith.constant 0 : index
    %18 = tpu.strided_load %arg13[%c0_20, %c0_21, %c0_22] {strides = array<i32: 1, 2, 1>} : memref<8x24x120xf32, #tpu.memory_space<vmem>>, vector<8x12x120xf32>
    %c0_23 = arith.constant 0 : index
    %c1_24 = arith.constant 1 : index
    %c0_25 = arith.constant 0 : index
    %19 = tpu.strided_load %arg13[%c0_23, %c1_24, %c0_25] {strides = array<i32: 1, 2, 1>} : memref<8x24x120xf32, #tpu.memory_space<vmem>>, vector<8x12x120xf32>
    %20 = arith.maximumf %18, %19 : vector<8x12x120xf32>
    %cst_26 = arith.constant 0.000000e+00 : f32
    %21 = vector.broadcast %cst_26 : f32 to vector<8x12x120xf32>
    %22 = arith.maximumf %20, %21 : vector<8x12x120xf32>
    %c0_27 = arith.constant 0 : index
    %c0_28 = arith.constant 0 : index
    %c0_29 = arith.constant 0 : index
    %23 = vector.load %arg14[%c0_27, %c0_28, %c0_29] : memref<8x12x120xf32, #tpu.memory_space<vmem>>, vector<8x12x120xf32>
    tpu.vector_store %arg14[%c0_27, %c0_28, %c0_29], %22 {strides = array<i32>} : memref<8x12x120xf32, #tpu.memory_space<vmem>>, vector<8x12x120xf32>,
    %c0_30 = arith.constant 0 : index
    %c0_31 = arith.constant 0 : index
    %c0_32 = arith.constant 0 : index
    %24 = vector.load %arg14[%c0_30, %c0_31, %c0_32] : memref<8x12x120xf32, #tpu.memory_space<vmem>>, vector<8x8x120xf32>
    %c0_33 = arith.constant 0 : index
    %c1_34 = arith.constant 1 : index
    %c0_35 = arith.constant 0 : index
    %25 = vector.load %arg14[%c0_33, %c1_34, %c0_35] : memref<8x12x120xf32, #tpu.memory_space<vmem>>, vector<8x8x120xf32>
    %c0_36 = arith.constant 0 : index
    %c2_37 = arith.constant 2 : index
    %c0_38 = arith.constant 0 : index
    %26 = vector.load %arg14[%c0_36, %c2_37, %c0_38] : memref<8x12x120xf32, #tpu.memory_space<vmem>>, vector<8x8x120xf32>
    %c0_39 = arith.constant 0 : index
    %c3_40 = arith.constant 3 : index
    %c0_41 = arith.constant 0 : index
    %27 = vector.load %arg14[%c0_39, %c3_40, %c0_41] : memref<8x12x120xf32, #tpu.memory_space<vmem>>, vector<8x8x120xf32>
    %c0_42 = arith.constant 0 : index
    %c4_43 = arith.constant 4 : index
    %c0_44 = arith.constant 0 : index
    %28 = vector.load %arg14[%c0_42, %c4_43, %c0_44] : memref<8x12x120xf32, #tpu.memory_space<vmem>>, vector<8x8x120xf32>
    %29 = tpu.concatenate %24, %25, %26, %27, %28 in 2 : vector<8x8x120xf32>, vector<8x8x120xf32>, vector<8x8x120xf32>, vector<8x8x120xf32>, vector<8x8x120xf32> -> vector<8x8x600xf32>
    %30 = vector.shape_cast %29 : vector<8x8x600xf32> to vector<64x600xf32>
    %31 = arith.truncf %30 : vector<64x600xf32> to vector<64x600xbf16>
    %c0_45 = arith.constant 0 : index
    %c0_46 = arith.constant 0 : index
    %32 = vector.load %arg5[%c0_45, %c0_46] : memref<600x80xbf16, #tpu.memory_space<vmem>>, vector<600x80xbf16>
    %cst_47 = arith.constant dense<0.000000e+00> : vector<64x80xf32>
    %33 = tpu.matmul %31, %32, %cst_47 {dimension_numbers = #tpu.dot_dimension_numbers<[1], [0], [0], [1], [0, 0, 1, 1], [], []>} : vector<64x600xbf16>, vector<600x80xbf16>, vector<64x80xf32> -> vector<64x80xf32>
    %c0_48 = arith.constant 0 : index
    %c0_49 = arith.constant 0 : index
    %34 = vector.load %arg6[%c0_48, %c0_49] : memref<600x80xbf16, #tpu.memory_space<vmem>>, vector<600x80xbf16>
    %cst_50 = arith.constant dense<0.000000e+00> : vector<64x80xf32>
    %35 = tpu.matmul %31, %34, %cst_50 {dimension_numbers = #tpu.dot_dimension_numbers<[1], [0], [0], [1], [0, 0, 1, 1], [], []>} : vector<64x600xbf16>, vector<600x80xbf16>, vector<64x80xf32> -> vector<64x80xf32>
    %36 = arith.maximumf %33, %35 : vector<64x80xf32>
    %c0_51 = arith.constant 0 : index
    %c0_52 = arith.constant 0 : index
    %37 = vector.load %arg7[%c0_51, %c0_52] : memref<1x80xf32, #tpu.memory_space<vmem>>, vector<1x80xf32>
    %38 = vector.broadcast %37 : vector<1x80xf32> to vector<64x80xf32>
    %39 = arith.addf %36, %38 : vector<64x80xf32>
    %40 = vector.shape_cast %39 : vector<64x80xf32> to vector<8x8x80xf32>
    %c0_53 = arith.constant 0 : index
    %c0_54 = arith.constant 0 : index
    %c0_55 = arith.constant 0 : index
    %41 = vector.load %arg15[%c0_53, %c0_54, %c0_55] : memref<8x8x80xf32, #tpu.memory_space<vmem>>, vector<8x8x80xf32>
    tpu.vector_store %arg15[%c0_53, %c0_54, %c0_55], %40 {strides = array<i32>} : memref<8x8x80xf32, #tpu.memory_space<vmem>>, vector<8x8x80xf32>,
    %c0_56 = arith.constant 0 : index
    %c0_57 = arith.constant 0 : index
    %c0_58 = arith.constant 0 : index
    %42 = tpu.strided_load %arg15[%c0_56, %c0_57, %c0_58] {strides = array<i32: 1, 2, 1>} : memref<8x8x80xf32, #tpu.memory_space<vmem>>, vector<8x4x80xf32>
    %c0_59 = arith.constant 0 : index
    %c1_60 = arith.constant 1 : index
    %c0_61 = arith.constant 0 : index
    %43 = tpu.strided_load %arg15[%c0_59, %c1_60, %c0_61] {strides = array<i32: 1, 2, 1>} : memref<8x8x80xf32, #tpu.memory_space<vmem>>, vector<8x4x80xf32>
    %44 = arith.maximumf %42, %43 : vector<8x4x80xf32>
    %cst_62 = arith.constant 0.000000e+00 : f32
    %45 = vector.broadcast %cst_62 : f32 to vector<8x4x80xf32>
    %46 = arith.maximumf %44, %45 : vector<8x4x80xf32>
    %c0_63 = arith.constant 0 : index
    %c0_64 = arith.constant 0 : index
    %c0_65 = arith.constant 0 : index
    %47 = vector.load %arg16[%c0_63, %c0_64, %c0_65] : memref<8x4x80xf32, #tpu.memory_space<vmem>>, vector<8x4x80xf32>
    tpu.vector_store %arg16[%c0_63, %c0_64, %c0_65], %46 {strides = array<i32>} : memref<8x4x80xf32, #tpu.memory_space<vmem>>, vector<8x4x80xf32>,
    %c0_66 = arith.constant 0 : index
    %c0_67 = arith.constant 0 : index
    %48 = vector.load %arg9[%c0_66, %c0_67] : memref<1x128xf32, #tpu.memory_space<vmem>>, vector<1x128xf32>
    %c0_68 = arith.constant 0 : index
    %c0_69 = arith.constant 0 : index
    %c0_70 = arith.constant 0 : index
    %49 = vector.load %arg16[%c0_68, %c0_69, %c0_70] : memref<8x4x80xf32, #tpu.memory_space<vmem>>, vector<8x1x80xf32>
    %50 = vector.shape_cast %49 : vector<8x1x80xf32> to vector<8x80xf32>
    %51 = arith.truncf %50 : vector<8x80xf32> to vector<8x80xbf16>
    %c0_71 = arith.constant 0 : index
    %c0_72 = arith.constant 0 : index
    %c0_73 = arith.constant 0 : index
    %52 = vector.load %arg8[%c0_71, %c0_72, %c0_73] : memref<4x80x128xbf16, #tpu.memory_space<vmem>>, vector<1x80x128xbf16>
    %53 = vector.shape_cast %52 : vector<1x80x128xbf16> to vector<80x128xbf16>
    %cst_74 = arith.constant dense<0.000000e+00> : vector<8x128xf32>
    %54 = tpu.matmul %51, %53, %cst_74 {dimension_numbers = #tpu.dot_dimension_numbers<[1], [0], [0], [1], [0, 0, 1, 1], [], []>} : vector<8x80xbf16>, vector<80x128xbf16>, vector<8x128xf32> -> vector<8x128xf32>
    %55 = vector.broadcast %48 : vector<1x128xf32> to vector<8x128xf32>
    %56 = arith.addf %55, %54 : vector<8x128xf32>
    %c0_75 = arith.constant 0 : index
    %c1_76 = arith.constant 1 : index
    %c0_77 = arith.constant 0 : index
    %57 = vector.load %arg16[%c0_75, %c1_76, %c0_77] : memref<8x4x80xf32, #tpu.memory_space<vmem>>, vector<8x1x80xf32>
    %58 = vector.shape_cast %57 : vector<8x1x80xf32> to vector<8x80xf32>
    %59 = arith.truncf %58 : vector<8x80xf32> to vector<8x80xbf16>
    %c1_78 = arith.constant 1 : index
    %c0_79 = arith.constant 0 : index
    %c0_80 = arith.constant 0 : index
    %60 = vector.load %arg8[%c1_78, %c0_79, %c0_80] : memref<4x80x128xbf16, #tpu.memory_space<vmem>>, vector<1x80x128xbf16>
    %61 = vector.shape_cast %60 : vector<1x80x128xbf16> to vector<80x128xbf16>
    %cst_81 = arith.constant dense<0.000000e+00> : vector<8x128xf32>
    %62 = tpu.matmul %59, %61, %cst_81 {dimension_numbers = #tpu.dot_dimension_numbers<[1], [0], [0], [1], [0, 0, 1, 1], [], []>} : vector<8x80xbf16>, vector<80x128xbf16>, vector<8x128xf32> -> vector<8x128xf32>
    %63 = arith.addf %56, %62 : vector<8x128xf32>
    %c0_82 = arith.constant 0 : index
    %c2_83 = arith.constant 2 : index
    %c0_84 = arith.constant 0 : index
    %64 = vector.load %arg16[%c0_82, %c2_83, %c0_84] : memref<8x4x80xf32, #tpu.memory_space<vmem>>, vector<8x1x80xf32>
    %65 = vector.shape_cast %64 : vector<8x1x80xf32> to vector<8x80xf32>
    %66 = arith.truncf %65 : vector<8x80xf32> to vector<8x80xbf16>
    %c2_85 = arith.constant 2 : index
    %c0_86 = arith.constant 0 : index
    %c0_87 = arith.constant 0 : index
    %67 = vector.load %arg8[%c2_85, %c0_86, %c0_87] : memref<4x80x128xbf16, #tpu.memory_space<vmem>>, vector<1x80x128xbf16>
    %68 = vector.shape_cast %67 : vector<1x80x128xbf16> to vector<80x128xbf16>
    %cst_88 = arith.constant dense<0.000000e+00> : vector<8x128xf32>
    %69 = tpu.matmul %66, %68, %cst_88 {dimension_numbers = #tpu.dot_dimension_numbers<[1], [0], [0], [1], [0, 0, 1, 1], [], []>} : vector<8x80xbf16>, vector<80x128xbf16>, vector<8x128xf32> -> vector<8x128xf32>
    %70 = arith.addf %63, %69 : vector<8x128xf32>
    %c0_89 = arith.constant 0 : index
    %c3_90 = arith.constant 3 : index
    %c0_91 = arith.constant 0 : index
    %71 = vector.load %arg16[%c0_89, %c3_90, %c0_91] : memref<8x4x80xf32, #tpu.memory_space<vmem>>, vector<8x1x80xf32>
    %72 = vector.shape_cast %71 : vector<8x1x80xf32> to vector<8x80xf32>
    %73 = arith.truncf %72 : vector<8x80xf32> to vector<8x80xbf16>
    %c3_92 = arith.constant 3 : index
    %c0_93 = arith.constant 0 : index
    %c0_94 = arith.constant 0 : index
    %74 = vector.load %arg8[%c3_92, %c0_93, %c0_94] : memref<4x80x128xbf16, #tpu.memory_space<vmem>>, vector<1x80x128xbf16>
    %75 = vector.shape_cast %74 : vector<1x80x128xbf16> to vector<80x128xbf16>
    %cst_95 = arith.constant dense<0.000000e+00> : vector<8x128xf32>
    %76 = tpu.matmul %73, %75, %cst_95 {dimension_numbers = #tpu.dot_dimension_numbers<[1], [0], [0], [1], [0, 0, 1, 1], [], []>} : vector<8x80xbf16>, vector<80x128xbf16>, vector<8x128xf32> -> vector<8x128xf32>
    %77 = arith.addf %70, %76 : vector<8x128xf32>
    %cst_96 = arith.constant 0.000000e+00 : f32
    %78 = vector.broadcast %cst_96 : f32 to vector<8x128xf32>
    %79 = arith.maximumf %77, %78 : vector<8x128xf32>
    %80 = arith.truncf %79 : vector<8x128xf32> to vector<8x128xbf16>
    %c0_97 = arith.constant 0 : index
    %c0_98 = arith.constant 0 : index
    %81 = vector.load %arg10[%c0_97, %c0_98] : memref<128x128xbf16, #tpu.memory_space<vmem>>, vector<128x128xbf16>
    %cst_99 = arith.constant dense<0.000000e+00> : vector<8x128xf32>
    %82 = tpu.matmul %80, %81, %cst_99 {dimension_numbers = #tpu.dot_dimension_numbers<[1], [0], [0], [1], [0, 0, 1, 1], [], []>} : vector<8x128xbf16>, vector<128x128xbf16>, vector<8x128xf32> -> vector<8x128xf32>
    %c0_100 = arith.constant 0 : index
    %c0_101 = arith.constant 0 : index
    %83 = vector.load %arg11[%c0_100, %c0_101] : memref<1x128xf32, #tpu.memory_space<vmem>>, vector<1x128xf32>
    %84 = vector.broadcast %83 : vector<1x128xf32> to vector<8x128xf32>
    %85 = arith.addf %82, %84 : vector<8x128xf32>
    %cst_102 = arith.constant dense<0xFF800000> : vector<8xf32>
    %86 = vector.multi_reduction <maximumf>, %85, %cst_102 [1] : vector<8x128xf32> to vector<8xf32>
    %87 = vector.shape_cast %86 : vector<8xf32> to vector<8x1xf32>
    %88 = vector.broadcast %87 : vector<8x1xf32> to vector<8x128xf32>
    %89 = arith.subf %85, %88 : vector<8x128xf32>
    %90 = math.exp %89 : vector<8x128xf32>
    %cst_103 = arith.constant dense<0.000000e+00> : vector<8xf32>
    %91 = vector.multi_reduction <add>, %90, %cst_103 [1] : vector<8x128xf32> to vector<8xf32>
    %92 = vector.shape_cast %91 : vector<8xf32> to vector<8x1xf32>
    %93 = math.log %92 : vector<8x1xf32>
    %94 = vector.broadcast %87 : vector<8x1xf32> to vector<8x128xf32>
    %95 = arith.subf %85, %94 : vector<8x128xf32>
    %96 = vector.broadcast %93 : vector<8x1xf32> to vector<8x128xf32>
    %97 = arith.subf %95, %96 : vector<8x128xf32>
    %c0_104 = arith.constant 0 : index
    %c0_105 = arith.constant 0 : index
    %98 = vector.load %arg12[%c0_104, %c0_105] : memref<8x128xf32, #tpu.memory_space<vmem>>, vector<8x128xf32>
    tpu.vector_store %arg12[%c0_104, %c0_105], %97 {strides = array<i32>} : memref<8x128xf32, #tpu.memory_space<vmem>>, vector<8x128xf32>,
    return
  }
  func.func @transform_0(%arg0: i32) -> (i32, i32, i32) {
    %c0_i32 = arith.constant 0 : i32
    %c0_i32_0 = arith.constant 0 : i32
    %c0_i32_1 = arith.constant 0 : i32
    return %arg0, %c0_i32, %c0_i32_0 : i32, i32, i32
  }
  func.func @transform_1(%arg0: i32) -> (i32, i32) {
    %c0_i32 = arith.constant 0 : i32
    %c0_i32_0 = arith.constant 0 : i32
    %c0_i32_1 = arith.constant 0 : i32
    return %c0_i32, %c0_i32_0 : i32, i32
  }
  func.func @transform_2(%arg0: i32) -> (i32, i32) {
    %c0_i32 = arith.constant 0 : i32
    %c0_i32_0 = arith.constant 0 : i32
    %c0_i32_1 = arith.constant 0 : i32
    return %c0_i32, %c0_i32_0 : i32, i32
  }
  func.func @transform_3(%arg0: i32) -> (i32, i32) {
    %c0_i32 = arith.constant 0 : i32
    %c0_i32_0 = arith.constant 0 : i32
    %c0_i32_1 = arith.constant 0 : i32
    return %c0_i32, %c0_i32_0 : i32, i32
  }
  func.func @transform_4(%arg0: i32) -> (i32, i32) {
    %c0_i32 = arith.constant 0 : i32
    %c0_i32_0 = arith.constant 0 : i32
    %c0_i32_1 = arith.constant 0 : i32
    return %c0_i32, %c0_i32_0 : i32, i32
  }
  func.func @transform_5(%arg0: i32) -> (i32, i32) {
    %c0_i32 = arith.constant 0 : i32
    %c0_i32_0 = arith.constant 0 : i32
    %c0_i32_1 = arith.constant 0 : i32
    return %c0_i32, %c0_i32_0 : i32, i32
  }
  func.func @transform_6(%arg0: i32) -> (i32, i32) {
    %c0_i32 = arith.constant 0 : i32
    %c0_i32_0 = arith.constant 0 : i32
    %c0_i32_1 = arith.constant 0 : i32
    return %c0_i32, %c0_i32_0 : i32, i32
  }
  func.func @transform_7(%arg0: i32) -> (i32, i32, i32) {
    %c0_i32 = arith.constant 0 : i32
    %c0_i32_0 = arith.constant 0 : i32
    %c0_i32_1 = arith.constant 0 : i32
    %c0_i32_2 = arith.constant 0 : i32
    return %c0_i32, %c0_i32_0, %c0_i32_1 : i32, i32, i32
  }
  func.func @transform_8(%arg0: i32) -> (i32, i32) {
    %c0_i32 = arith.constant 0 : i32
    %c0_i32_0 = arith.constant 0 : i32
    %c0_i32_1 = arith.constant 0 : i32
    return %c0_i32, %c0_i32_0 : i32, i32
  }
  func.func @transform_9(%arg0: i32) -> (i32, i32) {
    %c0_i32 = arith.constant 0 : i32
    %c0_i32_0 = arith.constant 0 : i32
    %c0_i32_1 = arith.constant 0 : i32
    return %c0_i32, %c0_i32_0 : i32, i32
  }
  func.func @transform_10(%arg0: i32) -> (i32, i32) {
    %c0_i32 = arith.constant 0 : i32
    %c0_i32_0 = arith.constant 0 : i32
    %c0_i32_1 = arith.constant 0 : i32
    return %c0_i32, %c0_i32_0 : i32, i32
  }
  func.func @transform_11(%arg0: i32) -> (i32, i32) {
    %c0_i32 = arith.constant 0 : i32
    %c0_i32_0 = arith.constant 0 : i32
    return %arg0, %c0_i32 : i32, i32
  }
}

</mosaic_0001>

<llo_original>
// kernel: mmnist_forward.1
$region0: #{mmnist_forward.1}
  #allocation0 [shape = 'u32[]', space=smem, size = 0x4, offset = 0x4, fixed_abs, tag = 'smem constant byte address 0x4 - core index']
  #allocation1 [shape = 'u32[72,128]{1,0:T(1,128)}', space=vmem, size = 0x9000, scoped, tag = 'internal scratch']
  #allocation2 [shape = 'f32[8,24,120]{2,1,0:T(8,128)}', space=vmem, size = 0x18000, scoped, tag = 'scratch operand']
  #allocation3 [shape = 'f32[8,12,120]{2,1,0:T(8,128)}', space=vmem, size = 0x10000, scoped, tag = 'scratch operand']
  #allocation4 [shape = 'f32[8,8,80]{2,1,0:T(8,128)}', space=vmem, size = 0x8000, scoped, tag = 'scratch operand']
  #allocation5 [shape = 'f32[8,4,80]{2,1,0:T(4,128)}', space=vmem, size = 0x4000, scoped, tag = 'scratch operand']
  %s0 = inlined_call_operand.vmem [shape: f32[16,28,28], index: 0, kind: input, shape index: {}]
  %s1 = inlined_call_operand.vmem [shape: bf16[140,120], index: 1, kind: input, shape index: {}]
  %s2 = inlined_call_operand.vmem [shape: bf16[140,120], index: 2, kind: input, shape index: {}]
  %s3 = inlined_call_operand.vmem [shape: f32[1,120], index: 3, kind: input, shape index: {}]
  %s4 = inlined_call_operand.vmem [shape: bf16[600,80], index: 4, kind: input, shape index: {}]
  %s5 = inlined_call_operand.vmem [shape: bf16[600,80], index: 5, kind: input, shape index: {}]
  %s6 = inlined_call_operand.vmem [shape: f32[1,80], index: 6, kind: input, shape index: {}]
  %s7 = inlined_call_operand.vmem [shape: bf16[4,80,128], index: 7, kind: input, shape index: {}]
  %s8 = inlined_call_operand.vmem [shape: f32[1,128], index: 8, kind: input, shape index: {}]
  %s9 = inlined_call_operand.vmem [shape: bf16[128,128], index: 9, kind: input, shape index: {}]
  %s10 = inlined_call_operand.vmem [shape: f32[1,128], index: 10, kind: input, shape index: {}]
  %s11 = inlined_call_operand.hbm [shape: f32[16,128], index: 11, kind: output, shape index: {}]
  %s12 = sld [smem:[#allocation0]]
  $region77: #{mmnist_forward.1} parent=0
    _
  %s14 = ssub.s32 1, %s12
  %s15 = scalar_select 0, %s14, %s12
  $region1: #{mmnist_forward.1} parent=0
    #allocation6 [shape = 'u8[8192]{0}', space=vmem, size = 0x2000, scoped, tag = 'output window, operand 0']
    #allocation7 [shape = 's32[2]{0}', space=sflag, size = 0x8, scoped, tag = 'scoped memory for mmnist_forward.1']
    %16 = vsyncpa [#allocation7], 0
    %s17 = scalar_lea.sflag [#allocation7], 1
    %18 = vsyncpa %s17, 0
    loop: start=0, step=1, limit=4
    $region2: #{mmnist_forward.1} parent=1 // loop_pre_header
      _
    $region3: #{mmnist_forward.1} parent=1 // loop_header
      %s20 = sphi 0, %s24
      %p21 = scmp.ge.s32.totalorder %s20, 4
      %s30 = sphi 0, %s32
      %s33 = sphi 0, %s30
      %s34 = sphi 0, %s33
      %s50 = sphi 0, %s34
      %s54 = sphi 0, %s54
      %s56 = sphi 0, %s54
      %s57 = sphi 0, %s56
      %s71 = sphi 0, %s57
      %s75 = sphi 0, %s75
      %s77 = sphi 0, %s75
      %s78 = sphi 0, %s77
      %s92 = sphi 0, %s78
      %s96 = sphi 0, %s96
      %s98 = sphi 0, %s96
      %s99 = sphi 0, %s98
      %s113 = sphi 0, %s99
      %s117 = sphi 0, %s117
      %s119 = sphi 0, %s117
      %s120 = sphi 0, %s119
      %s134 = sphi 0, %s120
      %s138 = sphi 0, %s138
      %s140 = sphi 0, %s138
      %s141 = sphi 0, %s140
      %s155 = sphi 0, %s141
      %s159 = sphi 0, %s159
      %s161 = sphi 0, %s159
      %s162 = sphi 0, %s161
      %s176 = sphi 0, %s162
      %s180 = sphi 0, %s180
      %s182 = sphi 0, %s180
      %s183 = sphi 0, %s182
      %s197 = sphi 0, %s183
      %s201 = sphi 0, %s201
      %s203 = sphi 0, %s201
      %s204 = sphi 0, %s203
      %s218 = sphi 0, %s204
      %s222 = sphi 0, %s222
      %s224 = sphi 0, %s222
      %s225 = sphi 0, %s224
      %s239 = sphi 0, %s225
      %s243 = sphi 0, %s243
      %s245 = sphi 0, %s243
      %s246 = sphi 0, %s245
      %s260 = sphi 0, %s246
      %s266 = sphi 0, %s268
      %s269 = sphi 0, %s266
      %s270 = sphi 0, %s269
      %s286 = sphi 0, %s270
    $region4: #{mmnist_forward.1} parent=1 // loop_header_branch
      %23 = sbr.rel (%p21) target = $region8
    $region5: #{mmnist_forward.1} parent=1 // loop_body
      %s25 = ssub.s32 %s20, 1
      %s26 = ssub.s32 %s20, 2
      %s27 = sadd.s32 %s20, 1
      %s28 = ssub.s32 %s20, %s27
      %p29 = scmp.eq.s32.totalorder %s28, 0
      %s31 = sadd.s32 %s30, 1
      %s32 = scalar_select %p29, %s30, %s31
      %p35 = pneg %p29
      %p36 = scmp.eq.s32.totalorder %s20, 1
      %p37 = por %p35, %p36
      %p38 = scmp.ne.s32.totalorder %s30, %s33
      %p39 = scmp.eq.s32.totalorder %s20, 0
      %p40 = por %p38, %p39
      %p41 = scmp.ne.s32.totalorder %s30, %s33
      %p42 = scmp.eq.s32.totalorder %s25, 1
      %p43 = por %p41, %p42
      %p44 = scmp.ne.s32.totalorder %s33, %s34
      %p45 = scmp.eq.s32.totalorder %s25, 0
      %p46 = por %p44, %p45
      %p47 = scmp.ne.s32.totalorder %s33, %s34
      %p48 = scmp.eq.s32.totalorder %s26, 1
      %p49 = por %p47, %p48
      %p51 = scmp.ne.s32.totalorder %s34, %s50
      %p52 = scmp.eq.s32.totalorder %s26, 0
      %p53 = por %p51, %p52
      %s55 = sadd.s32 %s54, 1
      %p58 = scmp.eq.s32.totalorder %s20, 1
      %p59 = scmp.ne.s32.totalorder %s54, %s56
      %p60 = scmp.eq.s32.totalorder %s20, 0
      %p61 = por %p59, %p60
      %p62 = scmp.ne.s32.totalorder %s54, %s56
      %p63 = scmp.eq.s32.totalorder %s25, 1
      %p64 = por %p62, %p63
      %p65 = scmp.ne.s32.totalorder %s56, %s57
      %p66 = scmp.eq.s32.totalorder %s25, 0
      %p67 = por %p65, %p66
      %p68 = scmp.ne.s32.totalorder %s56, %s57
      %p69 = scmp.eq.s32.totalorder %s26, 1
      %p70 = por %p68, %p69
      %p72 = scmp.ne.s32.totalorder %s57, %s71
      %p73 = scmp.eq.s32.totalorder %s26, 0
      %p74 = por %p72, %p73
      %s76 = sadd.s32 %s75, 1
      %p79 = scmp.eq.s32.totalorder %s20, 1
      %p80 = scmp.ne.s32.totalorder %s75, %s77
      %p81 = scmp.eq.s32.totalorder %s20, 0
      %p82 = por %p80, %p81
      %p83 = scmp.ne.s32.totalorder %s75, %s77
      %p84 = scmp.eq.s32.totalorder %s25, 1
      %p85 = por %p83, %p84
      %p86 = scmp.ne.s32.totalorder %s77, %s78
      %p87 = scmp.eq.s32.totalorder %s25, 0
      %p88 = por %p86, %p87
      %p89 = scmp.ne.s32.totalorder %s77, %s78
      %p90 = scmp.eq.s32.totalorder %s26, 1
      %p91 = por %p89, %p90
      %p93 = scmp.ne.s32.totalorder %s78, %s92
      %p94 = scmp.eq.s32.totalorder %s26, 0
      %p95 = por %p93, %p94
      %s97 = sadd.s32 %s96, 1
      %p100 = scmp.eq.s32.totalorder %s20, 1
      %p101 = scmp.ne.s32.totalorder %s96, %s98
      %p102 = scmp.eq.s32.totalorder %s20, 0
      %p103 = por %p101, %p102
      %p104 = scmp.ne.s32.totalorder %s96, %s98
      %p105 = scmp.eq.s32.totalorder %s25, 1
      %p106 = por %p104, %p105
      %p107 = scmp.ne.s32.totalorder %s98, %s99
      %p108 = scmp.eq.s32.totalorder %s25, 0
      %p109 = por %p107, %p108
      %p110 = scmp.ne.s32.totalorder %s98, %s99
      %p111 = scmp.eq.s32.totalorder %s26, 1
      %p112 = por %p110, %p111
      %p114 = scmp.ne.s32.totalorder %s99, %s113
      %p115 = scmp.eq.s32.totalorder %s26, 0
      %p116 = por %p114, %p115
      %s118 = sadd.s32 %s117, 1
      %p121 = scmp.eq.s32.totalorder %s20, 1
      %p122 = scmp.ne.s32.totalorder %s117, %s119
      %p123 = scmp.eq.s32.totalorder %s20, 0
      %p124 = por %p122, %p123
      %p125 = scmp.ne.s32.totalorder %s117, %s119
      %p126 = scmp.eq.s32.totalorder %s25, 1
      %p127 = por %p125, %p126
      %p128 = scmp.ne.s32.totalorder %s119, %s120
      %p129 = scmp.eq.s32.totalorder %s25, 0
      %p130 = por %p128, %p129
      %p131 = scmp.ne.s32.totalorder %s119, %s120
      %p132 = scmp.eq.s32.totalorder %s26, 1
      %p133 = por %p131, %p132
      %p135 = scmp.ne.s32.totalorder %s120, %s134
      %p136 = scmp.eq.s32.totalorder %s26, 0
      %p137 = por %p135, %p136
      %s139 = sadd.s32 %s138, 1
      %p142 = scmp.eq.s32.totalorder %s20, 1
      %p143 = scmp.ne.s32.totalorder %s138, %s140
      %p144 = scmp.eq.s32.totalorder %s20, 0
      %p145 = por %p143, %p144
      %p146 = scmp.ne.s32.totalorder %s138, %s140
      %p147 = scmp.eq.s32.totalorder %s25, 1
      %p148 = por %p146, %p147
      %p149 = scmp.ne.s32.totalorder %s140, %s141
      %p150 = scmp.eq.s32.totalorder %s25, 0
      %p151 = por %p149, %p150
      %p152 = scmp.ne.s32.totalorder %s140, %s141
      %p153 = scmp.eq.s32.totalorder %s26, 1
      %p154 = por %p152, %p153
      %p156 = scmp.ne.s32.totalorder %s141, %s155
      %p157 = scmp.eq.s32.totalorder %s26, 0
      %p158 = por %p156, %p157
      %s160 = sadd.s32 %s159, 1
      %p163 = scmp.eq.s32.totalorder %s20, 1
      %p164 = scmp.ne.s32.totalorder %s159, %s161
      %p165 = scmp.eq.s32.totalorder %s20, 0
      %p166 = por %p164, %p165
      %p167 = scmp.ne.s32.totalorder %s159, %s161
      %p168 = scmp.eq.s32.totalorder %s25, 1
      %p169 = por %p167, %p168
      %p170 = scmp.ne.s32.totalorder %s161, %s162
      %p171 = scmp.eq.s32.totalorder %s25, 0
      %p172 = por %p170, %p171
      %p173 = scmp.ne.s32.totalorder %s161, %s162
      %p174 = scmp.eq.s32.totalorder %s26, 1
      %p175 = por %p173, %p174
      %p177 = scmp.ne.s32.totalorder %s162, %s176
      %p178 = scmp.eq.s32.totalorder %s26, 0
      %p179 = por %p177, %p178
      %s181 = sadd.s32 %s180, 1
      %p184 = scmp.eq.s32.totalorder %s20, 1
      %p185 = scmp.ne.s32.totalorder %s180, %s182
      %p186 = scmp.eq.s32.totalorder %s20, 0
      %p187 = por %p185, %p186
      %p188 = scmp.ne.s32.totalorder %s180, %s182
      %p189 = scmp.eq.s32.totalorder %s25, 1
      %p190 = por %p188, %p189
      %p191 = scmp.ne.s32.totalorder %s182, %s183
      %p192 = scmp.eq.s32.totalorder %s25, 0
      %p193 = por %p191, %p192
      %p194 = scmp.ne.s32.totalorder %s182, %s183
      %p195 = scmp.eq.s32.totalorder %s26, 1
      %p196 = por %p194, %p195
      %p198 = scmp.ne.s32.totalorder %s183, %s197
      %p199 = scmp.eq.s32.totalorder %s26, 0
      %p200 = por %p198, %p199
      %s202 = sadd.s32 %s201, 1
      %p205 = scmp.eq.s32.totalorder %s20, 1
      %p206 = scmp.ne.s32.totalorder %s201, %s203
      %p207 = scmp.eq.s32.totalorder %s20, 0
      %p208 = por %p206, %p207
      %p209 = scmp.ne.s32.totalorder %s201, %s203
      %p210 = scmp.eq.s32.totalorder %s25, 1
      %p211 = por %p209, %p210
      %p212 = scmp.ne.s32.totalorder %s203, %s204
      %p213 = scmp.eq.s32.totalorder %s25, 0
      %p214 = por %p212, %p213
      %p215 = scmp.ne.s32.totalorder %s203, %s204
      %p216 = scmp.eq.s32.totalorder %s26, 1
      %p217 = por %p215, %p216
      %p219 = scmp.ne.s32.totalorder %s204, %s218
      %p220 = scmp.eq.s32.totalorder %s26, 0
      %p221 = por %p219, %p220
      %s223 = sadd.s32 %s222, 1
      %p226 = scmp.eq.s32.totalorder %s20, 1
      %p227 = scmp.ne.s32.totalorder %s222, %s224
      %p228 = scmp.eq.s32.totalorder %s20, 0
      %p229 = por %p227, %p228
      %p230 = scmp.ne.s32.totalorder %s222, %s224
      %p231 = scmp.eq.s32.totalorder %s25, 1
      %p232 = por %p230, %p231
      %p233 = scmp.ne.s32.totalorder %s224, %s225
      %p234 = scmp.eq.s32.totalorder %s25, 0
      %p235 = por %p233, %p234
      %p236 = scmp.ne.s32.totalorder %s224, %s225
      %p237 = scmp.eq.s32.totalorder %s26, 1
      %p238 = por %p236, %p237
      %p240 = scmp.ne.s32.totalorder %s225, %s239
      %p241 = scmp.eq.s32.totalorder %s26, 0
      %p242 = por %p240, %p241
      %s244 = sadd.s32 %s243, 1
      %p247 = scmp.eq.s32.totalorder %s20, 1
      %p248 = scmp.ne.s32.totalorder %s243, %s245
      %p249 = scmp.eq.s32.totalorder %s20, 0
      %p250 = por %p248, %p249
      %p251 = scmp.ne.s32.totalorder %s243, %s245
      %p252 = scmp.eq.s32.totalorder %s25, 1
      %p253 = por %p251, %p252
      %p254 = scmp.ne.s32.totalorder %s245, %s246
      %p255 = scmp.eq.s32.totalorder %s25, 0
      %p256 = por %p254, %p255
      %p257 = scmp.ne.s32.totalorder %s245, %s246
      %p258 = scmp.eq.s32.totalorder %s26, 1
      %p259 = por %p257, %p258
      %p261 = scmp.ne.s32.totalorder %s246, %s260
      %p262 = scmp.eq.s32.totalorder %s26, 0
      %p263 = por %p261, %p262
      %s264 = ssub.s32 %s20, %s27
      %p265 = scmp.eq.s32.totalorder %s264, 0
      %s267 = sadd.s32 %s266, 1
      %s268 = scalar_select %p265, %s266, %s267
      %p271 = pneg %p265
      %p272 = scmp.eq.s32.totalorder %s20, 1
      %p273 = por %p271, %p272
      %p274 = scmp.ne.s32.totalorder %s266, %s269
      %p275 = scmp.eq.s32.totalorder %s20, 0
      %p276 = por %p274, %p275
      %p277 = scmp.ne.s32.totalorder %s266, %s269
      %p278 = scmp.eq.s32.totalorder %s25, 1
      %p279 = por %p277, %p278
      %p280 = scmp.ne.s32.totalorder %s269, %s270
      %p281 = scmp.eq.s32.totalorder %s25, 0
      %p282 = por %p280, %p281
      %p283 = scmp.ne.s32.totalorder %s269, %s270
      %p284 = scmp.eq.s32.totalorder %s26, 1
      %p285 = por %p283, %p284
      %p287 = scmp.ne.s32.totalorder %s270, %s286
      %p288 = scmp.eq.s32.totalorder %s26, 0
      %p289 = por %p287, %p288
      %p290 = scmp.le.s32.totalorder 1, %s20
      %p291 = scmp.lt.s32.totalorder %s20, 3
      %p292 = pnand %p290, %p291
      %p293 = pneg %p292
      // Predicated region
      $region9: #{mmnist_forward.1} parent=5 // pred_check
        _
      $region10: #{mmnist_forward.1} parent=5 // pred_check_branch
        %295 = sbr.rel (%p292) target = $region12
      $region11: #{mmnist_forward.1} parent=5 // pred_region
        %s296 = ssub.s32 %s20, 1
        // Predicated region
        $region13: #{mmnist_forward.1} parent=11 // pred_check
          %p297 = pneg %p67
        $region14: #{mmnist_forward.1} parent=11 // pred_check_branch
          %299 = sbr.rel (%p297) target = $region16
        $region15: #{mmnist_forward.1} parent=11 // pred_region
          _
        $region16: #{mmnist_forward.1} parent=11 // pred_fallthru
          _
        // Predicated region
        $region17: #{mmnist_forward.1} parent=11 // pred_check
          %p300 = pneg %p88
        $region18: #{mmnist_forward.1} parent=11 // pred_check_branch
          %302 = sbr.rel (%p300) target = $region20
        $region19: #{mmnist_forward.1} parent=11 // pred_region
          _
        $region20: #{mmnist_forward.1} parent=11 // pred_fallthru
          _
        // Predicated region
        $region21: #{mmnist_forward.1} parent=11 // pred_check
          %p303 = pneg %p109
        $region22: #{mmnist_forward.1} parent=11 // pred_check_branch
          %305 = sbr.rel (%p303) target = $region24
        $region23: #{mmnist_forward.1} parent=11 // pred_region
          _
        $region24: #{mmnist_forward.1} parent=11 // pred_fallthru
          _
        // Predicated region
        $region25: #{mmnist_forward.1} parent=11 // pred_check
          %p306 = pneg %p130
        $region26: #{mmnist_forward.1} parent=11 // pred_check_branch
          %308 = sbr.rel (%p306) target = $region28
        $region27: #{mmnist_forward.1} parent=11 // pred_region
          _
        $region28: #{mmnist_forward.1} parent=11 // pred_fallthru
          _
        // Predicated region
        $region29: #{mmnist_forward.1} parent=11 // pred_check
          %p309 = pneg %p151
        $region30: #{mmnist_forward.1} parent=11 // pred_check_branch
          %311 = sbr.rel (%p309) target = $region32
        $region31: #{mmnist_forward.1} parent=11 // pred_region
          _
        $region32: #{mmnist_forward.1} parent=11 // pred_fallthru
          _
        // Predicated region
        $region33: #{mmnist_forward.1} parent=11 // pred_check
          %p312 = pneg %p172
        $region34: #{mmnist_forward.1} parent=11 // pred_check_branch
          %314 = sbr.rel (%p312) target = $region36
        $region35: #{mmnist_forward.1} parent=11 // pred_region
          _
        $region36: #{mmnist_forward.1} parent=11 // pred_fallthru
          _
        // Predicated region
        $region37: #{mmnist_forward.1} parent=11 // pred_check
          %p315 = pneg %p193
        $region38: #{mmnist_forward.1} parent=11 // pred_check_branch
          %317 = sbr.rel (%p315) target = $region40
        $region39: #{mmnist_forward.1} parent=11 // pred_region
          _
        $region40: #{mmnist_forward.1} parent=11 // pred_fallthru
          _
        // Predicated region
        $region41: #{mmnist_forward.1} parent=11 // pred_check
          %p318 = pneg %p214
        $region42: #{mmnist_forward.1} parent=11 // pred_check_branch
          %320 = sbr.rel (%p318) target = $region44
        $region43: #{mmnist_forward.1} parent=11 // pred_region
          _
        $region44: #{mmnist_forward.1} parent=11 // pred_fallthru
          _
        // Predicated region
        $region45: #{mmnist_forward.1} parent=11 // pred_check
          %p321 = pneg %p235
        $region46: #{mmnist_forward.1} parent=11 // pred_check_branch
          %323 = sbr.rel (%p321) target = $region48
        $region47: #{mmnist_forward.1} parent=11 // pred_region
          _
        $region48: #{mmnist_forward.1} parent=11 // pred_fallthru
          _
        // Predicated region
        $region49: #{mmnist_forward.1} parent=11 // pred_check
          %p324 = pneg %p256
        $region50: #{mmnist_forward.1} parent=11 // pred_check_branch
          %326 = sbr.rel (%p324) target = $region52
        $region51: #{mmnist_forward.1} parent=11 // pred_region
          _
        $region52: #{mmnist_forward.1} parent=11 // pred_fallthru
          _
      $region12: #{mmnist_forward.1} parent=5 // pred_fallthru
        _
      %p327 = scmp.lt.s32.totalorder %s20, 2
      // Predicated region
      $region53: #{mmnist_forward.1} parent=5 // pred_check
        %p328 = pneg %p327
      $region54: #{mmnist_forward.1} parent=5 // pred_check_branch
        %330 = sbr.rel (%p328) target = $region56
      $region55: #{mmnist_forward.1} parent=5 // pred_region
        // Predicated region
        $region57: #{mmnist_forward.1} parent=55 // pred_check
          %p331 = pneg %p40
        $region58: #{mmnist_forward.1} parent=55 // pred_check_branch
          %333 = sbr.rel (%p331) target = $region60
        $region59: #{mmnist_forward.1} parent=55 // pred_region
          %s334 = smul.u32 8, %s20
          %p335 = scmp.lt.s32.totalorder %s334, 15
          %s336 = scalar_select %p335, %s334, 15
          %s337 = smul.addr %s336, 4
          %s338 = smul.addr %s337, 8
          %s339 = scalar_lea.vmem %s0, %s338
          %s340 = smul.u32 8, %s20
        $region60: #{mmnist_forward.1} parent=55 // pred_fallthru
          _
      $region56: #{mmnist_forward.1} parent=5 // pred_fallthru
        _
      %p341 = scmp.le.s32.totalorder 1, %s20
      %p342 = scmp.lt.s32.totalorder %s20, 3
      %p343 = pnand %p341, %p342
      %p344 = pneg %p343
      // Predicated region
      $region61: #{mmnist_forward.1} parent=5 // pred_check
        _
      $region62: #{mmnist_forward.1} parent=5 // pred_check_branch
        %346 = sbr.rel (%p343) target = $region64
      $region63: #{mmnist_forward.1} parent=5 // pred_region
        %s347 = ssub.s32 %s20, 1
        %s348 = smul.u32 8, %s25
        %p349 = scmp.lt.s32.totalorder %s348, 15
        %s350 = scalar_select %p349, %s348, 15
        %s351 = smul.addr %s350, 4
        %s352 = smul.addr %s351, 8
        %s353 = scalar_lea.vmem %s0, %s352
        %p354 = pneg %p46
        %p355 = pneg %p43
        %p356 = pneg %p67
        %p357 = pneg %p64
        %p358 = pneg %p88
        %p359 = pneg %p85
        %p360 = pneg %p109
        %p361 = pneg %p106
        %p362 = pneg %p130
        %p363 = pneg %p127
        %p364 = pneg %p151
        %p365 = pneg %p148
        %p366 = pneg %p172
        %p367 = pneg %p169
        %p368 = pneg %p193
        %p369 = pneg %p190
        %p370 = pneg %p214
        %p371 = pneg %p211
        %p372 = pneg %p235
        %p373 = pneg %p232
        %p374 = pneg %p256
        %p375 = pneg %p253
        %p376 = pneg %p282
        %p377 = pneg %p279
        %s378 = sand.u32 %s269, 1
        %s379 = scalar_lea.sflag [#allocation7], %s378
        %s380 = sand.u32 %s269, 1
        %s381 = smul.addr %s380, 8
        %s382 = scalar_lea.vmem [#allocation6], %s381
        %s383 = smul.u32 8, %s25
        %p384 = scmp.lt.s32.totalorder %s383, 15
        %s385 = scalar_select %p384, %s383, 15
        %s386 = smul.addr %s385, 4
        %s387 = smul.addr %s386, 8
        %s388 = scalar_lea.vmem %s0, %s387
        %s389 = smul.u32 8, %s25
        %v391 = vld [vmem:[%s388] sm:$0xff]
        %v392 = vld [vmem:[%s388 + $0x8] sm:$0xff]
        %v393 = vld [vmem:[%s388 + $0x10] sm:$0xff]
        %v394 = vld [vmem:[%s388 + $0x20] sm:$0xff]
        %v395 = vld [vmem:[%s388 + $0x28] sm:$0xff]
        %v396 = vld [vmem:[%s388 + $0x30] sm:$0xff]
        %v397 = vld [vmem:[%s388 + $0x40] sm:$0xff]
        %v398 = vld [vmem:[%s388 + $0x48] sm:$0xff]
        %v399 = vld [vmem:[%s388 + $0x50] sm:$0xff]
        %v400 = vld [vmem:[%s388 + $0x60] sm:$0xff]
        %v401 = vld [vmem:[%s388 + $0x68] sm:$0xff]
        %v402 = vld [vmem:[%s388 + $0x70] sm:$0xff]
        %v403 = vld [vmem:[%s388 + $0x80] sm:$0xff]
        %v404 = vld [vmem:[%s388 + $0x88] sm:$0xff]
        %v405 = vld [vmem:[%s388 + $0x90] sm:$0xff]
        %v406 = vld [vmem:[%s388 + $0xa0] sm:$0xff]
        %v407 = vld [vmem:[%s388 + $0xa8] sm:$0xff]
        %v408 = vld [vmem:[%s388 + $0xb0] sm:$0xff]
        %v409 = vld [vmem:[%s388 + $0xc0] sm:$0xff]
        %v410 = vld [vmem:[%s388 + $0xc8] sm:$0xff]
        %v411 = vld [vmem:[%s388 + $0xd0] sm:$0xff]
        %v412 = vld [vmem:[%s388 + $0xe0] sm:$0xff]
        %v413 = vld [vmem:[%s388 + $0xe8] sm:$0xff]
        %v414 = vld [vmem:[%s388 + $0xf0] sm:$0xff]
        %v415 = vld [vmem:[%s388 + $0x1] sm:$0xff]
        %v416 = vld [vmem:[%s388 + $0x9] sm:$0xff]
        %v417 = vld [vmem:[%s388 + $0x11] sm:$0xff]
        %v418 = vld [vmem:[%s388 + $0x21] sm:$0xff]
        %v419 = vld [vmem:[%s388 + $0x29] sm:$0xff]
        %v420 = vld [vmem:[%s388 + $0x31] sm:$0xff]
        %v421 = vld [vmem:[%s388 + $0x41] sm:$0xff]
        %v422 = vld [vmem:[%s388 + $0x49] sm:$0xff]
        %v423 = vld [vmem:[%s388 + $0x51] sm:$0xff]
        %v424 = vld [vmem:[%s388 + $0x61] sm:$0xff]
        %v425 = vld [vmem:[%s388 + $0x69] sm:$0xff]
        %v426 = vld [vmem:[%s388 + $0x71] sm:$0xff]
        %v427 = vld [vmem:[%s388 + $0x81] sm:$0xff]
        %v428 = vld [vmem:[%s388 + $0x89] sm:$0xff]
        %v429 = vld [vmem:[%s388 + $0x91] sm:$0xff]
        %v430 = vld [vmem:[%s388 + $0xa1] sm:$0xff]
        %v431 = vld [vmem:[%s388 + $0xa9] sm:$0xff]
        %v432 = vld [vmem:[%s388 + $0xb1] sm:$0xff]
        %v433 = vld [vmem:[%s388 + $0xc1] sm:$0xff]
        %v434 = vld [vmem:[%s388 + $0xc9] sm:$0xff]
        %v435 = vld [vmem:[%s388 + $0xd1] sm:$0xff]
        %v436 = vld [vmem:[%s388 + $0xe1] sm:$0xff]
        %v437 = vld [vmem:[%s388 + $0xe9] sm:$0xff]
        %v438 = vld [vmem:[%s388 + $0xf1] sm:$0xff]
        %v439 = vld [vmem:[%s388 + $0x2] sm:$0xff]
        %v440 = vld [vmem:[%s388 + $0xa] sm:$0xff]
        %v441 = vld [vmem:[%s388 + $0x12] sm:$0xff]
        %v442 = vld [vmem:[%s388 + $0x22] sm:$0xff]
        %v443 = vld [vmem:[%s388 + $0x2a] sm:$0xff]
        %v444 = vld [vmem:[%s388 + $0x32] sm:$0xff]
        %v445 = vld [vmem:[%s388 + $0x42] sm:$0xff]
        %v446 = vld [vmem:[%s388 + $0x4a] sm:$0xff]
        %v447 = vld [vmem:[%s388 + $0x52] sm:$0xff]
        %v448 = vld [vmem:[%s388 + $0x62] sm:$0xff]
        %v449 = vld [vmem:[%s388 + $0x6a] sm:$0xff]
        %v450 = vld [vmem:[%s388 + $0x72] sm:$0xff]
        %v451 = vld [vmem:[%s388 + $0x82] sm:$0xff]
        %v452 = vld [vmem:[%s388 + $0x8a] sm:$0xff]
        %v453 = vld [vmem:[%s388 + $0x92] sm:$0xff]
        %v454 = vld [vmem:[%s388 + $0xa2] sm:$0xff]
        %v455 = vld [vmem:[%s388 + $0xaa] sm:$0xff]
        %v456 = vld [vmem:[%s388 + $0xb2] sm:$0xff]
        %v457 = vld [vmem:[%s388 + $0xc2] sm:$0xff]
        %v458 = vld [vmem:[%s388 + $0xca] sm:$0xff]
        %v459 = vld [vmem:[%s388 + $0xd2] sm:$0xff]
        %v460 = vld [vmem:[%s388 + $0xe2] sm:$0xff]
        %v461 = vld [vmem:[%s388 + $0xea] sm:$0xff]
        %v462 = vld [vmem:[%s388 + $0xf2] sm:$0xff]
        %v463 = vld [vmem:[%s388 + $0x3] sm:$0xff]
        %v464 = vld [vmem:[%s388 + $0xb] sm:$0xff]
        %v465 = vld [vmem:[%s388 + $0x13] sm:$0xff]
        %v466 = vld [vmem:[%s388 + $0x23] sm:$0xff]
        %v467 = vld [vmem:[%s388 + $0x2b] sm:$0xff]
        %v468 = vld [vmem:[%s388 + $0x33] sm:$0xff]
        %v469 = vld [vmem:[%s388 + $0x43] sm:$0xff]
        %v470 = vld [vmem:[%s388 + $0x4b] sm:$0xff]
        %v471 = vld [vmem:[%s388 + $0x53] sm:$0xff]
        %v472 = vld [vmem:[%s388 + $0x63] sm:$0xff]
        %v473 = vld [vmem:[%s388 + $0x6b] sm:$0xff]
        %v474 = vld [vmem:[%s388 + $0x73] sm:$0xff]
        %v475 = vld [vmem:[%s388 + $0x83] sm:$0xff]
        %v476 = vld [vmem:[%s388 + $0x8b] sm:$0xff]
        %v477 = vld [vmem:[%s388 + $0x93] sm:$0xff]
        %v478 = vld [vmem:[%s388 + $0xa3] sm:$0xff]
        %v479 = vld [vmem:[%s388 + $0xab] sm:$0xff]
        %v480 = vld [vmem:[%s388 + $0xb3] sm:$0xff]
        %v481 = vld [vmem:[%s388 + $0xc3] sm:$0xff]
        %v482 = vld [vmem:[%s388 + $0xcb] sm:$0xff]
        %v483 = vld [vmem:[%s388 + $0xd3] sm:$0xff]
        %v484 = vld [vmem:[%s388 + $0xe3] sm:$0xff]
        %v485 = vld [vmem:[%s388 + $0xeb] sm:$0xff]
        %v486 = vld [vmem:[%s388 + $0xf3] sm:$0xff]
        %v487 = vld [vmem:[%s388 + $0x4] sm:$0xff]
        %v488 = vld [vmem:[%s388 + $0xc] sm:$0xff]
        %v489 = vld [vmem:[%s388 + $0x14] sm:$0xff]
        %v490 = vld [vmem:[%s388 + $0x24] sm:$0xff]
        %v491 = vld [vmem:[%s388 + $0x2c] sm:$0xff]
        %v492 = vld [vmem:[%s388 + $0x34] sm:$0xff]
        %v493 = vld [vmem:[%s388 + $0x44] sm:$0xff]
        %v494 = vld [vmem:[%s388 + $0x4c] sm:$0xff]
        %v495 = vld [vmem:[%s388 + $0x54] sm:$0xff]
        %v496 = vld [vmem:[%s388 + $0x64] sm:$0xff]
        %v497 = vld [vmem:[%s388 + $0x6c] sm:$0xff]
        %v498 = vld [vmem:[%s388 + $0x74] sm:$0xff]
        %v499 = vld [vmem:[%s388 + $0x84] sm:$0xff]
        %v500 = vld [vmem:[%s388 + $0x8c] sm:$0xff]
        %v501 = vld [vmem:[%s388 + $0x94] sm:$0xff]
        %v502 = vld [vmem:[%s388 + $0xa4] sm:$0xff]
        %v503 = vld [vmem:[%s388 + $0xac] sm:$0xff]
        %v504 = vld [vmem:[%s388 + $0xb4] sm:$0xff]
        %v505 = vld [vmem:[%s388 + $0xc4] sm:$0xff]
        %v506 = vld [vmem:[%s388 + $0xcc] sm:$0xff]
        %v507 = vld [vmem:[%s388 + $0xd4] sm:$0xff]
        %v508 = vld [vmem:[%s388 + $0xe4] sm:$0xff]
        %v509 = vld [vmem:[%s388 + $0xec] sm:$0xff]
        %v510 = vld [vmem:[%s388 + $0xf4] sm:$0xff]
        %535 = vrot.lane.b32.xlu0 %v415, 28
        %v536 = vpop.permute.xlu0 %535
        %537 = vrot.lane.b32.xlu0 %v416, 28
        %v538 = vpop.permute.xlu0 %537
        %539 = vrot.lane.b32.xlu0 %v417, 28
        %v540 = vpop.permute.xlu0 %539
        %541 = vrot.lane.b32.xlu0 %v418, 28
        %v542 = vpop.permute.xlu0 %541
        %543 = vrot.lane.b32.xlu0 %v419, 28
        %v544 = vpop.permute.xlu0 %543
        %545 = vrot.lane.b32.xlu0 %v420, 28
        %v546 = vpop.permute.xlu0 %545
        %547 = vrot.lane.b32.xlu0 %v421, 28
        %v548 = vpop.permute.xlu0 %547
        %549 = vrot.lane.b32.xlu0 %v422, 28
        %v550 = vpop.permute.xlu0 %549
        %551 = vrot.lane.b32.xlu0 %v423, 28
        %v552 = vpop.permute.xlu0 %551
        %553 = vrot.lane.b32.xlu0 %v424, 28
        %v554 = vpop.permute.xlu0 %553
        %555 = vrot.lane.b32.xlu0 %v425, 28
        %v556 = vpop.permute.xlu0 %555
        %557 = vrot.lane.b32.xlu0 %v426, 28
        %v558 = vpop.permute.xlu0 %557
        %559 = vrot.lane.b32.xlu0 %v427, 28
        %v560 = vpop.permute.xlu0 %559
        %561 = vrot.lane.b32.xlu0 %v428, 28
        %v562 = vpop.permute.xlu0 %561
        %563 = vrot.lane.b32.xlu0 %v429, 28
        %v564 = vpop.permute.xlu0 %563
        %565 = vrot.lane.b32.xlu0 %v430, 28
        %v566 = vpop.permute.xlu0 %565
        %567 = vrot.lane.b32.xlu0 %v431, 28
        %v568 = vpop.permute.xlu0 %567
        %569 = vrot.lane.b32.xlu0 %v432, 28
        %v570 = vpop.permute.xlu0 %569
        %571 = vrot.lane.b32.xlu0 %v433, 28
        %v572 = vpop.permute.xlu0 %571
        %573 = vrot.lane.b32.xlu0 %v434, 28
        %v574 = vpop.permute.xlu0 %573
        %575 = vrot.lane.b32.xlu0 %v435, 28
        %v576 = vpop.permute.xlu0 %575
        %577 = vrot.lane.b32.xlu0 %v436, 28
        %v578 = vpop.permute.xlu0 %577
        %579 = vrot.lane.b32.xlu0 %v437, 28
        %v580 = vpop.permute.xlu0 %579
        %581 = vrot.lane.b32.xlu0 %v438, 28
        %v582 = vpop.permute.xlu0 %581
        %631 = vrot.lane.b32.xlu0 %v439, 56
        %v632 = vpop.permute.xlu0 %631
        %633 = vrot.lane.b32.xlu0 %v440, 56
        %v634 = vpop.permute.xlu0 %633
        %635 = vrot.lane.b32.xlu0 %v441, 56
        %v636 = vpop.permute.xlu0 %635
        %637 = vrot.lane.b32.xlu0 %v442, 56
        %v638 = vpop.permute.xlu0 %637
        %639 = vrot.lane.b32.xlu0 %v443, 56
        %v640 = vpop.permute.xlu0 %639
        %641 = vrot.lane.b32.xlu0 %v444, 56
        %v642 = vpop.permute.xlu0 %641
        %643 = vrot.lane.b32.xlu0 %v445, 56
        %v644 = vpop.permute.xlu0 %643
        %645 = vrot.lane.b32.xlu0 %v446, 56
        %v646 = vpop.permute.xlu0 %645
        %647 = vrot.lane.b32.xlu0 %v447, 56
        %v648 = vpop.permute.xlu0 %647
        %649 = vrot.lane.b32.xlu0 %v448, 56
        %v650 = vpop.permute.xlu0 %649
        %651 = vrot.lane.b32.xlu0 %v449, 56
        %v652 = vpop.permute.xlu0 %651
        %653 = vrot.lane.b32.xlu0 %v450, 56
        %v654 = vpop.permute.xlu0 %653
        %655 = vrot.lane.b32.xlu0 %v451, 56
        %v656 = vpop.permute.xlu0 %655
        %657 = vrot.lane.b32.xlu0 %v452, 56
        %v658 = vpop.permute.xlu0 %657
        %659 = vrot.lane.b32.xlu0 %v453, 56
        %v660 = vpop.permute.xlu0 %659
        %661 = vrot.lane.b32.xlu0 %v454, 56
        %v662 = vpop.permute.xlu0 %661
        %663 = vrot.lane.b32.xlu0 %v455, 56
        %v664 = vpop.permute.xlu0 %663
        %665 = vrot.lane.b32.xlu0 %v456, 56
        %v666 = vpop.permute.xlu0 %665
        %667 = vrot.lane.b32.xlu0 %v457, 56
        %v668 = vpop.permute.xlu0 %667
        %669 = vrot.lane.b32.xlu0 %v458, 56
        %v670 = vpop.permute.xlu0 %669
        %671 = vrot.lane.b32.xlu0 %v459, 56
        %v672 = vpop.permute.xlu0 %671
        %673 = vrot.lane.b32.xlu0 %v460, 56
        %v674 = vpop.permute.xlu0 %673
        %675 = vrot.lane.b32.xlu0 %v461, 56
        %v676 = vpop.permute.xlu0 %675
        %677 = vrot.lane.b32.xlu0 %v462, 56
        %v678 = vpop.permute.xlu0 %677
        %727 = vrot.lane.b32.xlu0 %v463, 84
        %v728 = vpop.permute.xlu0 %727
        %729 = vrot.lane.b32.xlu0 %v464, 84
        %v730 = vpop.permute.xlu0 %729
        %731 = vrot.lane.b32.xlu0 %v465, 84
        %v732 = vpop.permute.xlu0 %731
        %733 = vrot.lane.b32.xlu0 %v466, 84
        %v734 = vpop.permute.xlu0 %733
        %735 = vrot.lane.b32.xlu0 %v467, 84
        %v736 = vpop.permute.xlu0 %735
        %737 = vrot.lane.b32.xlu0 %v468, 84
        %v738 = vpop.permute.xlu0 %737
        %739 = vrot.lane.b32.xlu0 %v469, 84
        %v740 = vpop.permute.xlu0 %739
        %741 = vrot.lane.b32.xlu0 %v470, 84
        %v742 = vpop.permute.xlu0 %741
        %743 = vrot.lane.b32.xlu0 %v471, 84
        %v744 = vpop.permute.xlu0 %743
        %745 = vrot.lane.b32.xlu0 %v472, 84
        %v746 = vpop.permute.xlu0 %745
        %747 = vrot.lane.b32.xlu0 %v473, 84
        %v748 = vpop.permute.xlu0 %747
        %749 = vrot.lane.b32.xlu0 %v474, 84
        %v750 = vpop.permute.xlu0 %749
        %751 = vrot.lane.b32.xlu0 %v475, 84
        %v752 = vpop.permute.xlu0 %751
        %753 = vrot.lane.b32.xlu0 %v476, 84
        %v754 = vpop.permute.xlu0 %753
        %755 = vrot.lane.b32.xlu0 %v477, 84
        %v756 = vpop.permute.xlu0 %755
        %757 = vrot.lane.b32.xlu0 %v478, 84
        %v758 = vpop.permute.xlu0 %757
        %759 = vrot.lane.b32.xlu0 %v479, 84
        %v760 = vpop.permute.xlu0 %759
        %761 = vrot.lane.b32.xlu0 %v480, 84
        %v762 = vpop.permute.xlu0 %761
        %763 = vrot.lane.b32.xlu0 %v481, 84
        %v764 = vpop.permute.xlu0 %763
        %765 = vrot.lane.b32.xlu0 %v482, 84
        %v766 = vpop.permute.xlu0 %765
        %767 = vrot.lane.b32.xlu0 %v483, 84
        %v768 = vpop.permute.xlu0 %767
        %769 = vrot.lane.b32.xlu0 %v484, 84
        %v770 = vpop.permute.xlu0 %769
        %771 = vrot.lane.b32.xlu0 %v485, 84
        %v772 = vpop.permute.xlu0 %771
        %773 = vrot.lane.b32.xlu0 %v486, 84
        %v774 = vpop.permute.xlu0 %773
        %823 = vrot.lane.b32.xlu0 %v487, 112
        %v824 = vpop.permute.xlu0 %823
        %825 = vrot.lane.b32.xlu0 %v488, 112
        %v826 = vpop.permute.xlu0 %825
        %827 = vrot.lane.b32.xlu0 %v489, 112
        %v828 = vpop.permute.xlu0 %827
        %829 = vrot.lane.b32.xlu0 %v490, 112
        %v830 = vpop.permute.xlu0 %829
        %831 = vrot.lane.b32.xlu0 %v491, 112
        %v832 = vpop.permute.xlu0 %831
        %833 = vrot.lane.b32.xlu0 %v492, 112
        %v834 = vpop.permute.xlu0 %833
        %835 = vrot.lane.b32.xlu0 %v493, 112
        %v836 = vpop.permute.xlu0 %835
        %837 = vrot.lane.b32.xlu0 %v494, 112
        %v838 = vpop.permute.xlu0 %837
        %839 = vrot.lane.b32.xlu0 %v495, 112
        %v840 = vpop.permute.xlu0 %839
        %841 = vrot.lane.b32.xlu0 %v496, 112
        %v842 = vpop.permute.xlu0 %841
        %843 = vrot.lane.b32.xlu0 %v497, 112
        %v844 = vpop.permute.xlu0 %843
        %845 = vrot.lane.b32.xlu0 %v498, 112
        %v846 = vpop.permute.xlu0 %845
        %847 = vrot.lane.b32.xlu0 %v499, 112
        %v848 = vpop.permute.xlu0 %847
        %849 = vrot.lane.b32.xlu0 %v500, 112
        %v850 = vpop.permute.xlu0 %849
        %851 = vrot.lane.b32.xlu0 %v501, 112
        %v852 = vpop.permute.xlu0 %851
        %853 = vrot.lane.b32.xlu0 %v502, 112
        %v854 = vpop.permute.xlu0 %853
        %855 = vrot.lane.b32.xlu0 %v503, 112
        %v856 = vpop.permute.xlu0 %855
        %857 = vrot.lane.b32.xlu0 %v504, 112
        %v858 = vpop.permute.xlu0 %857
        %859 = vrot.lane.b32.xlu0 %v505, 112
        %v860 = vpop.permute.xlu0 %859
        %861 = vrot.lane.b32.xlu0 %v506, 112
        %v862 = vpop.permute.xlu0 %861
        %863 = vrot.lane.b32.xlu0 %v507, 112
        %v864 = vpop.permute.xlu0 %863
        %865 = vrot.lane.b32.xlu0 %v508, 112
        %v866 = vpop.permute.xlu0 %865
        %867 = vrot.lane.b32.xlu0 %v509, 112
        %v868 = vpop.permute.xlu0 %867
        %869 = vrot.lane.b32.xlu0 %v510, 112
        %v870 = vpop.permute.xlu0 %869
        %vm895 = vcmask 228352
        %v896 = vsel %vm895, %v391, %v536
        %v897 = vsel %vm895, %v392, %v538
        %v898 = vsel %vm895, %v393, %v540
        %v899 = vsel %vm895, %v394, %v542
        %v900 = vsel %vm895, %v395, %v544
        %v901 = vsel %vm895, %v396, %v546
        %v902 = vsel %vm895, %v397, %v548
        %v903 = vsel %vm895, %v398, %v550
        %v904 = vsel %vm895, %v399, %v552
        %v905 = vsel %vm895, %v400, %v554
        %v906 = vsel %vm895, %v401, %v556
        %v907 = vsel %vm895, %v402, %v558
        %v908 = vsel %vm895, %v403, %v560
        %v909 = vsel %vm895, %v404, %v562
        %v910 = vsel %vm895, %v405, %v564
        %v911 = vsel %vm895, %v406, %v566
        %v912 = vsel %vm895, %v407, %v568
        %v913 = vsel %vm895, %v408, %v570
        %v914 = vsel %vm895, %v409, %v572
        %v915 = vsel %vm895, %v410, %v574
        %v916 = vsel %vm895, %v411, %v576
        %v917 = vsel %vm895, %v412, %v578
        %v918 = vsel %vm895, %v413, %v580
        %v919 = vsel %vm895, %v414, %v582
        %vm920 = vcmask 457728
        %v921 = vsel %vm920, %v896, %v632
        %v922 = vsel %vm920, %v897, %v634
        %v923 = vsel %vm920, %v898, %v636
        %v924 = vsel %vm920, %v899, %v638
        %v925 = vsel %vm920, %v900, %v640
        %v926 = vsel %vm920, %v901, %v642
        %v927 = vsel %vm920, %v902, %v644
        %v928 = vsel %vm920, %v903, %v646
        %v929 = vsel %vm920, %v904, %v648
        %v930 = vsel %vm920, %v905, %v650
        %v931 = vsel %vm920, %v906, %v652
        %v932 = vsel %vm920, %v907, %v654
        %v933 = vsel %vm920, %v908, %v656
        %v934 = vsel %vm920, %v909, %v658
        %v935 = vsel %vm920, %v910, %v660
        %v936 = vsel %vm920, %v911, %v662
        %v937 = vsel %vm920, %v912, %v664
        %v938 = vsel %vm920, %v913, %v666
        %v939 = vsel %vm920, %v914, %v668
        %v940 = vsel %vm920, %v915, %v670
        %v941 = vsel %vm920, %v916, %v672
        %v942 = vsel %vm920, %v917, %v674
        %v943 = vsel %vm920, %v918, %v676
        %v944 = vsel %vm920, %v919, %v678
        %vm945 = vcmask 687104
        %v946 = vsel %vm945, %v921, %v728
        %v947 = vsel %vm945, %v922, %v730
        %v948 = vsel %vm945, %v923, %v732
        %v949 = vsel %vm945, %v924, %v734
        %v950 = vsel %vm945, %v925, %v736
        %v951 = vsel %vm945, %v926, %v738
        %v952 = vsel %vm945, %v927, %v740
        %v953 = vsel %vm945, %v928, %v742
        %v954 = vsel %vm945, %v929, %v744
        %v955 = vsel %vm945, %v930, %v746
        %v956 = vsel %vm945, %v931, %v748
        %v957 = vsel %vm945, %v932, %v750
        %v958 = vsel %vm945, %v933, %v752
        %v959 = vsel %vm945, %v934, %v754
        %v960 = vsel %vm945, %v935, %v756
        %v961 = vsel %vm945, %v936, %v758
        %v962 = vsel %vm945, %v937, %v760
        %v963 = vsel %vm945, %v938, %v762
        %v964 = vsel %vm945, %v939, %v764
        %v965 = vsel %vm945, %v940, %v766
        %v966 = vsel %vm945, %v941, %v768
        %v967 = vsel %vm945, %v942, %v770
        %v968 = vsel %vm945, %v943, %v772
        %v969 = vsel %vm945, %v944, %v774
        %vm970 = vcmask 916480
        %v971 = vsel %vm970, %v946, %v824
        %v972 = vsel %vm970, %v947, %v826
        %v973 = vsel %vm970, %v948, %v828
        %v974 = vsel %vm970, %v949, %v830
        %v975 = vsel %vm970, %v950, %v832
        %v976 = vsel %vm970, %v951, %v834
        %v977 = vsel %vm970, %v952, %v836
        %v978 = vsel %vm970, %v953, %v838
        %v979 = vsel %vm970, %v954, %v840
        %v980 = vsel %vm970, %v955, %v842
        %v981 = vsel %vm970, %v956, %v844
        %v982 = vsel %vm970, %v957, %v846
        %v983 = vsel %vm970, %v958, %v848
        %v984 = vsel %vm970, %v959, %v850
        %v985 = vsel %vm970, %v960, %v852
        %v986 = vsel %vm970, %v961, %v854
        %v987 = vsel %vm970, %v962, %v856
        %v988 = vsel %vm970, %v963, %v858
        %v989 = vsel %vm970, %v964, %v860
        %v990 = vsel %vm970, %v965, %v862
        %v991 = vsel %vm970, %v966, %v864
        %v992 = vsel %vm970, %v967, %v866
        %v993 = vsel %vm970, %v968, %v868
        %v994 = vsel %vm970, %v969, %v870
        %v995 = vpack.c.bf16 %v972, %v971
        %v996 = vpack.c.bf16 %v826, %v824
        %v997 = vpack.c.bf16 %v974, %v973
        %v998 = vpack.c.bf16 %v830, %v828
        %v999 = vpack.c.bf16 %v976, %v975
        %v1000 = vpack.c.bf16 %v834, %v832
        %v1001 = vpack.c.bf16 %v978, %v977
        %v1002 = vpack.c.bf16 %v838, %v836
        %v1003 = vpack.c.bf16 %v980, %v979
        %v1004 = vpack.c.bf16 %v842, %v840
        %v1005 = vpack.c.bf16 %v982, %v981
        %v1006 = vpack.c.bf16 %v846, %v844
        %v1007 = vpack.c.bf16 %v984, %v983
        %v1008 = vpack.c.bf16 %v850, %v848
        %v1009 = vpack.c.bf16 %v986, %v985
        %v1010 = vpack.c.bf16 %v854, %v852
        %v1011 = vpack.c.bf16 %v988, %v987
        %v1012 = vpack.c.bf16 %v858, %v856
        %v1013 = vpack.c.bf16 %v990, %v989
        %v1014 = vpack.c.bf16 %v862, %v860
        %v1015 = vpack.c.bf16 %v992, %v991
        %v1016 = vpack.c.bf16 %v866, %v864
        %v1017 = vpack.c.bf16 %v994, %v993
        %v1018 = vpack.c.bf16 %v870, %v868
        %v1019 = vld [vmem:[%s1] sm:$0xf]
        %v1020 = vld [vmem:[%s1 + $0x4] sm:$0xf]
        %v1021 = vld [vmem:[%s1 + $0x8] sm:$0xf]
        %v1022 = vld [vmem:[%s1 + $0xc] sm:$0xf]
        %v1023 = vld [vmem:[%s1 + $0x10] sm:$0xf]
        %v1024 = vld [vmem:[%s1 + $0x14] sm:$0xf]
        %v1025 = vld [vmem:[%s1 + $0x18] sm:$0xf]
        %v1026 = vld [vmem:[%s1 + $0x1c] sm:$0xf]
        %v1027 = vld [vmem:[%s1 + $0x20] sm:$0xf]
        %v1028 = vld [vmem:[%s1 + $0x24] sm:$0xf]
        %v1029 = vld [vmem:[%s1 + $0x28] sm:$0xf]
        %v1030 = vld [vmem:[%s1 + $0x2c] sm:$0xf]
        %v1031 = vld [vmem:[%s1 + $0x30] sm:$0xf]
        %v1032 = vld [vmem:[%s1 + $0x34] sm:$0xf]
        %v1033 = vld [vmem:[%s1 + $0x38] sm:$0xf]
        %v1034 = vld [vmem:[%s1 + $0x3c] sm:$0xf]
        %v1035 = vld [vmem:[%s1 + $0x40] sm:$0xf]
        %v1036 = vld [vmem:[%s1 + $0x44] sm:$0x3]
        %v1055 = vunpack.c.l.b16 %v1019
        %v1056 = vunpack.c.l.b16 %v1020
        %v1057 = vunpack.c.l.b16 %v1021
        %v1058 = vunpack.c.l.b16 %v1022
        %v1059 = vunpack.c.l.b16 %v1023
        %v1060 = vunpack.c.l.b16 %v1024
        %v1061 = vunpack.c.l.b16 %v1025
        %v1062 = vunpack.c.l.b16 %v1026
        %v1063 = vunpack.c.l.b16 %v1027
        %v1064 = vunpack.c.l.b16 %v1028
        %v1065 = vunpack.c.l.b16 %v1029
        %v1066 = vunpack.c.l.b16 %v1030
        %v1067 = vunpack.c.l.b16 %v1031
        %v1068 = vunpack.c.l.b16 %v1032
        %v1069 = vunpack.c.l.b16 %v1033
        %v1070 = vunpack.c.l.b16 %v1034
        %v1071 = vunpack.c.l.b16 %v1035
        %v1072 = vunpack.c.l.b16 %v1036
        %v1073 = vpack.c.b16 %v1056, %v1055
        %v1074 = vpack.c.b16 %v1058, %v1057
        %v1075 = vpack.c.b16 %v1060, %v1059
        %v1076 = vpack.c.b16 %v1062, %v1061
        %v1077 = vpack.c.b16 %v1064, %v1063
        %v1078 = vpack.c.b16 %v1066, %v1065
        %v1079 = vpack.c.b16 %v1068, %v1067
        %v1080 = vpack.c.b16 %v1070, %v1069
        %v1081 = vpack.c.b16 %v1072, %v1071
        %vm1090 = vcmask 97280
        %v1092 = vsel %vm1090, %v996, 0
        %v1095 = vsel %vm1090, %v998, 0
        %v1098 = vsel %vm1090, %v1000, 0
        %v1101 = vsel %vm1090, %v1002, 0
        %v1104 = vsel %vm1090, %v1004, 0
        %v1107 = vsel %vm1090, %v1006, 0
        %v1110 = vsel %vm1090, %v1008, 0
        %v1113 = vsel %vm1090, %v1010, 0
        %v1116 = vsel %vm1090, %v1012, 0
        %v1119 = vsel %vm1090, %v1014, 0
        %v1122 = vsel %vm1090, %v1016, 0
        %v1125 = vsel %vm1090, %v1018, 0
        %vm1127 = vcmask 1045504
        %v1129 = vsel %vm1127, %v1081, 0
        %1131 = vmatpush.bf16.msra.mxu0 %v1080
        %1132 = vmatpush.bf16.msra.mxu0 %v1079
        %1133 = vmatpush.bf16.msra.mxu0 %v1078
        %1134 = vmatpush.bf16.msra.mxu0 %v1077
        %1135 = vmatpush.bf16.msra.mxu0 %v1076
        %1136 = vmatpush.bf16.msra.mxu0 %v1075
        %1137 = vmatpush.bf16.msra.mxu0 %v1074
        %1138 = vmatpush.bf16.msra.mxu0 %v1073
        %1139 = vmatmul.bf16.gmra.mxu0 %v995
        %v1140 = vpop.f32.mrf.mxu0
        %v1141 = vadd.f32 0.0, %v1140
        %v1142 = vpop.f32.mrf.mxu0
        %v1143 = vadd.f32 0.0, %v1142
        %1144 = vmatmul.bf16.gmra.mxu0 %v997
        %v1145 = vpop.f32.mrf.mxu0
        %v1146 = vadd.f32 0.0, %v1145
        %v1147 = vpop.f32.mrf.mxu0
        %v1148 = vadd.f32 0.0, %v1147
        %1149 = vmatmul.bf16.gmra.mxu0 %v999
        %v1150 = vpop.f32.mrf.mxu0
        %v1151 = vadd.f32 0.0, %v1150
        %v1152 = vpop.f32.mrf.mxu0
        %v1153 = vadd.f32 0.0, %v1152
        %1154 = vmatmul.bf16.gmra.mxu0 %v1001
        %v1155 = vpop.f32.mrf.mxu0
        %v1156 = vadd.f32 0.0, %v1155
        %v1157 = vpop.f32.mrf.mxu0
        %v1158 = vadd.f32 0.0, %v1157
        %1159 = vmatmul.bf16.gmra.mxu0 %v1003
        %v1160 = vpop.f32.mrf.mxu0
        %v1161 = vadd.f32 0.0, %v1160
        %v1162 = vpop.f32.mrf.mxu0
        %v1163 = vadd.f32 0.0, %v1162
        %1164 = vmatmul.bf16.gmra.mxu0 %v1005
        %v1165 = vpop.f32.mrf.mxu0
        %v1166 = vadd.f32 0.0, %v1165
        %v1167 = vpop.f32.mrf.mxu0
        %v1168 = vadd.f32 0.0, %v1167
        %1169 = vmatmul.bf16.gmra.mxu0 %v1007
        %v1170 = vpop.f32.mrf.mxu0
        %v1171 = vadd.f32 0.0, %v1170
        %v1172 = vpop.f32.mrf.mxu0
        %v1173 = vadd.f32 0.0, %v1172
        %1174 = vmatmul.bf16.gmra.mxu0 %v1009
        %v1175 = vpop.f32.mrf.mxu0
        %v1176 = vadd.f32 0.0, %v1175
        %v1177 = vpop.f32.mrf.mxu0
        %v1178 = vadd.f32 0.0, %v1177
        %1179 = vmatmul.bf16.gmra.mxu0 %v1011
        %v1180 = vpop.f32.mrf.mxu0
        %v1181 = vadd.f32 0.0, %v1180
        %v1182 = vpop.f32.mrf.mxu0
        %v1183 = vadd.f32 0.0, %v1182
        %1184 = vmatmul.bf16.gmra.mxu0 %v1013
        %v1185 = vpop.f32.mrf.mxu0
        %v1186 = vadd.f32 0.0, %v1185
        %v1187 = vpop.f32.mrf.mxu0
        %v1188 = vadd.f32 0.0, %v1187
        %1189 = vmatmul.bf16.gmra.mxu0 %v1015
        %v1190 = vpop.f32.mrf.mxu0
        %v1191 = vadd.f32 0.0, %v1190
        %v1192 = vpop.f32.mrf.mxu0
        %v1193 = vadd.f32 0.0, %v1192
        %1194 = vmatmul.bf16.gmra.mxu0 %v1017
        %v1195 = vpop.f32.mrf.mxu0
        %v1196 = vadd.f32 0.0, %v1195
        %v1197 = vpop.f32.mrf.mxu0
        %v1198 = vadd.f32 0.0, %v1197
        %1199 = vdwg.mxu0
        %1200 = vmatpush.bf16.msra.mxu0 0
        %1201 = vmatpush.bf16.msra.mxu0 0
        %1202 = vmatpush.bf16.msra.mxu0 0
        %1203 = vmatpush.bf16.msra.mxu0 0
        %1204 = vmatpush.bf16.msra.mxu0 0
        %1205 = vmatpush.bf16.msra.mxu0 0
        %1206 = vmatpush.bf16.msra.mxu0 0
        %1207 = vmatpush.bf16.msra.mxu0 %v1129
        %1208 = vmatmul.bf16.gmra.mxu0 %v1092
        %v1209 = vpop.f32.mrf.mxu0
        %v1210 = vadd.f32 %v1141, %v1209
        %v1211 = vpop.f32.mrf.mxu0
        %v1212 = vadd.f32 %v1143, %v1211
        %1213 = vmatmul.bf16.gmra.mxu0 %v1095
        %v1214 = vpop.f32.mrf.mxu0
        %v1215 = vadd.f32 %v1146, %v1214
        %v1216 = vpop.f32.mrf.mxu0
        %v1217 = vadd.f32 %v1148, %v1216
        %1218 = vmatmul.bf16.gmra.mxu0 %v1098
        %v1219 = vpop.f32.mrf.mxu0
        %v1220 = vadd.f32 %v1151, %v1219
        %v1221 = vpop.f32.mrf.mxu0
        %v1222 = vadd.f32 %v1153, %v1221
        %1223 = vmatmul.bf16.gmra.mxu0 %v1101
        %v1224 = vpop.f32.mrf.mxu0
        %v1225 = vadd.f32 %v1156, %v1224
        %v1226 = vpop.f32.mrf.mxu0
        %v1227 = vadd.f32 %v1158, %v1226
        %1228 = vmatmul.bf16.gmra.mxu0 %v1104
        %v1229 = vpop.f32.mrf.mxu0
        %v1230 = vadd.f32 %v1161, %v1229
        %v1231 = vpop.f32.mrf.mxu0
        %v1232 = vadd.f32 %v1163, %v1231
        %1233 = vmatmul.bf16.gmra.mxu0 %v1107
        %v1234 = vpop.f32.mrf.mxu0
        %v1235 = vadd.f32 %v1166, %v1234
        %v1236 = vpop.f32.mrf.mxu0
        %v1237 = vadd.f32 %v1168, %v1236
        %1238 = vmatmul.bf16.gmra.mxu0 %v1110
        %v1239 = vpop.f32.mrf.mxu0
        %v1240 = vadd.f32 %v1171, %v1239
        %v1241 = vpop.f32.mrf.mxu0
        %v1242 = vadd.f32 %v1173, %v1241
        %1243 = vmatmul.bf16.gmra.mxu0 %v1113
        %v1244 = vpop.f32.mrf.mxu0
        %v1245 = vadd.f32 %v1176, %v1244
        %v1246 = vpop.f32.mrf.mxu0
        %v1247 = vadd.f32 %v1178, %v1246
        %1248 = vmatmul.bf16.gmra.mxu0 %v1116
        %v1249 = vpop.f32.mrf.mxu0
        %v1250 = vadd.f32 %v1181, %v1249
        %v1251 = vpop.f32.mrf.mxu0
        %v1252 = vadd.f32 %v1183, %v1251
        %1253 = vmatmul.bf16.gmra.mxu0 %v1119
        %v1254 = vpop.f32.mrf.mxu0
        %v1255 = vadd.f32 %v1186, %v1254
        %v1256 = vpop.f32.mrf.mxu0
        %v1257 = vadd.f32 %v1188, %v1256
        %1258 = vmatmul.bf16.gmra.mxu0 %v1122
        %v1259 = vpop.f32.mrf.mxu0
        %v1260 = vadd.f32 %v1191, %v1259
        %v1261 = vpop.f32.mrf.mxu0
        %v1262 = vadd.f32 %v1193, %v1261
        %1263 = vmatmul.bf16.gmra.mxu0 %v1125
        %v1264 = vpop.f32.mrf.mxu0
        %v1265 = vadd.f32 %v1196, %v1264
        %v1266 = vpop.f32.mrf.mxu0
        %v1267 = vadd.f32 %v1198, %v1266
        %1268 = vdwg.mxu0
        %v1269 = vld [vmem:[%s2] sm:$0xf]
        %v1270 = vld [vmem:[%s2 + $0x4] sm:$0xf]
        %v1271 = vld [vmem:[%s2 + $0x8] sm:$0xf]
        %v1272 = vld [vmem:[%s2 + $0xc] sm:$0xf]
        %v1273 = vld [vmem:[%s2 + $0x10] sm:$0xf]
        %v1274 = vld [vmem:[%s2 + $0x14] sm:$0xf]
        %v1275 = vld [vmem:[%s2 + $0x18] sm:$0xf]
        %v1276 = vld [vmem:[%s2 + $0x1c] sm:$0xf]
        %v1277 = vld [vmem:[%s2 + $0x20] sm:$0xf]
        %v1278 = vld [vmem:[%s2 + $0x24] sm:$0xf]
        %v1279 = vld [vmem:[%s2 + $0x28] sm:$0xf]
        %v1280 = vld [vmem:[%s2 + $0x2c] sm:$0xf]
        %v1281 = vld [vmem:[%s2 + $0x30] sm:$0xf]
        %v1282 = vld [vmem:[%s2 + $0x34] sm:$0xf]
        %v1283 = vld [vmem:[%s2 + $0x38] sm:$0xf]
        %v1284 = vld [vmem:[%s2 + $0x3c] sm:$0xf]
        %v1285 = vld [vmem:[%s2 + $0x40] sm:$0xf]
        %v1286 = vld [vmem:[%s2 + $0x44] sm:$0x3]
        %v1305 = vunpack.c.l.b16 %v1269
        %v1306 = vunpack.c.l.b16 %v1270
        %v1307 = vunpack.c.l.b16 %v1271
        %v1308 = vunpack.c.l.b16 %v1272
        %v1309 = vunpack.c.l.b16 %v1273
        %v1310 = vunpack.c.l.b16 %v1274
        %v1311 = vunpack.c.l.b16 %v1275
        %v1312 = vunpack.c.l.b16 %v1276
        %v1313 = vunpack.c.l.b16 %v1277
        %v1314 = vunpack.c.l.b16 %v1278
        %v1315 = vunpack.c.l.b16 %v1279
        %v1316 = vunpack.c.l.b16 %v1280
        %v1317 = vunpack.c.l.b16 %v1281
        %v1318 = vunpack.c.l.b16 %v1282
        %v1319 = vunpack.c.l.b16 %v1283
        %v1320 = vunpack.c.l.b16 %v1284
        %v1321 = vunpack.c.l.b16 %v1285
        %v1322 = vunpack.c.l.b16 %v1286
        %v1323 = vpack.c.b16 %v1306, %v1305
        %v1324 = vpack.c.b16 %v1308, %v1307
        %v1325 = vpack.c.b16 %v1310, %v1309
        %v1326 = vpack.c.b16 %v1312, %v1311
        %v1327 = vpack.c.b16 %v1314, %v1313
        %v1328 = vpack.c.b16 %v1316, %v1315
        %v1329 = vpack.c.b16 %v1318, %v1317
        %v1330 = vpack.c.b16 %v1320, %v1319
        %v1331 = vpack.c.b16 %v1322, %v1321
        %v1341 = vsel %vm1127, %v1331, 0
        %1343 = vmatpush.bf16.msra.mxu0 %v1330
        %1344 = vmatpush.bf16.msra.mxu0 %v1329
        %1345 = vmatpush.bf16.msra.mxu0 %v1328
        %1346 = vmatpush.bf16.msra.mxu0 %v1327
        %1347 = vmatpush.bf16.msra.mxu0 %v1326
        %1348 = vmatpush.bf16.msra.mxu0 %v1325
        %1349 = vmatpush.bf16.msra.mxu0 %v1324
        %1350 = vmatpush.bf16.msra.mxu0 %v1323
        %1351 = vmatmul.bf16.gmra.mxu0 %v995
        %v1352 = vpop.f32.mrf.mxu0
        %v1353 = vadd.f32 0.0, %v1352
        %v1354 = vpop.f32.mrf.mxu0
        %v1355 = vadd.f32 0.0, %v1354
        %1356 = vmatmul.bf16.gmra.mxu0 %v997
        %v1357 = vpop.f32.mrf.mxu0
        %v1358 = vadd.f32 0.0, %v1357
        %v1359 = vpop.f32.mrf.mxu0
        %v1360 = vadd.f32 0.0, %v1359
        %1361 = vmatmul.bf16.gmra.mxu0 %v999
        %v1362 = vpop.f32.mrf.mxu0
        %v1363 = vadd.f32 0.0, %v1362
        %v1364 = vpop.f32.mrf.mxu0
        %v1365 = vadd.f32 0.0, %v1364
        %1366 = vmatmul.bf16.gmra.mxu0 %v1001
        %v1367 = vpop.f32.mrf.mxu0
        %v1368 = vadd.f32 0.0, %v1367
        %v1369 = vpop.f32.mrf.mxu0
        %v1370 = vadd.f32 0.0, %v1369
        %1371 = vmatmul.bf16.gmra.mxu0 %v1003
        %v1372 = vpop.f32.mrf.mxu0
        %v1373 = vadd.f32 0.0, %v1372
        %v1374 = vpop.f32.mrf.mxu0
        %v1375 = vadd.f32 0.0, %v1374
        %1376 = vmatmul.bf16.gmra.mxu0 %v1005
        %v1377 = vpop.f32.mrf.mxu0
        %v1378 = vadd.f32 0.0, %v1377
        %v1379 = vpop.f32.mrf.mxu0
        %v1380 = vadd.f32 0.0, %v1379
        %1381 = vmatmul.bf16.gmra.mxu0 %v1007
        %v1382 = vpop.f32.mrf.mxu0
        %v1383 = vadd.f32 0.0, %v1382
        %v1384 = vpop.f32.mrf.mxu0
        %v1385 = vadd.f32 0.0, %v1384
        %1386 = vmatmul.bf16.gmra.mxu0 %v1009
        %v1387 = vpop.f32.mrf.mxu0
        %v1388 = vadd.f32 0.0, %v1387
        %v1389 = vpop.f32.mrf.mxu0
        %v1390 = vadd.f32 0.0, %v1389
        %1391 = vmatmul.bf16.gmra.mxu0 %v1011
        %v1392 = vpop.f32.mrf.mxu0
        %v1393 = vadd.f32 0.0, %v1392
        %v1394 = vpop.f32.mrf.mxu0
        %v1395 = vadd.f32 0.0, %v1394
        %1396 = vmatmul.bf16.gmra.mxu0 %v1013
        %v1397 = vpop.f32.mrf.mxu0
        %v1398 = vadd.f32 0.0, %v1397
        %v1399 = vpop.f32.mrf.mxu0
        %v1400 = vadd.f32 0.0, %v1399
        %1401 = vmatmul.bf16.gmra.mxu0 %v1015
        %v1402 = vpop.f32.mrf.mxu0
        %v1403 = vadd.f32 0.0, %v1402
        %v1404 = vpop.f32.mrf.mxu0
        %v1405 = vadd.f32 0.0, %v1404
        %1406 = vmatmul.bf16.gmra.mxu0 %v1017
        %v1407 = vpop.f32.mrf.mxu0
        %v1408 = vadd.f32 0.0, %v1407
        %v1409 = vpop.f32.mrf.mxu0
        %v1410 = vadd.f32 0.0, %v1409
        %1411 = vdwg.mxu0
        %1412 = vmatpush.bf16.msra.mxu0 0
        %1413 = vmatpush.bf16.msra.mxu0 0
        %1414 = vmatpush.bf16.msra.mxu0 0
        %1415 = vmatpush.bf16.msra.mxu0 0
        %1416 = vmatpush.bf16.msra.mxu0 0
        %1417 = vmatpush.bf16.msra.mxu0 0
        %1418 = vmatpush.bf16.msra.mxu0 0
        %1419 = vmatpush.bf16.msra.mxu0 %v1341
        %1420 = vmatmul.bf16.gmra.mxu0 %v1092
        %v1421 = vpop.f32.mrf.mxu0
        %v1422 = vadd.f32 %v1353, %v1421
        %v1423 = vpop.f32.mrf.mxu0
        %v1424 = vadd.f32 %v1355, %v1423
        %1425 = vmatmul.bf16.gmra.mxu0 %v1095
        %v1426 = vpop.f32.mrf.mxu0
        %v1427 = vadd.f32 %v1358, %v1426
        %v1428 = vpop.f32.mrf.mxu0
        %v1429 = vadd.f32 %v1360, %v1428
        %1430 = vmatmul.bf16.gmra.mxu0 %v1098
        %v1431 = vpop.f32.mrf.mxu0
        %v1432 = vadd.f32 %v1363, %v1431
        %v1433 = vpop.f32.mrf.mxu0
        %v1434 = vadd.f32 %v1365, %v1433
        %1435 = vmatmul.bf16.gmra.mxu0 %v1101
        %v1436 = vpop.f32.mrf.mxu0
        %v1437 = vadd.f32 %v1368, %v1436
        %v1438 = vpop.f32.mrf.mxu0
        %v1439 = vadd.f32 %v1370, %v1438
        %1440 = vmatmul.bf16.gmra.mxu0 %v1104
        %v1441 = vpop.f32.mrf.mxu0
        %v1442 = vadd.f32 %v1373, %v1441
        %v1443 = vpop.f32.mrf.mxu0
        %v1444 = vadd.f32 %v1375, %v1443
        %1445 = vmatmul.bf16.gmra.mxu0 %v1107
        %v1446 = vpop.f32.mrf.mxu0
        %v1447 = vadd.f32 %v1378, %v1446
        %v1448 = vpop.f32.mrf.mxu0
        %v1449 = vadd.f32 %v1380, %v1448
        %1450 = vmatmul.bf16.gmra.mxu0 %v1110
        %v1451 = vpop.f32.mrf.mxu0
        %v1452 = vadd.f32 %v1383, %v1451
        %v1453 = vpop.f32.mrf.mxu0
        %v1454 = vadd.f32 %v1385, %v1453
        %1455 = vmatmul.bf16.gmra.mxu0 %v1113
        %v1456 = vpop.f32.mrf.mxu0
        %v1457 = vadd.f32 %v1388, %v1456
        %v1458 = vpop.f32.mrf.mxu0
        %v1459 = vadd.f32 %v1390, %v1458
        %1460 = vmatmul.bf16.gmra.mxu0 %v1116
        %v1461 = vpop.f32.mrf.mxu0
        %v1462 = vadd.f32 %v1393, %v1461
        %v1463 = vpop.f32.mrf.mxu0
        %v1464 = vadd.f32 %v1395, %v1463
        %1465 = vmatmul.bf16.gmra.mxu0 %v1119
        %v1466 = vpop.f32.mrf.mxu0
        %v1467 = vadd.f32 %v1398, %v1466
        %v1468 = vpop.f32.mrf.mxu0
        %v1469 = vadd.f32 %v1400, %v1468
        %1470 = vmatmul.bf16.gmra.mxu0 %v1122
        %v1471 = vpop.f32.mrf.mxu0
        %v1472 = vadd.f32 %v1403, %v1471
        %v1473 = vpop.f32.mrf.mxu0
        %v1474 = vadd.f32 %v1405, %v1473
        %1475 = vmatmul.bf16.gmra.mxu0 %v1125
        %v1476 = vpop.f32.mrf.mxu0
        %v1477 = vadd.f32 %v1408, %v1476
        %v1478 = vpop.f32.mrf.mxu0
        %v1479 = vadd.f32 %v1410, %v1478
        %1480 = vdwg.mxu0
        %v1481 = vmax.f32 %v1210, %v1422
        %v1482 = vmax.f32 %v1212, %v1424
        %v1483 = vmax.f32 %v1215, %v1427
        %v1484 = vmax.f32 %v1217, %v1429
        %v1485 = vmax.f32 %v1220, %v1432
        %v1486 = vmax.f32 %v1222, %v1434
        %v1487 = vmax.f32 %v1225, %v1437
        %v1488 = vmax.f32 %v1227, %v1439
        %v1489 = vmax.f32 %v1230, %v1442
        %v1490 = vmax.f32 %v1232, %v1444
        %v1491 = vmax.f32 %v1235, %v1447
        %v1492 = vmax.f32 %v1237, %v1449
        %v1493 = vmax.f32 %v1240, %v1452
        %v1494 = vmax.f32 %v1242, %v1454
        %v1495 = vmax.f32 %v1245, %v1457
        %v1496 = vmax.f32 %v1247, %v1459
        %v1497 = vmax.f32 %v1250, %v1462
        %v1498 = vmax.f32 %v1252, %v1464
        %v1499 = vmax.f32 %v1255, %v1467
        %v1500 = vmax.f32 %v1257, %v1469
        %v1501 = vmax.f32 %v1260, %v1472
        %v1502 = vmax.f32 %v1262, %v1474
        %v1503 = vmax.f32 %v1265, %v1477
        %v1504 = vmax.f32 %v1267, %v1479
        %v1505 = vld [vmem:[%s3] sm:$0x1]
        %v1507 = vperm.slane %v1505, 0
        %v1509 = vadd.f32 %v1481, %v1507
        %v1510 = vadd.f32 %v1482, %v1507
        %v1511 = vadd.f32 %v1483, %v1507
        %v1512 = vadd.f32 %v1484, %v1507
        %v1513 = vadd.f32 %v1485, %v1507
        %v1514 = vadd.f32 %v1486, %v1507
        %v1515 = vadd.f32 %v1487, %v1507
        %v1516 = vadd.f32 %v1488, %v1507
        %v1517 = vadd.f32 %v1489, %v1507
        %v1518 = vadd.f32 %v1490, %v1507
        %v1519 = vadd.f32 %v1491, %v1507
        %v1520 = vadd.f32 %v1492, %v1507
        %v1521 = vadd.f32 %v1493, %v1507
        %v1522 = vadd.f32 %v1494, %v1507
        %v1523 = vadd.f32 %v1495, %v1507
        %v1524 = vadd.f32 %v1496, %v1507
        %v1525 = vadd.f32 %v1497, %v1507
        %v1526 = vadd.f32 %v1498, %v1507
        %v1527 = vadd.f32 %v1499, %v1507
        %v1528 = vadd.f32 %v1500, %v1507
        %v1529 = vadd.f32 %v1501, %v1507
        %v1530 = vadd.f32 %v1502, %v1507
        %v1531 = vadd.f32 %v1503, %v1507
        %v1532 = vadd.f32 %v1504, %v1507
        %vm1533 = vcmask 982016
        %1534 = vst.msk [vmem:[#allocation2] sm:$0xff] %vm1533, %v1509
        %1535 = vst.msk [vmem:[#allocation2 + $0x8] sm:$0xff] %vm1533, %v1510
        %1536 = vst.msk [vmem:[#allocation2 + $0x10] sm:$0xff] %vm1533, %v1511
        %1537 = vst.msk [vmem:[#allocation2 + $0x18] sm:$0xff] %vm1533, %v1512
        %1538 = vst.msk [vmem:[#allocation2 + $0x20] sm:$0xff] %vm1533, %v1513
        %1539 = vst.msk [vmem:[#allocation2 + $0x28] sm:$0xff] %vm1533, %v1514
        %1540 = vst.msk [vmem:[#allocation2 + $0x30] sm:$0xff] %vm1533, %v1515
        %1541 = vst.msk [vmem:[#allocation2 + $0x38] sm:$0xff] %vm1533, %v1516
        %1542 = vst.msk [vmem:[#allocation2 + $0x40] sm:$0xff] %vm1533, %v1517
        %1543 = vst.msk [vmem:[#allocation2 + $0x48] sm:$0xff] %vm1533, %v1518
        %1544 = vst.msk [vmem:[#allocation2 + $0x50] sm:$0xff] %vm1533, %v1519
        %1545 = vst.msk [vmem:[#allocation2 + $0x58] sm:$0xff] %vm1533, %v1520
        %1546 = vst.msk [vmem:[#allocation2 + $0x60] sm:$0xff] %vm1533, %v1521
        %1547 = vst.msk [vmem:[#allocation2 + $0x68] sm:$0xff] %vm1533, %v1522
        %1548 = vst.msk [vmem:[#allocation2 + $0x70] sm:$0xff] %vm1533, %v1523
        %1549 = vst.msk [vmem:[#allocation2 + $0x78] sm:$0xff] %vm1533, %v1524
        %1550 = vst.msk [vmem:[#allocation2 + $0x80] sm:$0xff] %vm1533, %v1525
        %1551 = vst.msk [vmem:[#allocation2 + $0x88] sm:$0xff] %vm1533, %v1526
        %1552 = vst.msk [vmem:[#allocation2 + $0x90] sm:$0xff] %vm1533, %v1527
        %1553 = vst.msk [vmem:[#allocation2 + $0x98] sm:$0xff] %vm1533, %v1528
        %1554 = vst.msk [vmem:[#allocation2 + $0xa0] sm:$0xff] %vm1533, %v1529
        %1555 = vst.msk [vmem:[#allocation2 + $0xa8] sm:$0xff] %vm1533, %v1530
        %1556 = vst.msk [vmem:[#allocation2 + $0xb0] sm:$0xff] %vm1533, %v1531
        %1557 = vst.msk [vmem:[#allocation2 + $0xb8] sm:$0xff] %vm1533, %v1532
        %v1558 = vld [vmem:[#allocation2] ss:$2 sm:$0xff]
        %s1559 = scalar_lea.vmem [#allocation2], 16
        %v1560 = vld [vmem:[%s1559] ss:$2 sm:$0xf]
        %s1561 = scalar_lea.vmem [#allocation2], 24
        %v1562 = vld [vmem:[%s1561] ss:$2 sm:$0xff]
        %s1563 = scalar_lea.vmem [#allocation2], 40
        %v1564 = vld [vmem:[%s1563] ss:$2 sm:$0xf]
        %s1565 = scalar_lea.vmem [#allocation2], 48
        %v1566 = vld [vmem:[%s1565] ss:$2 sm:$0xff]
        %s1567 = scalar_lea.vmem [#allocation2], 64
        %v1568 = vld [vmem:[%s1567] ss:$2 sm:$0xf]
        %s1569 = scalar_lea.vmem [#allocation2], 72
        %v1570 = vld [vmem:[%s1569] ss:$2 sm:$0xff]
        %s1571 = scalar_lea.vmem [#allocation2], 88
        %v1572 = vld [vmem:[%s1571] ss:$2 sm:$0xf]
        %s1573 = scalar_lea.vmem [#allocation2], 96
        %v1574 = vld [vmem:[%s1573] ss:$2 sm:$0xff]
        %s1575 = scalar_lea.vmem [#allocation2], 112
        %v1576 = vld [vmem:[%s1575] ss:$2 sm:$0xf]
        %s1577 = scalar_lea.vmem [#allocation2], 120
        %v1578 = vld [vmem:[%s1577] ss:$2 sm:$0xff]
        %s1579 = scalar_lea.vmem [#allocation2], 136
        %v1580 = vld [vmem:[%s1579] ss:$2 sm:$0xf]
        %s1581 = scalar_lea.vmem [#allocation2], 144
        %v1582 = vld [vmem:[%s1581] ss:$2 sm:$0xff]
        %s1583 = scalar_lea.vmem [#allocation2], 160
        %v1584 = vld [vmem:[%s1583] ss:$2 sm:$0xf]
        %s1585 = scalar_lea.vmem [#allocation2], 168
        %v1586 = vld [vmem:[%s1585] ss:$2 sm:$0xff]
        %s1587 = scalar_lea.vmem [#allocation2], 184
        %v1588 = vld [vmem:[%s1587] ss:$2 sm:$0xf]
        %s1589 = scalar_lea.vmem [#allocation2], 1
        %v1590 = vld [vmem:[%s1589] ss:$2 sm:$0xff]
        %s1591 = scalar_lea.vmem [#allocation2], 17
        %v1592 = vld [vmem:[%s1591] ss:$2 sm:$0xf]
        %s1593 = scalar_lea.vmem [#allocation2], 25
        %v1594 = vld [vmem:[%s1593] ss:$2 sm:$0xff]
        %s1595 = scalar_lea.vmem [#allocation2], 41
        %v1596 = vld [vmem:[%s1595] ss:$2 sm:$0xf]
        %s1597 = scalar_lea.vmem [#allocation2], 49
        %v1598 = vld [vmem:[%s1597] ss:$2 sm:$0xff]
        %s1599 = scalar_lea.vmem [#allocation2], 65
        %v1600 = vld [vmem:[%s1599] ss:$2 sm:$0xf]
        %s1601 = scalar_lea.vmem [#allocation2], 73
        %v1602 = vld [vmem:[%s1601] ss:$2 sm:$0xff]
        %s1603 = scalar_lea.vmem [#allocation2], 89
        %v1604 = vld [vmem:[%s1603] ss:$2 sm:$0xf]
        %s1605 = scalar_lea.vmem [#allocation2], 97
        %v1606 = vld [vmem:[%s1605] ss:$2 sm:$0xff]
        %s1607 = scalar_lea.vmem [#allocation2], 113
        %v1608 = vld [vmem:[%s1607] ss:$2 sm:$0xf]
        %s1609 = scalar_lea.vmem [#allocation2], 121
        %v1610 = vld [vmem:[%s1609] ss:$2 sm:$0xff]
        %s1611 = scalar_lea.vmem [#allocation2], 137
        %v1612 = vld [vmem:[%s1611] ss:$2 sm:$0xf]
        %s1613 = scalar_lea.vmem [#allocation2], 145
        %v1614 = vld [vmem:[%s1613] ss:$2 sm:$0xff]
        %s1615 = scalar_lea.vmem [#allocation2], 161
        %v1616 = vld [vmem:[%s1615] ss:$2 sm:$0xf]
        %s1617 = scalar_lea.vmem [#allocation2], 169
        %v1618 = vld [vmem:[%s1617] ss:$2 sm:$0xff]
        %s1619 = scalar_lea.vmem [#allocation2], 185
        %v1620 = vld [vmem:[%s1619] ss:$2 sm:$0xf]
        %v1621 = vmax.f32 %v1558, %v1590
        %v1622 = vmax.f32 %v1560, %v1592
        %v1623 = vmax.f32 %v1562, %v1594
        %v1624 = vmax.f32 %v1564, %v1596
        %v1625 = vmax.f32 %v1566, %v1598
        %v1626 = vmax.f32 %v1568, %v1600
        %v1627 = vmax.f32 %v1570, %v1602
        %v1628 = vmax.f32 %v1572, %v1604
        %v1629 = vmax.f32 %v1574, %v1606
        %v1630 = vmax.f32 %v1576, %v1608
        %v1631 = vmax.f32 %v1578, %v1610
        %v1632 = vmax.f32 %v1580, %v1612
        %v1633 = vmax.f32 %v1582, %v1614
        %v1634 = vmax.f32 %v1584, %v1616
        %v1635 = vmax.f32 %v1586, %v1618
        %v1636 = vmax.f32 %v1588, %v1620
        %v1637 = vmax.f32 %v1621, 0.0
        %v1638 = vmax.f32 %v1622, 0.0
        %v1639 = vmax.f32 %v1623, 0.0
        %v1640 = vmax.f32 %v1624, 0.0
        %v1641 = vmax.f32 %v1625, 0.0
        %v1642 = vmax.f32 %v1626, 0.0
        %v1643 = vmax.f32 %v1627, 0.0
        %v1644 = vmax.f32 %v1628, 0.0
        %v1645 = vmax.f32 %v1629, 0.0
        %v1646 = vmax.f32 %v1630, 0.0
        %v1647 = vmax.f32 %v1631, 0.0
        %v1648 = vmax.f32 %v1632, 0.0
        %v1649 = vmax.f32 %v1633, 0.0
        %v1650 = vmax.f32 %v1634, 0.0
        %v1651 = vmax.f32 %v1635, 0.0
        %v1652 = vmax.f32 %v1636, 0.0
        %1653 = vst.msk [vmem:[#allocation3] sm:$0xff] %vm1533, %v1637
        %vm1654 = vcmask 977920
        %1655 = vst.msk [vmem:[#allocation3 + $0x8] sm:$0xf] %vm1654, %v1638
        %1656 = vst.msk [vmem:[#allocation3 + $0x10] sm:$0xff] %vm1533, %v1639
        %1657 = vst.msk [vmem:[#allocation3 + $0x18] sm:$0xf] %vm1654, %v1640
        %1658 = vst.msk [vmem:[#allocation3 + $0x20] sm:$0xff] %vm1533, %v1641
        %1659 = vst.msk [vmem:[#allocation3 + $0x28] sm:$0xf] %vm1654, %v1642
        %1660 = vst.msk [vmem:[#allocation3 + $0x30] sm:$0xff] %vm1533, %v1643
        %1661 = vst.msk [vmem:[#allocation3 + $0x38] sm:$0xf] %vm1654, %v1644
        %1662 = vst.msk [vmem:[#allocation3 + $0x40] sm:$0xff] %vm1533, %v1645
        %1663 = vst.msk [vmem:[#allocation3 + $0x48] sm:$0xf] %vm1654, %v1646
        %1664 = vst.msk [vmem:[#allocation3 + $0x50] sm:$0xff] %vm1533, %v1647
        %1665 = vst.msk [vmem:[#allocation3 + $0x58] sm:$0xf] %vm1654, %v1648
        %1666 = vst.msk [vmem:[#allocation3 + $0x60] sm:$0xff] %vm1533, %v1649
        %1667 = vst.msk [vmem:[#allocation3 + $0x68] sm:$0xf] %vm1654, %v1650
        %1668 = vst.msk [vmem:[#allocation3 + $0x70] sm:$0xff] %vm1533, %v1651
        %1669 = vst.msk [vmem:[#allocation3 + $0x78] sm:$0xf] %vm1654, %v1652
        %v1670 = vld [vmem:[#allocation3] sm:$0xff]
        %v1671 = vld [vmem:[#allocation3 + $0x10] sm:$0xff]
        %v1672 = vld [vmem:[#allocation3 + $0x20] sm:$0xff]
        %v1673 = vld [vmem:[#allocation3 + $0x30] sm:$0xff]
        %v1674 = vld [vmem:[#allocation3 + $0x40] sm:$0xff]
        %v1675 = vld [vmem:[#allocation3 + $0x50] sm:$0xff]
        %v1676 = vld [vmem:[#allocation3 + $0x60] sm:$0xff]
        %v1677 = vld [vmem:[#allocation3 + $0x70] sm:$0xff]
        %v1678 = vld [vmem:[#allocation3 + $0x1] sm:$0xff]
        %v1679 = vld [vmem:[#allocation3 + $0x11] sm:$0xff]
        %v1680 = vld [vmem:[#allocation3 + $0x21] sm:$0xff]
        %v1681 = vld [vmem:[#allocation3 + $0x31] sm:$0xff]
        %v1682 = vld [vmem:[#allocation3 + $0x41] sm:$0xff]
        %v1683 = vld [vmem:[#allocation3 + $0x51] sm:$0xff]
        %v1684 = vld [vmem:[#allocation3 + $0x61] sm:$0xff]
        %v1685 = vld [vmem:[#allocation3 + $0x71] sm:$0xff]
        %v1686 = vld [vmem:[#allocation3 + $0x2] sm:$0xff]
        %v1687 = vld [vmem:[#allocation3 + $0x12] sm:$0xff]
        %v1688 = vld [vmem:[#allocation3 + $0x22] sm:$0xff]
        %v1689 = vld [vmem:[#allocation3 + $0x32] sm:$0xff]
        %v1690 = vld [vmem:[#allocation3 + $0x42] sm:$0xff]
        %v1691 = vld [vmem:[#allocation3 + $0x52] sm:$0xff]
        %v1692 = vld [vmem:[#allocation3 + $0x62] sm:$0xff]
        %v1693 = vld [vmem:[#allocation3 + $0x72] sm:$0xff]
        %v1694 = vld [vmem:[#allocation3 + $0x3] sm:$0xff]
        %v1695 = vld [vmem:[#allocation3 + $0x13] sm:$0xff]
        %v1696 = vld [vmem:[#allocation3 + $0x23] sm:$0xff]
        %v1697 = vld [vmem:[#allocation3 + $0x33] sm:$0xff]
        %v1698 = vld [vmem:[#allocation3 + $0x43] sm:$0xff]
        %v1699 = vld [vmem:[#allocation3 + $0x53] sm:$0xff]
        %v1700 = vld [vmem:[#allocation3 + $0x63] sm:$0xff]
        %v1701 = vld [vmem:[#allocation3 + $0x73] sm:$0xff]
        %v1702 = vld [vmem:[#allocation3 + $0x4] sm:$0xff]
        %v1703 = vld [vmem:[#allocation3 + $0x14] sm:$0xff]
        %v1704 = vld [vmem:[#allocation3 + $0x24] sm:$0xff]
        %v1705 = vld [vmem:[#allocation3 + $0x34] sm:$0xff]
        %v1706 = vld [vmem:[#allocation3 + $0x44] sm:$0xff]
        %v1707 = vld [vmem:[#allocation3 + $0x54] sm:$0xff]
        %v1708 = vld [vmem:[#allocation3 + $0x64] sm:$0xff]
        %v1709 = vld [vmem:[#allocation3 + $0x74] sm:$0xff]
        %1718 = vrot.lane.b32.xlu0 %v1678, 120
        %v1719 = vpop.permute.xlu0 %1718
        %1720 = vrot.lane.b32.xlu0 %v1679, 120
        %v1721 = vpop.permute.xlu0 %1720
        %1722 = vrot.lane.b32.xlu0 %v1680, 120
        %v1723 = vpop.permute.xlu0 %1722
        %1724 = vrot.lane.b32.xlu0 %v1681, 120
        %v1725 = vpop.permute.xlu0 %1724
        %1726 = vrot.lane.b32.xlu0 %v1682, 120
        %v1727 = vpop.permute.xlu0 %1726
        %1728 = vrot.lane.b32.xlu0 %v1683, 120
        %v1729 = vpop.permute.xlu0 %1728
        %1730 = vrot.lane.b32.xlu0 %v1684, 120
        %v1731 = vpop.permute.xlu0 %1730
        %1732 = vrot.lane.b32.xlu0 %v1685, 120
        %v1733 = vpop.permute.xlu0 %1732
        %1750 = vrot.lane.b32.xlu0 %v1686, 112
        %v1751 = vpop.permute.xlu0 %1750
        %1752 = vrot.lane.b32.xlu0 %v1687, 112
        %v1753 = vpop.permute.xlu0 %1752
        %1754 = vrot.lane.b32.xlu0 %v1688, 112
        %v1755 = vpop.permute.xlu0 %1754
        %1756 = vrot.lane.b32.xlu0 %v1689, 112
        %v1757 = vpop.permute.xlu0 %1756
        %1758 = vrot.lane.b32.xlu0 %v1690, 112
        %v1759 = vpop.permute.xlu0 %1758
        %1760 = vrot.lane.b32.xlu0 %v1691, 112
        %v1761 = vpop.permute.xlu0 %1760
        %1762 = vrot.lane.b32.xlu0 %v1692, 112
        %v1763 = vpop.permute.xlu0 %1762
        %1764 = vrot.lane.b32.xlu0 %v1693, 112
        %v1765 = vpop.permute.xlu0 %1764
        %1782 = vrot.lane.b32.xlu0 %v1694, 104
        %v1783 = vpop.permute.xlu0 %1782
        %1784 = vrot.lane.b32.xlu0 %v1695, 104
        %v1785 = vpop.permute.xlu0 %1784
        %1786 = vrot.lane.b32.xlu0 %v1696, 104
        %v1787 = vpop.permute.xlu0 %1786
        %1788 = vrot.lane.b32.xlu0 %v1697, 104
        %v1789 = vpop.permute.xlu0 %1788
        %1790 = vrot.lane.b32.xlu0 %v1698, 104
        %v1791 = vpop.permute.xlu0 %1790
        %1792 = vrot.lane.b32.xlu0 %v1699, 104
        %v1793 = vpop.permute.xlu0 %1792
        %1794 = vrot.lane.b32.xlu0 %v1700, 104
        %v1795 = vpop.permute.xlu0 %1794
        %1796 = vrot.lane.b32.xlu0 %v1701, 104
        %v1797 = vpop.permute.xlu0 %1796
        %1814 = vrot.lane.b32.xlu0 %v1702, 96
        %v1815 = vpop.permute.xlu0 %1814
        %1816 = vrot.lane.b32.xlu0 %v1703, 96
        %v1817 = vpop.permute.xlu0 %1816
        %1818 = vrot.lane.b32.xlu0 %v1704, 96
        %v1819 = vpop.permute.xlu0 %1818
        %1820 = vrot.lane.b32.xlu0 %v1705, 96
        %v1821 = vpop.permute.xlu0 %1820
        %1822 = vrot.lane.b32.xlu0 %v1706, 96
        %v1823 = vpop.permute.xlu0 %1822
        %1824 = vrot.lane.b32.xlu0 %v1707, 96
        %v1825 = vpop.permute.xlu0 %1824
        %1826 = vrot.lane.b32.xlu0 %v1708, 96
        %v1827 = vpop.permute.xlu0 %1826
        %1828 = vrot.lane.b32.xlu0 %v1709, 96
        %v1829 = vpop.permute.xlu0 %1828
        %v1838 = vsel %vm1533, %v1670, %v1719
        %v1839 = vsel %vm1533, %v1671, %v1721
        %v1840 = vsel %vm1533, %v1672, %v1723
        %v1841 = vsel %vm1533, %v1673, %v1725
        %v1842 = vsel %vm1533, %v1674, %v1727
        %v1843 = vsel %vm1533, %v1675, %v1729
        %v1844 = vsel %vm1533, %v1676, %v1731
        %v1845 = vsel %vm1533, %v1677, %v1733
        %v1846 = vsel %vm970, %v1719, %v1751
        %v1847 = vsel %vm970, %v1721, %v1753
        %v1848 = vsel %vm970, %v1723, %v1755
        %v1849 = vsel %vm970, %v1725, %v1757
        %v1850 = vsel %vm970, %v1727, %v1759
        %v1851 = vsel %vm970, %v1729, %v1761
        %v1852 = vsel %vm970, %v1731, %v1763
        %v1853 = vsel %vm970, %v1733, %v1765
        %vm1854 = vcmask 850944
        %v1855 = vsel %vm1854, %v1751, %v1783
        %v1856 = vsel %vm1854, %v1753, %v1785
        %v1857 = vsel %vm1854, %v1755, %v1787
        %v1858 = vsel %vm1854, %v1757, %v1789
        %v1859 = vsel %vm1854, %v1759, %v1791
        %v1860 = vsel %vm1854, %v1761, %v1793
        %v1861 = vsel %vm1854, %v1763, %v1795
        %v1862 = vsel %vm1854, %v1765, %v1797
        %vm1863 = vcmask 785408
        %v1864 = vsel %vm1863, %v1783, %v1815
        %v1865 = vsel %vm1863, %v1785, %v1817
        %v1866 = vsel %vm1863, %v1787, %v1819
        %v1867 = vsel %vm1863, %v1789, %v1821
        %v1868 = vsel %vm1863, %v1791, %v1823
        %v1869 = vsel %vm1863, %v1793, %v1825
        %v1870 = vsel %vm1863, %v1795, %v1827
        %v1871 = vsel %vm1863, %v1797, %v1829
        %v1872 = vpack.c.bf16 %v1839, %v1838
        %v1873 = vpack.c.bf16 %v1847, %v1846
        %v1874 = vpack.c.bf16 %v1856, %v1855
        %v1875 = vpack.c.bf16 %v1865, %v1864
        %v1876 = vpack.c.bf16 %v1817, %v1815
        %v1877 = vpack.c.bf16 %v1841, %v1840
        %v1878 = vpack.c.bf16 %v1849, %v1848
        %v1879 = vpack.c.bf16 %v1858, %v1857
        %v1880 = vpack.c.bf16 %v1867, %v1866
        %v1881 = vpack.c.bf16 %v1821, %v1819
        %v1882 = vpack.c.bf16 %v1843, %v1842
        %v1883 = vpack.c.bf16 %v1851, %v1850
        %v1884 = vpack.c.bf16 %v1860, %v1859
        %v1885 = vpack.c.bf16 %v1869, %v1868
        %v1886 = vpack.c.bf16 %v1825, %v1823
        %v1887 = vpack.c.bf16 %v1845, %v1844
        %v1888 = vpack.c.bf16 %v1853, %v1852
        %v1889 = vpack.c.bf16 %v1862, %v1861
        %v1890 = vpack.c.bf16 %v1871, %v1870
        %v1891 = vpack.c.bf16 %v1829, %v1827
        %v1892 = vld [vmem:[%s4] sm:$0xf]
        %v1893 = vld [vmem:[%s4 + $0x4] sm:$0xf]
        %v1894 = vld [vmem:[%s4 + $0x8] sm:$0xf]
        %v1895 = vld [vmem:[%s4 + $0xc] sm:$0xf]
        %v1896 = vld [vmem:[%s4 + $0x10] sm:$0xf]
        %v1897 = vld [vmem:[%s4 + $0x14] sm:$0xf]
        %v1898 = vld [vmem:[%s4 + $0x18] sm:$0xf]
        %v1899 = vld [vmem:[%s4 + $0x1c] sm:$0xf]
        %v1900 = vld [vmem:[%s4 + $0x20] sm:$0xf]
        %v1901 = vld [vmem:[%s4 + $0x24] sm:$0xf]
        %v1902 = vld [vmem:[%s4 + $0x28] sm:$0xf]
        %v1903 = vld [vmem:[%s4 + $0x2c] sm:$0xf]
        %v1904 = vld [vmem:[%s4 + $0x30] sm:$0xf]
        %v1905 = vld [vmem:[%s4 + $0x34] sm:$0xf]
        %v1906 = vld [vmem:[%s4 + $0x38] sm:$0xf]
        %v1907 = vld [vmem:[%s4 + $0x3c] sm:$0xf]
        %v1908 = vld [vmem:[%s4 + $0x40] sm:$0xf]
        %v1909 = vld [vmem:[%s4 + $0x44] sm:$0xf]
        %v1910 = vld [vmem:[%s4 + $0x48] sm:$0xf]
        %v1911 = vld [vmem:[%s4 + $0x4c] sm:$0xf]
        %v1912 = vld [vmem:[%s4 + $0x50] sm:$0xf]
        %v1913 = vld [vmem:[%s4 + $0x54] sm:$0xf]
        %v1914 = vld [vmem:[%s4 + $0x58] sm:$0xf]
        %v1915 = vld [vmem:[%s4 + $0x5c] sm:$0xf]
        %v1916 = vld [vmem:[%s4 + $0x60] sm:$0xf]
        %v1917 = vld [vmem:[%s4 + $0x64] sm:$0xf]
        %v1918 = vld [vmem:[%s4 + $0x68] sm:$0xf]
        %v1919 = vld [vmem:[%s4 + $0x6c] sm:$0xf]
        %v1920 = vld [vmem:[%s4 + $0x70] sm:$0xf]
        %v1921 = vld [vmem:[%s4 + $0x74] sm:$0xf]
        %v1922 = vld [vmem:[%s4 + $0x78] sm:$0xf]
        %v1923 = vld [vmem:[%s4 + $0x7c] sm:$0xf]
        %v1924 = vld [vmem:[%s4 + $0x80] sm:$0xf]
        %v1925 = vld [vmem:[%s4 + $0x84] sm:$0xf]
        %v1926 = vld [vmem:[%s4 + $0x88] sm:$0xf]
        %v1927 = vld [vmem:[%s4 + $0x8c] sm:$0xf]
        %v1928 = vld [vmem:[%s4 + $0x90] sm:$0xf]
        %v1929 = vld [vmem:[%s4 + $0x94] sm:$0xf]
        %v1930 = vld [vmem:[%s4 + $0x98] sm:$0xf]
        %v1931 = vld [vmem:[%s4 + $0x9c] sm:$0xf]
        %v1932 = vld [vmem:[%s4 + $0xa0] sm:$0xf]
        %v1933 = vld [vmem:[%s4 + $0xa4] sm:$0xf]
        %v1934 = vld [vmem:[%s4 + $0xa8] sm:$0xf]
        %v1935 = vld [vmem:[%s4 + $0xac] sm:$0xf]
        %v1936 = vld [vmem:[%s4 + $0xb0] sm:$0xf]
        %v1937 = vld [vmem:[%s4 + $0xb4] sm:$0xf]
        %v1938 = vld [vmem:[%s4 + $0xb8] sm:$0xf]
        %v1939 = vld [vmem:[%s4 + $0xbc] sm:$0xf]
        %v1940 = vld [vmem:[%s4 + $0xc0] sm:$0xf]
        %v1941 = vld [vmem:[%s4 + $0xc4] sm:$0xf]
        %v1942 = vld [vmem:[%s4 + $0xc8] sm:$0xf]
        %v1943 = vld [vmem:[%s4 + $0xcc] sm:$0xf]
        %v1944 = vld [vmem:[%s4 + $0xd0] sm:$0xf]
        %v1945 = vld [vmem:[%s4 + $0xd4] sm:$0xf]
        %v1946 = vld [vmem:[%s4 + $0xd8] sm:$0xf]
        %v1947 = vld [vmem:[%s4 + $0xdc] sm:$0xf]
        %v1948 = vld [vmem:[%s4 + $0xe0] sm:$0xf]
        %v1949 = vld [vmem:[%s4 + $0xe4] sm:$0xf]
        %v1950 = vld [vmem:[%s4 + $0xe8] sm:$0xf]
        %v1951 = vld [vmem:[%s4 + $0xec] sm:$0xf]
        %v1952 = vld [vmem:[%s4 + $0xf0] sm:$0xf]
        %v1953 = vld [vmem:[%s4 + $0xf4] sm:$0xf]
        %v1954 = vld [vmem:[%s4 + $0xf8] sm:$0xf]
        %v1955 = vld [vmem:[%s4 + $0xfc] sm:$0xf]
        %v1956 = vld [vmem:[%s4 + $0x100] sm:$0xf]
        %v1957 = vld [vmem:[%s4 + $0x104] sm:$0xf]
        %v1958 = vld [vmem:[%s4 + $0x108] sm:$0xf]
        %v1959 = vld [vmem:[%s4 + $0x10c] sm:$0xf]
        %v1960 = vld [vmem:[%s4 + $0x110] sm:$0xf]
        %v1961 = vld [vmem:[%s4 + $0x114] sm:$0xf]
        %v1962 = vld [vmem:[%s4 + $0x118] sm:$0xf]
        %v1963 = vld [vmem:[%s4 + $0x11c] sm:$0xf]
        %v1964 = vld [vmem:[%s4 + $0x120] sm:$0xf]
        %v1965 = vld [vmem:[%s4 + $0x124] sm:$0xf]
        %v1966 = vld [vmem:[%s4 + $0x128] sm:$0xf]
        %v2042 = vunpack.c.l.b16 %v1892
        %v2043 = vunpack.c.l.b16 %v1893
        %v2044 = vunpack.c.l.b16 %v1894
        %v2045 = vunpack.c.l.b16 %v1895
        %v2046 = vunpack.c.l.b16 %v1896
        %v2047 = vunpack.c.l.b16 %v1897
        %v2048 = vunpack.c.l.b16 %v1898
        %v2049 = vunpack.c.l.b16 %v1899
        %v2050 = vunpack.c.l.b16 %v1900
        %v2051 = vunpack.c.l.b16 %v1901
        %v2052 = vunpack.c.l.b16 %v1902
        %v2053 = vunpack.c.l.b16 %v1903
        %v2054 = vunpack.c.l.b16 %v1904
        %v2055 = vunpack.c.l.b16 %v1905
        %v2056 = vunpack.c.l.b16 %v1906
        %v2057 = vunpack.c.l.b16 %v1907
        %v2058 = vunpack.c.l.b16 %v1908
        %v2059 = vunpack.c.l.b16 %v1909
        %v2060 = vunpack.c.l.b16 %v1910
        %v2061 = vunpack.c.l.b16 %v1911
        %v2062 = vunpack.c.l.b16 %v1912
        %v2063 = vunpack.c.l.b16 %v1913
        %v2064 = vunpack.c.l.b16 %v1914
        %v2065 = vunpack.c.l.b16 %v1915
        %v2066 = vunpack.c.l.b16 %v1916
        %v2067 = vunpack.c.l.b16 %v1917
        %v2068 = vunpack.c.l.b16 %v1918
        %v2069 = vunpack.c.l.b16 %v1919
        %v2070 = vunpack.c.l.b16 %v1920
        %v2071 = vunpack.c.l.b16 %v1921
        %v2072 = vunpack.c.l.b16 %v1922
        %v2073 = vunpack.c.l.b16 %v1923
        %v2074 = vunpack.c.l.b16 %v1924
        %v2075 = vunpack.c.l.b16 %v1925
        %v2076 = vunpack.c.l.b16 %v1926
        %v2077 = vunpack.c.l.b16 %v1927
        %v2078 = vunpack.c.l.b16 %v1928
        %v2079 = vunpack.c.l.b16 %v1929
        %v2080 = vunpack.c.l.b16 %v1930
        %v2081 = vunpack.c.l.b16 %v1931
        %v2082 = vunpack.c.l.b16 %v1932
        %v2083 = vunpack.c.l.b16 %v1933
        %v2084 = vunpack.c.l.b16 %v1934
        %v2085 = vunpack.c.l.b16 %v1935
        %v2086 = vunpack.c.l.b16 %v1936
        %v2087 = vunpack.c.l.b16 %v1937
        %v2088 = vunpack.c.l.b16 %v1938
        %v2089 = vunpack.c.l.b16 %v1939
        %v2090 = vunpack.c.l.b16 %v1940
        %v2091 = vunpack.c.l.b16 %v1941
        %v2092 = vunpack.c.l.b16 %v1942
        %v2093 = vunpack.c.l.b16 %v1943
        %v2094 = vunpack.c.l.b16 %v1944
        %v2095 = vunpack.c.l.b16 %v1945
        %v2096 = vunpack.c.l.b16 %v1946
        %v2097 = vunpack.c.l.b16 %v1947
        %v2098 = vunpack.c.l.b16 %v1948
        %v2099 = vunpack.c.l.b16 %v1949
        %v2100 = vunpack.c.l.b16 %v1950
        %v2101 = vunpack.c.l.b16 %v1951
        %v2102 = vunpack.c.l.b16 %v1952
        %v2103 = vunpack.c.l.b16 %v1953
        %v2104 = vunpack.c.l.b16 %v1954
        %v2105 = vunpack.c.l.b16 %v1955
        %v2106 = vunpack.c.l.b16 %v1956
        %v2107 = vunpack.c.l.b16 %v1957
        %v2108 = vunpack.c.l.b16 %v1958
        %v2109 = vunpack.c.l.b16 %v1959
        %v2110 = vunpack.c.l.b16 %v1960
        %v2111 = vunpack.c.l.b16 %v1961
        %v2112 = vunpack.c.l.b16 %v1962
        %v2113 = vunpack.c.l.b16 %v1963
        %v2114 = vunpack.c.l.b16 %v1964
        %v2115 = vunpack.c.l.b16 %v1965
        %v2116 = vunpack.c.l.b16 %v1966
        %v2117 = vpack.c.b16 %v2043, %v2042
        %v2118 = vpack.c.b16 %v2045, %v2044
        %v2119 = vpack.c.b16 %v2047, %v2046
        %v2120 = vpack.c.b16 %v2049, %v2048
        %v2121 = vpack.c.b16 %v2051, %v2050
        %v2122 = vpack.c.b16 %v2053, %v2052
        %v2123 = vpack.c.b16 %v2055, %v2054
        %v2124 = vpack.c.b16 %v2057, %v2056
        %v2125 = vpack.c.b16 %v2059, %v2058
        %v2126 = vpack.c.b16 %v2061, %v2060
        %v2127 = vpack.c.b16 %v2063, %v2062
        %v2128 = vpack.c.b16 %v2065, %v2064
        %v2129 = vpack.c.b16 %v2067, %v2066
        %v2130 = vpack.c.b16 %v2069, %v2068
        %v2131 = vpack.c.b16 %v2071, %v2070
        %v2132 = vpack.c.b16 %v2073, %v2072
        %v2133 = vpack.c.b16 %v2075, %v2074
        %v2134 = vpack.c.b16 %v2077, %v2076
        %v2135 = vpack.c.b16 %v2079, %v2078
        %v2136 = vpack.c.b16 %v2081, %v2080
        %v2137 = vpack.c.b16 %v2083, %v2082
        %v2138 = vpack.c.b16 %v2085, %v2084
        %v2139 = vpack.c.b16 %v2087, %v2086
        %v2140 = vpack.c.b16 %v2089, %v2088
        %v2141 = vpack.c.b16 %v2091, %v2090
        %v2142 = vpack.c.b16 %v2093, %v2092
        %v2143 = vpack.c.b16 %v2095, %v2094
        %v2144 = vpack.c.b16 %v2097, %v2096
        %v2145 = vpack.c.b16 %v2099, %v2098
        %v2146 = vpack.c.b16 %v2101, %v2100
        %v2147 = vpack.c.b16 %v2103, %v2102
        %v2148 = vpack.c.b16 %v2105, %v2104
        %v2149 = vpack.c.b16 %v2107, %v2106
        %v2150 = vpack.c.b16 %v2109, %v2108
        %v2151 = vpack.c.b16 %v2111, %v2110
        %v2152 = vpack.c.b16 %v2113, %v2112
        %v2153 = vpack.c.b16 %v2115, %v2114
        %v2154 = vpack.c.b16 %v2116, %v2116
        %vm2192 = vcmask 719872
        %v2194 = vsel %vm2192, %v1876, 0
        %v2197 = vsel %vm2192, %v1881, 0
        %v2200 = vsel %vm2192, %v1886, 0
        %v2203 = vsel %vm2192, %v1891, 0
        %vm2205 = vcmask 1043456
        %v2207 = vsel %vm2205, %v2154, 0
        %2209 = vmatpush.bf16.msra.mxu0 %v2124
        %2210 = vmatpush.bf16.msra.mxu0 %v2123
        %2211 = vmatpush.bf16.msra.mxu0 %v2122
        %2212 = vmatpush.bf16.msra.mxu0 %v2121
        %2213 = vmatpush.bf16.msra.mxu0 %v2120
        %2214 = vmatpush.bf16.msra.mxu0 %v2119
        %2215 = vmatpush.bf16.msra.mxu0 %v2118
        %2216 = vmatpush.bf16.msra.mxu0 %v2117
        %2217 = vmatmul.bf16.gmra.mxu0 %v1872
        %v2218 = vpop.f32.mrf.mxu0
        %v2219 = vadd.f32 0.0, %v2218
        %v2220 = vpop.f32.mrf.mxu0
        %v2221 = vadd.f32 0.0, %v2220
        %2222 = vmatmul.bf16.gmra.mxu0 %v1877
        %v2223 = vpop.f32.mrf.mxu0
        %v2224 = vadd.f32 0.0, %v2223
        %v2225 = vpop.f32.mrf.mxu0
        %v2226 = vadd.f32 0.0, %v2225
        %2227 = vmatmul.bf16.gmra.mxu0 %v1882
        %v2228 = vpop.f32.mrf.mxu0
        %v2229 = vadd.f32 0.0, %v2228
        %v2230 = vpop.f32.mrf.mxu0
        %v2231 = vadd.f32 0.0, %v2230
        %2232 = vmatmul.bf16.gmra.mxu0 %v1887
        %v2233 = vpop.f32.mrf.mxu0
        %v2234 = vadd.f32 0.0, %v2233
        %v2235 = vpop.f32.mrf.mxu0
        %v2236 = vadd.f32 0.0, %v2235
        %2237 = vdwg.mxu0
        %2238 = vmatpush.bf16.msra.mxu0 %v2132
        %2239 = vmatpush.bf16.msra.mxu0 %v2131
        %2240 = vmatpush.bf16.msra.mxu0 %v2130
        %2241 = vmatpush.bf16.msra.mxu0 %v2129
        %2242 = vmatpush.bf16.msra.mxu0 %v2128
        %2243 = vmatpush.bf16.msra.mxu0 %v2127
        %2244 = vmatpush.bf16.msra.mxu0 %v2126
        %2245 = vmatpush.bf16.msra.mxu0 %v2125
        %2246 = vmatmul.bf16.gmra.mxu0 %v1873
        %v2247 = vpop.f32.mrf.mxu0
        %v2248 = vadd.f32 %v2219, %v2247
        %v2249 = vpop.f32.mrf.mxu0
        %v2250 = vadd.f32 %v2221, %v2249
        %2251 = vmatmul.bf16.gmra.mxu0 %v1878
        %v2252 = vpop.f32.mrf.mxu0
        %v2253 = vadd.f32 %v2224, %v2252
        %v2254 = vpop.f32.mrf.mxu0
        %v2255 = vadd.f32 %v2226, %v2254
        %2256 = vmatmul.bf16.gmra.mxu0 %v1883
        %v2257 = vpop.f32.mrf.mxu0
        %v2258 = vadd.f32 %v2229, %v2257
        %v2259 = vpop.f32.mrf.mxu0
        %v2260 = vadd.f32 %v2231, %v2259
        %2261 = vmatmul.bf16.gmra.mxu0 %v1888
        %v2262 = vpop.f32.mrf.mxu0
        %v2263 = vadd.f32 %v2234, %v2262
        %v2264 = vpop.f32.mrf.mxu0
        %v2265 = vadd.f32 %v2236, %v2264
        %2266 = vdwg.mxu0
        %2267 = vmatpush.bf16.msra.mxu0 %v2140
        %2268 = vmatpush.bf16.msra.mxu0 %v2139
        %2269 = vmatpush.bf16.msra.mxu0 %v2138
        %2270 = vmatpush.bf16.msra.mxu0 %v2137
        %2271 = vmatpush.bf16.msra.mxu0 %v2136
        %2272 = vmatpush.bf16.msra.mxu0 %v2135
        %2273 = vmatpush.bf16.msra.mxu0 %v2134
        %2274 = vmatpush.bf16.msra.mxu0 %v2133
        %2275 = vmatmul.bf16.gmra.mxu0 %v1874
        %v2276 = vpop.f32.mrf.mxu0
        %v2277 = vadd.f32 %v2248, %v2276
        %v2278 = vpop.f32.mrf.mxu0
        %v2279 = vadd.f32 %v2250, %v2278
        %2280 = vmatmul.bf16.gmra.mxu0 %v1879
        %v2281 = vpop.f32.mrf.mxu0
        %v2282 = vadd.f32 %v2253, %v2281
        %v2283 = vpop.f32.mrf.mxu0
        %v2284 = vadd.f32 %v2255, %v2283
        %2285 = vmatmul.bf16.gmra.mxu0 %v1884
        %v2286 = vpop.f32.mrf.mxu0
        %v2287 = vadd.f32 %v2258, %v2286
        %v2288 = vpop.f32.mrf.mxu0
        %v2289 = vadd.f32 %v2260, %v2288
        %2290 = vmatmul.bf16.gmra.mxu0 %v1889
        %v2291 = vpop.f32.mrf.mxu0
        %v2292 = vadd.f32 %v2263, %v2291
        %v2293 = vpop.f32.mrf.mxu0
        %v2294 = vadd.f32 %v2265, %v2293
        %2295 = vdwg.mxu0
        %2296 = vmatpush.bf16.msra.mxu0 %v2148
        %2297 = vmatpush.bf16.msra.mxu0 %v2147
        %2298 = vmatpush.bf16.msra.mxu0 %v2146
        %2299 = vmatpush.bf16.msra.mxu0 %v2145
        %2300 = vmatpush.bf16.msra.mxu0 %v2144
        %2301 = vmatpush.bf16.msra.mxu0 %v2143
        %2302 = vmatpush.bf16.msra.mxu0 %v2142
        %2303 = vmatpush.bf16.msra.mxu0 %v2141
        %2304 = vmatmul.bf16.gmra.mxu0 %v1875
        %v2305 = vpop.f32.mrf.mxu0
        %v2306 = vadd.f32 %v2277, %v2305
        %v2307 = vpop.f32.mrf.mxu0
        %v2308 = vadd.f32 %v2279, %v2307
        %2309 = vmatmul.bf16.gmra.mxu0 %v1880
        %v2310 = vpop.f32.mrf.mxu0
        %v2311 = vadd.f32 %v2282, %v2310
        %v2312 = vpop.f32.mrf.mxu0
        %v2313 = vadd.f32 %v2284, %v2312
        %2314 = vmatmul.bf16.gmra.mxu0 %v1885
        %v2315 = vpop.f32.mrf.mxu0
        %v2316 = vadd.f32 %v2287, %v2315
        %v2317 = vpop.f32.mrf.mxu0
        %v2318 = vadd.f32 %v2289, %v2317
        %2319 = vmatmul.bf16.gmra.mxu0 %v1890
        %v2320 = vpop.f32.mrf.mxu0
        %v2321 = vadd.f32 %v2292, %v2320
        %v2322 = vpop.f32.mrf.mxu0
        %v2323 = vadd.f32 %v2294, %v2322
        %2324 = vdwg.mxu0
        %2325 = vmatpush.bf16.msra.mxu0 0
        %2326 = vmatpush.bf16.msra.mxu0 0
        %2327 = vmatpush.bf16.msra.mxu0 %v2207
        %2328 = vmatpush.bf16.msra.mxu0 %v2153
        %2329 = vmatpush.bf16.msra.mxu0 %v2152
        %2330 = vmatpush.bf16.msra.mxu0 %v2151
        %2331 = vmatpush.bf16.msra.mxu0 %v2150
        %2332 = vmatpush.bf16.msra.mxu0 %v2149
        %2333 = vmatmul.bf16.gmra.mxu0 %v2194
        %v2334 = vpop.f32.mrf.mxu0
        %v2335 = vadd.f32 %v2306, %v2334
        %v2336 = vpop.f32.mrf.mxu0
        %v2337 = vadd.f32 %v2308, %v2336
        %2338 = vmatmul.bf16.gmra.mxu0 %v2197
        %v2339 = vpop.f32.mrf.mxu0
        %v2340 = vadd.f32 %v2311, %v2339
        %v2341 = vpop.f32.mrf.mxu0
        %v2342 = vadd.f32 %v2313, %v2341
        %2343 = vmatmul.bf16.gmra.mxu0 %v2200
        %v2344 = vpop.f32.mrf.mxu0
        %v2345 = vadd.f32 %v2316, %v2344
        %v2346 = vpop.f32.mrf.mxu0
        %v2347 = vadd.f32 %v2318, %v2346
        %2348 = vmatmul.bf16.gmra.mxu0 %v2203
        %v2349 = vpop.f32.mrf.mxu0
        %v2350 = vadd.f32 %v2321, %v2349
        %v2351 = vpop.f32.mrf.mxu0
        %v2352 = vadd.f32 %v2323, %v2351
        %2353 = vdwg.mxu0
        %v2354 = vld [vmem:[%s5] sm:$0xf]
        %v2355 = vld [vmem:[%s5 + $0x4] sm:$0xf]
        %v2356 = vld [vmem:[%s5 + $0x8] sm:$0xf]
        %v2357 = vld [vmem:[%s5 + $0xc] sm:$0xf]
        %v2358 = vld [vmem:[%s5 + $0x10] sm:$0xf]
        %v2359 = vld [vmem:[%s5 + $0x14] sm:$0xf]
        %v2360 = vld [vmem:[%s5 + $0x18] sm:$0xf]
        %v2361 = vld [vmem:[%s5 + $0x1c] sm:$0xf]
        %v2362 = vld [vmem:[%s5 + $0x20] sm:$0xf]
        %v2363 = vld [vmem:[%s5 + $0x24] sm:$0xf]
        %v2364 = vld [vmem:[%s5 + $0x28] sm:$0xf]
        %v2365 = vld [vmem:[%s5 + $0x2c] sm:$0xf]
        %v2366 = vld [vmem:[%s5 + $0x30] sm:$0xf]
        %v2367 = vld [vmem:[%s5 + $0x34] sm:$0xf]
        %v2368 = vld [vmem:[%s5 + $0x38] sm:$0xf]
        %v2369 = vld [vmem:[%s5 + $0x3c] sm:$0xf]
        %v2370 = vld [vmem:[%s5 + $0x40] sm:$0xf]
        %v2371 = vld [vmem:[%s5 + $0x44] sm:$0xf]
        %v2372 = vld [vmem:[%s5 + $0x48] sm:$0xf]
        %v2373 = vld [vmem:[%s5 + $0x4c] sm:$0xf]
        %v2374 = vld [vmem:[%s5 + $0x50] sm:$0xf]
        %v2375 = vld [vmem:[%s5 + $0x54] sm:$0xf]
        %v2376 = vld [vmem:[%s5 + $0x58] sm:$0xf]
        %v2377 = vld [vmem:[%s5 + $0x5c] sm:$0xf]
        %v2378 = vld [vmem:[%s5 + $0x60] sm:$0xf]
        %v2379 = vld [vmem:[%s5 + $0x64] sm:$0xf]
        %v2380 = vld [vmem:[%s5 + $0x68] sm:$0xf]
        %v2381 = vld [vmem:[%s5 + $0x6c] sm:$0xf]
        %v2382 = vld [vmem:[%s5 + $0x70] sm:$0xf]
        %v2383 = vld [vmem:[%s5 + $0x74] sm:$0xf]
        %v2384 = vld [vmem:[%s5 + $0x78] sm:$0xf]
        %v2385 = vld [vmem:[%s5 + $0x7c] sm:$0xf]
        %v2386 = vld [vmem:[%s5 + $0x80] sm:$0xf]
        %v2387 = vld [vmem:[%s5 + $0x84] sm:$0xf]
        %v2388 = vld [vmem:[%s5 + $0x88] sm:$0xf]
        %v2389 = vld [vmem:[%s5 + $0x8c] sm:$0xf]
        %v2390 = vld [vmem:[%s5 + $0x90] sm:$0xf]
        %v2391 = vld [vmem:[%s5 + $0x94] sm:$0xf]
        %v2392 = vld [vmem:[%s5 + $0x98] sm:$0xf]
        %v2393 = vld [vmem:[%s5 + $0x9c] sm:$0xf]
        %v2394 = vld [vmem:[%s5 + $0xa0] sm:$0xf]
        %v2395 = vld [vmem:[%s5 + $0xa4] sm:$0xf]
        %v2396 = vld [vmem:[%s5 + $0xa8] sm:$0xf]
        %v2397 = vld [vmem:[%s5 + $0xac] sm:$0xf]
        %v2398 = vld [vmem:[%s5 + $0xb0] sm:$0xf]
        %v2399 = vld [vmem:[%s5 + $0xb4] sm:$0xf]
        %v2400 = vld [vmem:[%s5 + $0xb8] sm:$0xf]
        %v2401 = vld [vmem:[%s5 + $0xbc] sm:$0xf]
        %v2402 = vld [vmem:[%s5 + $0xc0] sm:$0xf]
        %v2403 = vld [vmem:[%s5 + $0xc4] sm:$0xf]
        %v2404 = vld [vmem:[%s5 + $0xc8] sm:$0xf]
        %v2405 = vld [vmem:[%s5 + $0xcc] sm:$0xf]
        %v2406 = vld [vmem:[%s5 + $0xd0] sm:$0xf]
        %v2407 = vld [vmem:[%s5 + $0xd4] sm:$0xf]
        %v2408 = vld [vmem:[%s5 + $0xd8] sm:$0xf]
        %v2409 = vld [vmem:[%s5 + $0xdc] sm:$0xf]
        %v2410 = vld [vmem:[%s5 + $0xe0] sm:$0xf]
        %v2411 = vld [vmem:[%s5 + $0xe4] sm:$0xf]
        %v2412 = vld [vmem:[%s5 + $0xe8] sm:$0xf]
        %v2413 = vld [vmem:[%s5 + $0xec] sm:$0xf]
        %v2414 = vld [vmem:[%s5 + $0xf0] sm:$0xf]
        %v2415 = vld [vmem:[%s5 + $0xf4] sm:$0xf]
        %v2416 = vld [vmem:[%s5 + $0xf8] sm:$0xf]
        %v2417 = vld [vmem:[%s5 + $0xfc] sm:$0xf]
        %v2418 = vld [vmem:[%s5 + $0x100] sm:$0xf]
        %v2419 = vld [vmem:[%s5 + $0x104] sm:$0xf]
        %v2420 = vld [vmem:[%s5 + $0x108] sm:$0xf]
        %v2421 = vld [vmem:[%s5 + $0x10c] sm:$0xf]
        %v2422 = vld [vmem:[%s5 + $0x110] sm:$0xf]
        %v2423 = vld [vmem:[%s5 + $0x114] sm:$0xf]
        %v2424 = vld [vmem:[%s5 + $0x118] sm:$0xf]
        %v2425 = vld [vmem:[%s5 + $0x11c] sm:$0xf]
        %v2426 = vld [vmem:[%s5 + $0x120] sm:$0xf]
        %v2427 = vld [vmem:[%s5 + $0x124] sm:$0xf]
        %v2428 = vld [vmem:[%s5 + $0x128] sm:$0xf]
        %v2504 = vunpack.c.l.b16 %v2354
        %v2505 = vunpack.c.l.b16 %v2355
        %v2506 = vunpack.c.l.b16 %v2356
        %v2507 = vunpack.c.l.b16 %v2357
        %v2508 = vunpack.c.l.b16 %v2358
        %v2509 = vunpack.c.l.b16 %v2359
        %v2510 = vunpack.c.l.b16 %v2360
        %v2511 = vunpack.c.l.b16 %v2361
        %v2512 = vunpack.c.l.b16 %v2362
        %v2513 = vunpack.c.l.b16 %v2363
        %v2514 = vunpack.c.l.b16 %v2364
        %v2515 = vunpack.c.l.b16 %v2365
        %v2516 = vunpack.c.l.b16 %v2366
        %v2517 = vunpack.c.l.b16 %v2367
        %v2518 = vunpack.c.l.b16 %v2368
        %v2519 = vunpack.c.l.b16 %v2369
        %v2520 = vunpack.c.l.b16 %v2370
        %v2521 = vunpack.c.l.b16 %v2371
        %v2522 = vunpack.c.l.b16 %v2372
        %v2523 = vunpack.c.l.b16 %v2373
        %v2524 = vunpack.c.l.b16 %v2374
        %v2525 = vunpack.c.l.b16 %v2375
        %v2526 = vunpack.c.l.b16 %v2376
        %v2527 = vunpack.c.l.b16 %v2377
        %v2528 = vunpack.c.l.b16 %v2378
        %v2529 = vunpack.c.l.b16 %v2379
        %v2530 = vunpack.c.l.b16 %v2380
        %v2531 = vunpack.c.l.b16 %v2381
        %v2532 = vunpack.c.l.b16 %v2382
        %v2533 = vunpack.c.l.b16 %v2383
        %v2534 = vunpack.c.l.b16 %v2384
        %v2535 = vunpack.c.l.b16 %v2385
        %v2536 = vunpack.c.l.b16 %v2386
        %v2537 = vunpack.c.l.b16 %v2387
        %v2538 = vunpack.c.l.b16 %v2388
        %v2539 = vunpack.c.l.b16 %v2389
        %v2540 = vunpack.c.l.b16 %v2390
        %v2541 = vunpack.c.l.b16 %v2391
        %v2542 = vunpack.c.l.b16 %v2392
        %v2543 = vunpack.c.l.b16 %v2393
        %v2544 = vunpack.c.l.b16 %v2394
        %v2545 = vunpack.c.l.b16 %v2395
        %v2546 = vunpack.c.l.b16 %v2396
        %v2547 = vunpack.c.l.b16 %v2397
        %v2548 = vunpack.c.l.b16 %v2398
        %v2549 = vunpack.c.l.b16 %v2399
        %v2550 = vunpack.c.l.b16 %v2400
        %v2551 = vunpack.c.l.b16 %v2401
        %v2552 = vunpack.c.l.b16 %v2402
        %v2553 = vunpack.c.l.b16 %v2403
        %v2554 = vunpack.c.l.b16 %v2404
        %v2555 = vunpack.c.l.b16 %v2405
        %v2556 = vunpack.c.l.b16 %v2406
        %v2557 = vunpack.c.l.b16 %v2407
        %v2558 = vunpack.c.l.b16 %v2408
        %v2559 = vunpack.c.l.b16 %v2409
        %v2560 = vunpack.c.l.b16 %v2410
        %v2561 = vunpack.c.l.b16 %v2411
        %v2562 = vunpack.c.l.b16 %v2412
        %v2563 = vunpack.c.l.b16 %v2413
        %v2564 = vunpack.c.l.b16 %v2414
        %v2565 = vunpack.c.l.b16 %v2415
        %v2566 = vunpack.c.l.b16 %v2416
        %v2567 = vunpack.c.l.b16 %v2417
        %v2568 = vunpack.c.l.b16 %v2418
        %v2569 = vunpack.c.l.b16 %v2419
        %v2570 = vunpack.c.l.b16 %v2420
        %v2571 = vunpack.c.l.b16 %v2421
        %v2572 = vunpack.c.l.b16 %v2422
        %v2573 = vunpack.c.l.b16 %v2423
        %v2574 = vunpack.c.l.b16 %v2424
        %v2575 = vunpack.c.l.b16 %v2425
        %v2576 = vunpack.c.l.b16 %v2426
        %v2577 = vunpack.c.l.b16 %v2427
        %v2578 = vunpack.c.l.b16 %v2428
        %v2579 = vpack.c.b16 %v2505, %v2504
        %v2580 = vpack.c.b16 %v2507, %v2506
        %v2581 = vpack.c.b16 %v2509, %v2508
        %v2582 = vpack.c.b16 %v2511, %v2510
        %v2583 = vpack.c.b16 %v2513, %v2512
        %v2584 = vpack.c.b16 %v2515, %v2514
        %v2585 = vpack.c.b16 %v2517, %v2516
        %v2586 = vpack.c.b16 %v2519, %v2518
        %v2587 = vpack.c.b16 %v2521, %v2520
        %v2588 = vpack.c.b16 %v2523, %v2522
        %v2589 = vpack.c.b16 %v2525, %v2524
        %v2590 = vpack.c.b16 %v2527, %v2526
        %v2591 = vpack.c.b16 %v2529, %v2528
        %v2592 = vpack.c.b16 %v2531, %v2530
        %v2593 = vpack.c.b16 %v2533, %v2532
        %v2594 = vpack.c.b16 %v2535, %v2534
        %v2595 = vpack.c.b16 %v2537, %v2536
        %v2596 = vpack.c.b16 %v2539, %v2538
        %v2597 = vpack.c.b16 %v2541, %v2540
        %v2598 = vpack.c.b16 %v2543, %v2542
        %v2599 = vpack.c.b16 %v2545, %v2544
        %v2600 = vpack.c.b16 %v2547, %v2546
        %v2601 = vpack.c.b16 %v2549, %v2548
        %v2602 = vpack.c.b16 %v2551, %v2550
        %v2603 = vpack.c.b16 %v2553, %v2552
        %v2604 = vpack.c.b16 %v2555, %v2554
        %v2605 = vpack.c.b16 %v2557, %v2556
        %v2606 = vpack.c.b16 %v2559, %v2558
        %v2607 = vpack.c.b16 %v2561, %v2560
        %v2608 = vpack.c.b16 %v2563, %v2562
        %v2609 = vpack.c.b16 %v2565, %v2564
        %v2610 = vpack.c.b16 %v2567, %v2566
        %v2611 = vpack.c.b16 %v2569, %v2568
        %v2612 = vpack.c.b16 %v2571, %v2570
        %v2613 = vpack.c.b16 %v2573, %v2572
        %v2614 = vpack.c.b16 %v2575, %v2574
        %v2615 = vpack.c.b16 %v2577, %v2576
        %v2616 = vpack.c.b16 %v2578, %v2578
        %v2655 = vsel %vm2205, %v2616, 0
        %2657 = vmatpush.bf16.msra.mxu0 %v2586
        %2658 = vmatpush.bf16.msra.mxu0 %v2585
        %2659 = vmatpush.bf16.msra.mxu0 %v2584
        %2660 = vmatpush.bf16.msra.mxu0 %v2583
        %2661 = vmatpush.bf16.msra.mxu0 %v2582
        %2662 = vmatpush.bf16.msra.mxu0 %v2581
        %2663 = vmatpush.bf16.msra.mxu0 %v2580
        %2664 = vmatpush.bf16.msra.mxu0 %v2579
        %2665 = vmatmul.bf16.gmra.mxu0 %v1872
        %v2666 = vpop.f32.mrf.mxu0
        %v2667 = vadd.f32 0.0, %v2666
        %v2668 = vpop.f32.mrf.mxu0
        %v2669 = vadd.f32 0.0, %v2668
        %2670 = vmatmul.bf16.gmra.mxu0 %v1877
        %v2671 = vpop.f32.mrf.mxu0
        %v2672 = vadd.f32 0.0, %v2671
        %v2673 = vpop.f32.mrf.mxu0
        %v2674 = vadd.f32 0.0, %v2673
        %2675 = vmatmul.bf16.gmra.mxu0 %v1882
        %v2676 = vpop.f32.mrf.mxu0
        %v2677 = vadd.f32 0.0, %v2676
        %v2678 = vpop.f32.mrf.mxu0
        %v2679 = vadd.f32 0.0, %v2678
        %2680 = vmatmul.bf16.gmra.mxu0 %v1887
        %v2681 = vpop.f32.mrf.mxu0
        %v2682 = vadd.f32 0.0, %v2681
        %v2683 = vpop.f32.mrf.mxu0
        %v2684 = vadd.f32 0.0, %v2683
        %2685 = vdwg.mxu0
        %2686 = vmatpush.bf16.msra.mxu0 %v2594
        %2687 = vmatpush.bf16.msra.mxu0 %v2593
        %2688 = vmatpush.bf16.msra.mxu0 %v2592
        %2689 = vmatpush.bf16.msra.mxu0 %v2591
        %2690 = vmatpush.bf16.msra.mxu0 %v2590
        %2691 = vmatpush.bf16.msra.mxu0 %v2589
        %2692 = vmatpush.bf16.msra.mxu0 %v2588
        %2693 = vmatpush.bf16.msra.mxu0 %v2587
        %2694 = vmatmul.bf16.gmra.mxu0 %v1873
        %v2695 = vpop.f32.mrf.mxu0
        %v2696 = vadd.f32 %v2667, %v2695
        %v2697 = vpop.f32.mrf.mxu0
        %v2698 = vadd.f32 %v2669, %v2697
        %2699 = vmatmul.bf16.gmra.mxu0 %v1878
        %v2700 = vpop.f32.mrf.mxu0
        %v2701 = vadd.f32 %v2672, %v2700
        %v2702 = vpop.f32.mrf.mxu0
        %v2703 = vadd.f32 %v2674, %v2702
        %2704 = vmatmul.bf16.gmra.mxu0 %v1883
        %v2705 = vpop.f32.mrf.mxu0
        %v2706 = vadd.f32 %v2677, %v2705
        %v2707 = vpop.f32.mrf.mxu0
        %v2708 = vadd.f32 %v2679, %v2707
        %2709 = vmatmul.bf16.gmra.mxu0 %v1888
        %v2710 = vpop.f32.mrf.mxu0
        %v2711 = vadd.f32 %v2682, %v2710
        %v2712 = vpop.f32.mrf.mxu0
        %v2713 = vadd.f32 %v2684, %v2712
        %2714 = vdwg.mxu0
        %2715 = vmatpush.bf16.msra.mxu0 %v2602
        %2716 = vmatpush.bf16.msra.mxu0 %v2601
        %2717 = vmatpush.bf16.msra.mxu0 %v2600
        %2718 = vmatpush.bf16.msra.mxu0 %v2599
        %2719 = vmatpush.bf16.msra.mxu0 %v2598
        %2720 = vmatpush.bf16.msra.mxu0 %v2597
        %2721 = vmatpush.bf16.msra.mxu0 %v2596
        %2722 = vmatpush.bf16.msra.mxu0 %v2595
        %2723 = vmatmul.bf16.gmra.mxu0 %v1874
        %v2724 = vpop.f32.mrf.mxu0
        %v2725 = vadd.f32 %v2696, %v2724
        %v2726 = vpop.f32.mrf.mxu0
        %v2727 = vadd.f32 %v2698, %v2726
        %2728 = vmatmul.bf16.gmra.mxu0 %v1879
        %v2729 = vpop.f32.mrf.mxu0
        %v2730 = vadd.f32 %v2701, %v2729
        %v2731 = vpop.f32.mrf.mxu0
        %v2732 = vadd.f32 %v2703, %v2731
        %2733 = vmatmul.bf16.gmra.mxu0 %v1884
        %v2734 = vpop.f32.mrf.mxu0
        %v2735 = vadd.f32 %v2706, %v2734
        %v2736 = vpop.f32.mrf.mxu0
        %v2737 = vadd.f32 %v2708, %v2736
        %2738 = vmatmul.bf16.gmra.mxu0 %v1889
        %v2739 = vpop.f32.mrf.mxu0
        %v2740 = vadd.f32 %v2711, %v2739
        %v2741 = vpop.f32.mrf.mxu0
        %v2742 = vadd.f32 %v2713, %v2741
        %2743 = vdwg.mxu0
        %2744 = vmatpush.bf16.msra.mxu0 %v2610
        %2745 = vmatpush.bf16.msra.mxu0 %v2609
        %2746 = vmatpush.bf16.msra.mxu0 %v2608
        %2747 = vmatpush.bf16.msra.mxu0 %v2607
        %2748 = vmatpush.bf16.msra.mxu0 %v2606
        %2749 = vmatpush.bf16.msra.mxu0 %v2605
        %2750 = vmatpush.bf16.msra.mxu0 %v2604
        %2751 = vmatpush.bf16.msra.mxu0 %v2603
        %2752 = vmatmul.bf16.gmra.mxu0 %v1875
        %v2753 = vpop.f32.mrf.mxu0
        %v2754 = vadd.f32 %v2725, %v2753
        %v2755 = vpop.f32.mrf.mxu0
        %v2756 = vadd.f32 %v2727, %v2755
        %2757 = vmatmul.bf16.gmra.mxu0 %v1880
        %v2758 = vpop.f32.mrf.mxu0
        %v2759 = vadd.f32 %v2730, %v2758
        %v2760 = vpop.f32.mrf.mxu0
        %v2761 = vadd.f32 %v2732, %v2760
        %2762 = vmatmul.bf16.gmra.mxu0 %v1885
        %v2763 = vpop.f32.mrf.mxu0
        %v2764 = vadd.f32 %v2735, %v2763
        %v2765 = vpop.f32.mrf.mxu0
        %v2766 = vadd.f32 %v2737, %v2765
        %2767 = vmatmul.bf16.gmra.mxu0 %v1890
        %v2768 = vpop.f32.mrf.mxu0
        %v2769 = vadd.f32 %v2740, %v2768
        %v2770 = vpop.f32.mrf.mxu0
        %v2771 = vadd.f32 %v2742, %v2770
        %2772 = vdwg.mxu0
        %2773 = vmatpush.bf16.msra.mxu0 0
        %2774 = vmatpush.bf16.msra.mxu0 0
        %2775 = vmatpush.bf16.msra.mxu0 %v2655
        %2776 = vmatpush.bf16.msra.mxu0 %v2615
        %2777 = vmatpush.bf16.msra.mxu0 %v2614
        %2778 = vmatpush.bf16.msra.mxu0 %v2613
        %2779 = vmatpush.bf16.msra.mxu0 %v2612
        %2780 = vmatpush.bf16.msra.mxu0 %v2611
        %2781 = vmatmul.bf16.gmra.mxu0 %v2194
        %v2782 = vpop.f32.mrf.mxu0
        %v2783 = vadd.f32 %v2754, %v2782
        %v2784 = vpop.f32.mrf.mxu0
        %v2785 = vadd.f32 %v2756, %v2784
        %2786 = vmatmul.bf16.gmra.mxu0 %v2197
        %v2787 = vpop.f32.mrf.mxu0
        %v2788 = vadd.f32 %v2759, %v2787
        %v2789 = vpop.f32.mrf.mxu0
        %v2790 = vadd.f32 %v2761, %v2789
        %2791 = vmatmul.bf16.gmra.mxu0 %v2200
        %v2792 = vpop.f32.mrf.mxu0
        %v2793 = vadd.f32 %v2764, %v2792
        %v2794 = vpop.f32.mrf.mxu0
        %v2795 = vadd.f32 %v2766, %v2794
        %2796 = vmatmul.bf16.gmra.mxu0 %v2203
        %v2797 = vpop.f32.mrf.mxu0
        %v2798 = vadd.f32 %v2769, %v2797
        %v2799 = vpop.f32.mrf.mxu0
        %v2800 = vadd.f32 %v2771, %v2799
        %2801 = vdwg.mxu0
        %v2802 = vmax.f32 %v2335, %v2783
        %v2803 = vmax.f32 %v2337, %v2785
        %v2804 = vmax.f32 %v2340, %v2788
        %v2805 = vmax.f32 %v2342, %v2790
        %v2806 = vmax.f32 %v2345, %v2793
        %v2807 = vmax.f32 %v2347, %v2795
        %v2808 = vmax.f32 %v2350, %v2798
        %v2809 = vmax.f32 %v2352, %v2800
        %v2810 = vld [vmem:[%s6] sm:$0x1]
        %v2812 = vperm.slane %v2810, 0
        %v2814 = vadd.f32 %v2802, %v2812
        %v2815 = vadd.f32 %v2803, %v2812
        %v2816 = vadd.f32 %v2804, %v2812
        %v2817 = vadd.f32 %v2805, %v2812
        %v2818 = vadd.f32 %v2806, %v2812
        %v2819 = vadd.f32 %v2807, %v2812
        %v2820 = vadd.f32 %v2808, %v2812
        %v2821 = vadd.f32 %v2809, %v2812
        %vm2822 = vcmask 654336
        %2823 = vst.msk [vmem:[#allocation4] sm:$0xff] %vm2822, %v2814
        %2824 = vst.msk [vmem:[#allocation4 + $0x8] sm:$0xff] %vm2822, %v2815
        %2825 = vst.msk [vmem:[#allocation4 + $0x10] sm:$0xff] %vm2822, %v2816
        %2826 = vst.msk [vmem:[#allocation4 + $0x18] sm:$0xff] %vm2822, %v2817
        %2827 = vst.msk [vmem:[#allocation4 + $0x20] sm:$0xff] %vm2822, %v2818
        %2828 = vst.msk [vmem:[#allocation4 + $0x28] sm:$0xff] %vm2822, %v2819
        %2829 = vst.msk [vmem:[#allocation4 + $0x30] sm:$0xff] %vm2822, %v2820
        %2830 = vst.msk [vmem:[#allocation4 + $0x38] sm:$0xff] %vm2822, %v2821
        %v2831 = vld [vmem:[#allocation4] ss:$2 sm:$0xf]
        %s2832 = scalar_lea.vmem [#allocation4], 8
        %v2833 = vld [vmem:[%s2832] ss:$2 sm:$0xf]
        %s2834 = scalar_lea.vmem [#allocation4], 16
        %v2835 = vld [vmem:[%s2834] ss:$2 sm:$0xf]
        %s2836 = scalar_lea.vmem [#allocation4], 24
        %v2837 = vld [vmem:[%s2836] ss:$2 sm:$0xf]
        %s2838 = scalar_lea.vmem [#allocation4], 32
        %v2839 = vld [vmem:[%s2838] ss:$2 sm:$0xf]
        %s2840 = scalar_lea.vmem [#allocation4], 40
        %v2841 = vld [vmem:[%s2840] ss:$2 sm:$0xf]
        %s2842 = scalar_lea.vmem [#allocation4], 48
        %v2843 = vld [vmem:[%s2842] ss:$2 sm:$0xf]
        %s2844 = scalar_lea.vmem [#allocation4], 56
        %v2845 = vld [vmem:[%s2844] ss:$2 sm:$0xf]
        %s2846 = scalar_lea.vmem [#allocation4], 1
        %v2847 = vld [vmem:[%s2846] ss:$2 sm:$0xf]
        %s2848 = scalar_lea.vmem [#allocation4], 9
        %v2849 = vld [vmem:[%s2848] ss:$2 sm:$0xf]
        %s2850 = scalar_lea.vmem [#allocation4], 17
        %v2851 = vld [vmem:[%s2850] ss:$2 sm:$0xf]
        %s2852 = scalar_lea.vmem [#allocation4], 25
        %v2853 = vld [vmem:[%s2852] ss:$2 sm:$0xf]
        %s2854 = scalar_lea.vmem [#allocation4], 33
        %v2855 = vld [vmem:[%s2854] ss:$2 sm:$0xf]
        %s2856 = scalar_lea.vmem [#allocation4], 41
        %v2857 = vld [vmem:[%s2856] ss:$2 sm:$0xf]
        %s2858 = scalar_lea.vmem [#allocation4], 49
        %v2859 = vld [vmem:[%s2858] ss:$2 sm:$0xf]
        %s2860 = scalar_lea.vmem [#allocation4], 57
        %v2861 = vld [vmem:[%s2860] ss:$2 sm:$0xf]
        %v2862 = vmax.f32 %v2831, %v2847
        %v2863 = vmax.f32 %v2833, %v2849
        %v2864 = vmax.f32 %v2835, %v2851
        %v2865 = vmax.f32 %v2837, %v2853
        %v2866 = vmax.f32 %v2839, %v2855
        %v2867 = vmax.f32 %v2841, %v2857
        %v2868 = vmax.f32 %v2843, %v2859
        %v2869 = vmax.f32 %v2845, %v2861
        %v2870 = vmax.f32 %v2862, 0.0
        %v2871 = vmax.f32 %v2863, 0.0
        %v2872 = vmax.f32 %v2864, 0.0
        %v2873 = vmax.f32 %v2865, 0.0
        %v2874 = vmax.f32 %v2866, 0.0
        %v2875 = vmax.f32 %v2867, 0.0
        %v2876 = vmax.f32 %v2868, 0.0
        %v2877 = vmax.f32 %v2869, 0.0
        %vm2878 = vcmask 650240
        %2879 = vst.msk [vmem:[#allocation5] sm:$0xf] %vm2878, %v2870
        %2880 = vst.msk [vmem:[#allocation5 + $0x4] sm:$0xf] %vm2878, %v2871
        %2881 = vst.msk [vmem:[#allocation5 + $0x8] sm:$0xf] %vm2878, %v2872
        %2882 = vst.msk [vmem:[#allocation5 + $0xc] sm:$0xf] %vm2878, %v2873
        %2883 = vst.msk [vmem:[#allocation5 + $0x10] sm:$0xf] %vm2878, %v2874
        %2884 = vst.msk [vmem:[#allocation5 + $0x14] sm:$0xf] %vm2878, %v2875
        %2885 = vst.msk [vmem:[#allocation5 + $0x18] sm:$0xf] %vm2878, %v2876
        %2886 = vst.msk [vmem:[#allocation5 + $0x1c] sm:$0xf] %vm2878, %v2877
        %v2887 = vld [vmem:[%s8] sm:$0x1]
        %v2888 = vld [vmem:[#allocation5] sm:$0x1]
        %v2889 = vld [vmem:[#allocation5 + $0x4] sm:$0x1]
        %v2890 = vld [vmem:[#allocation5 + $0x8] sm:$0x1]
        %v2891 = vld [vmem:[#allocation5 + $0xc] sm:$0x1]
        %v2892 = vld [vmem:[#allocation5 + $0x10] sm:$0x1]
        %v2893 = vld [vmem:[#allocation5 + $0x14] sm:$0x1]
        %v2894 = vld [vmem:[#allocation5 + $0x18] sm:$0x1]
        %v2895 = vld [vmem:[#allocation5 + $0x1c] sm:$0x1]
        %v2896 = vpack.c.bf16 %v2888, %v2888
        %v2897 = vpack.c.bf16 %v2889, %v2889
        %v2898 = vpack.c.bf16 %v2890, %v2890
        %v2899 = vpack.c.bf16 %v2891, %v2891
        %v2900 = vpack.c.bf16 %v2892, %v2892
        %v2901 = vpack.c.bf16 %v2893, %v2893
        %v2902 = vpack.c.bf16 %v2894, %v2894
        %v2903 = vpack.c.bf16 %v2895, %v2895
        %v2904 = vld [vmem:[%s7] sm:$0xf]
        %v2905 = vld [vmem:[%s7 + $0x4] sm:$0xf]
        %v2906 = vld [vmem:[%s7 + $0x8] sm:$0xf]
        %v2907 = vld [vmem:[%s7 + $0xc] sm:$0xf]
        %v2908 = vld [vmem:[%s7 + $0x10] sm:$0xf]
        %v2909 = vld [vmem:[%s7 + $0x14] sm:$0xf]
        %v2910 = vld [vmem:[%s7 + $0x18] sm:$0xf]
        %v2911 = vld [vmem:[%s7 + $0x1c] sm:$0xf]
        %v2912 = vld [vmem:[%s7 + $0x20] sm:$0xf]
        %v2913 = vld [vmem:[%s7 + $0x24] sm:$0xf]
        %v2922 = vunpack.c.l.b16 %v2896
        %v2923 = vunpack.c.l.b16 %v2897
        %v2924 = vunpack.c.l.b16 %v2898
        %v2925 = vunpack.c.l.b16 %v2899
        %v2926 = vunpack.c.l.b16 %v2900
        %v2927 = vunpack.c.l.b16 %v2901
        %v2928 = vunpack.c.l.b16 %v2902
        %v2929 = vunpack.c.l.b16 %v2903
        %v2930 = vrot.slane %v2923, 7
        %vm2931 = vcmask 1041409
        %v2932 = vsel %vm2931, %v2930, %v2922
        %v2933 = vrot.slane %v2924, 6
        %vm2934 = vcmask 1042434
        %v2935 = vsel %vm2934, %v2933, %v2932
        %v2936 = vrot.slane %v2925, 5
        %vm2937 = vcmask 1043459
        %v2938 = vsel %vm2937, %v2936, %v2935
        %v2939 = vrot.slane %v2926, 4
        %vm2940 = vcmask 1044484
        %v2941 = vsel %vm2940, %v2939, %v2938
        %v2942 = vrot.slane %v2927, 3
        %vm2943 = vcmask 1045509
        %v2944 = vsel %vm2943, %v2942, %v2941
        %v2945 = vrot.slane %v2928, 2
        %vm2946 = vcmask 1046534
        %v2947 = vsel %vm2946, %v2945, %v2944
        %v2948 = vrot.slane %v2929, 1
        %vm2949 = vcmask 1047559
        %v2950 = vsel %vm2949, %v2948, %v2947
        %v2951 = vpack.c.b16 %v2950, %v2950
        %v2962 = vunpack.c.l.b16 %v2904
        %v2963 = vunpack.c.l.b16 %v2905
        %v2964 = vunpack.c.l.b16 %v2906
        %v2965 = vunpack.c.l.b16 %v2907
        %v2966 = vunpack.c.l.b16 %v2908
        %v2967 = vunpack.c.l.b16 %v2909
        %v2968 = vunpack.c.l.b16 %v2910
        %v2969 = vunpack.c.l.b16 %v2911
        %v2970 = vunpack.c.l.b16 %v2912
        %v2971 = vunpack.c.l.b16 %v2913
        %v2972 = vpack.c.b16 %v2963, %v2962
        %v2973 = vpack.c.b16 %v2965, %v2964
        %v2974 = vpack.c.b16 %v2967, %v2966
        %v2975 = vpack.c.b16 %v2969, %v2968
        %v2976 = vpack.c.b16 %v2971, %v2970
        %v2983 = vsel %vm2822, %v2951, 0
        %2985 = vmatpush.bf16.msra.mxu0 0
        %2986 = vmatpush.bf16.msra.mxu0 0
        %2987 = vmatpush.bf16.msra.mxu0 0
        %2988 = vmatpush.bf16.msra.mxu0 %v2976
        %2989 = vmatpush.bf16.msra.mxu0 %v2975
        %2990 = vmatpush.bf16.msra.mxu0 %v2974
        %2991 = vmatpush.bf16.msra.mxu0 %v2973
        %2992 = vmatpush.bf16.msra.mxu0 %v2972
        %2993 = vmatmul.bf16.gmra.mxu0 %v2983
        %v2994 = vpop.f32.mrf.mxu0
        %v2995 = vadd.f32 0.0, %v2994
        %v2996 = vpop.f32.mrf.mxu0
        %2997 = vdwg.mxu0
        %v2999 = vperm.slane %v2887, 0
        %v3001 = vadd.f32 %v2999, %v2995
        %v3002 = vld [vmem:[#allocation5 + $0x1] sm:$0x1]
        %v3003 = vld [vmem:[#allocation5 + $0x5] sm:$0x1]
        %v3004 = vld [vmem:[#allocation5 + $0x9] sm:$0x1]
        %v3005 = vld [vmem:[#allocation5 + $0xd] sm:$0x1]
        %v3006 = vld [vmem:[#allocation5 + $0x11] sm:$0x1]
        %v3007 = vld [vmem:[#allocation5 + $0x15] sm:$0x1]
        %v3008 = vld [vmem:[#allocation5 + $0x19] sm:$0x1]
        %v3009 = vld [vmem:[#allocation5 + $0x1d] sm:$0x1]
        %v3010 = vpack.c.bf16 %v3002, %v3002
        %v3011 = vpack.c.bf16 %v3003, %v3003
        %v3012 = vpack.c.bf16 %v3004, %v3004
        %v3013 = vpack.c.bf16 %v3005, %v3005
        %v3014 = vpack.c.bf16 %v3006, %v3006
        %v3015 = vpack.c.bf16 %v3007, %v3007
        %v3016 = vpack.c.bf16 %v3008, %v3008
        %v3017 = vpack.c.bf16 %v3009, %v3009
        %s3018 = scalar_lea.vmem %s7, 40
        %v3019 = vld [vmem:[%s3018] sm:$0xf]
        %v3020 = vld [vmem:[%s3018 + $0x4] sm:$0xf]
        %v3021 = vld [vmem:[%s3018 + $0x8] sm:$0xf]
        %v3022 = vld [vmem:[%s3018 + $0xc] sm:$0xf]
        %v3023 = vld [vmem:[%s3018 + $0x10] sm:$0xf]
        %v3024 = vld [vmem:[%s3018 + $0x14] sm:$0xf]
        %v3025 = vld [vmem:[%s3018 + $0x18] sm:$0xf]
        %v3026 = vld [vmem:[%s3018 + $0x1c] sm:$0xf]
        %v3027 = vld [vmem:[%s3018 + $0x20] sm:$0xf]
        %v3028 = vld [vmem:[%s3018 + $0x24] sm:$0xf]
        %v3037 = vunpack.c.l.b16 %v3010
        %v3038 = vunpack.c.l.b16 %v3011
        %v3039 = vunpack.c.l.b16 %v3012
        %v3040 = vunpack.c.l.b16 %v3013
        %v3041 = vunpack.c.l.b16 %v3014
        %v3042 = vunpack.c.l.b16 %v3015
        %v3043 = vunpack.c.l.b16 %v3016
        %v3044 = vunpack.c.l.b16 %v3017
        %v3045 = vrot.slane %v3038, 7
        %v3046 = vsel %vm2931, %v3045, %v3037
        %v3047 = vrot.slane %v3039, 6
        %v3048 = vsel %vm2934, %v3047, %v3046
        %v3049 = vrot.slane %v3040, 5
        %v3050 = vsel %vm2937, %v3049, %v3048
        %v3051 = vrot.slane %v3041, 4
        %v3052 = vsel %vm2940, %v3051, %v3050
        %v3053 = vrot.slane %v3042, 3
        %v3054 = vsel %vm2943, %v3053, %v3052
        %v3055 = vrot.slane %v3043, 2
        %v3056 = vsel %vm2946, %v3055, %v3054
        %v3057 = vrot.slane %v3044, 1
        %v3058 = vsel %vm2949, %v3057, %v3056
        %v3059 = vpack.c.b16 %v3058, %v3058
        %v3070 = vunpack.c.l.b16 %v3019
        %v3071 = vunpack.c.l.b16 %v3020
        %v3072 = vunpack.c.l.b16 %v3021
        %v3073 = vunpack.c.l.b16 %v3022
        %v3074 = vunpack.c.l.b16 %v3023
        %v3075 = vunpack.c.l.b16 %v3024
        %v3076 = vunpack.c.l.b16 %v3025
        %v3077 = vunpack.c.l.b16 %v3026
        %v3078 = vunpack.c.l.b16 %v3027
        %v3079 = vunpack.c.l.b16 %v3028
        %v3080 = vpack.c.b16 %v3071, %v3070
        %v3081 = vpack.c.b16 %v3073, %v3072
        %v3082 = vpack.c.b16 %v3075, %v3074
        %v3083 = vpack.c.b16 %v3077, %v3076
        %v3084 = vpack.c.b16 %v3079, %v3078
        %v3091 = vsel %vm2822, %v3059, 0
        %3093 = vmatpush.bf16.msra.mxu0 0
        %3094 = vmatpush.bf16.msra.mxu0 0
        %3095 = vmatpush.bf16.msra.mxu0 0
        %3096 = vmatpush.bf16.msra.mxu0 %v3084
        %3097 = vmatpush.bf16.msra.mxu0 %v3083
        %3098 = vmatpush.bf16.msra.mxu0 %v3082
        %3099 = vmatpush.bf16.msra.mxu0 %v3081
        %3100 = vmatpush.bf16.msra.mxu0 %v3080
        %3101 = vmatmul.bf16.gmra.mxu0 %v3091
        %v3102 = vpop.f32.mrf.mxu0
        %v3103 = vadd.f32 0.0, %v3102
        %v3104 = vpop.f32.mrf.mxu0
        %3105 = vdwg.mxu0
        %v3106 = vadd.f32 %v3001, %v3103
        %v3107 = vld [vmem:[#allocation5 + $0x2] sm:$0x1]
        %v3108 = vld [vmem:[#allocation5 + $0x6] sm:$0x1]
        %v3109 = vld [vmem:[#allocation5 + $0xa] sm:$0x1]
        %v3110 = vld [vmem:[#allocation5 + $0xe] sm:$0x1]
        %v3111 = vld [vmem:[#allocation5 + $0x12] sm:$0x1]
        %v3112 = vld [vmem:[#allocation5 + $0x16] sm:$0x1]
        %v3113 = vld [vmem:[#allocation5 + $0x1a] sm:$0x1]
        %v3114 = vld [vmem:[#allocation5 + $0x1e] sm:$0x1]
        %v3115 = vpack.c.bf16 %v3107, %v3107
        %v3116 = vpack.c.bf16 %v3108, %v3108
        %v3117 = vpack.c.bf16 %v3109, %v3109
        %v3118 = vpack.c.bf16 %v3110, %v3110
        %v3119 = vpack.c.bf16 %v3111, %v3111
        %v3120 = vpack.c.bf16 %v3112, %v3112
        %v3121 = vpack.c.bf16 %v3113, %v3113
        %v3122 = vpack.c.bf16 %v3114, %v3114
        %s3123 = scalar_lea.vmem %s7, 80
        %v3124 = vld [vmem:[%s3123] sm:$0xf]
        %v3125 = vld [vmem:[%s3123 + $0x4] sm:$0xf]
        %v3126 = vld [vmem:[%s3123 + $0x8] sm:$0xf]
        %v3127 = vld [vmem:[%s3123 + $0xc] sm:$0xf]
        %v3128 = vld [vmem:[%s3123 + $0x10] sm:$0xf]
        %v3129 = vld [vmem:[%s3123 + $0x14] sm:$0xf]
        %v3130 = vld [vmem:[%s3123 + $0x18] sm:$0xf]
        %v3131 = vld [vmem:[%s3123 + $0x1c] sm:$0xf]
        %v3132 = vld [vmem:[%s3123 + $0x20] sm:$0xf]
        %v3133 = vld [vmem:[%s3123 + $0x24] sm:$0xf]
        %v3142 = vunpack.c.l.b16 %v3115
        %v3143 = vunpack.c.l.b16 %v3116
        %v3144 = vunpack.c.l.b16 %v3117
        %v3145 = vunpack.c.l.b16 %v3118
        %v3146 = vunpack.c.l.b16 %v3119
        %v3147 = vunpack.c.l.b16 %v3120
        %v3148 = vunpack.c.l.b16 %v3121
        %v3149 = vunpack.c.l.b16 %v3122
        %v3150 = vrot.slane %v3143, 7
        %v3151 = vsel %vm2931, %v3150, %v3142
        %v3152 = vrot.slane %v3144, 6
        %v3153 = vsel %vm2934, %v3152, %v3151
        %v3154 = vrot.slane %v3145, 5
        %v3155 = vsel %vm2937, %v3154, %v3153
        %v3156 = vrot.slane %v3146, 4
        %v3157 = vsel %vm2940, %v3156, %v3155
        %v3158 = vrot.slane %v3147, 3
        %v3159 = vsel %vm2943, %v3158, %v3157
        %v3160 = vrot.slane %v3148, 2
        %v3161 = vsel %vm2946, %v3160, %v3159
        %v3162 = vrot.slane %v3149, 1
        %v3163 = vsel %vm2949, %v3162, %v3161
        %v3164 = vpack.c.b16 %v3163, %v3163
        %v3175 = vunpack.c.l.b16 %v3124
        %v3176 = vunpack.c.l.b16 %v3125
        %v3177 = vunpack.c.l.b16 %v3126
        %v3178 = vunpack.c.l.b16 %v3127
        %v3179 = vunpack.c.l.b16 %v3128
        %v3180 = vunpack.c.l.b16 %v3129
        %v3181 = vunpack.c.l.b16 %v3130
        %v3182 = vunpack.c.l.b16 %v3131
        %v3183 = vunpack.c.l.b16 %v3132
        %v3184 = vunpack.c.l.b16 %v3133
        %v3185 = vpack.c.b16 %v3176, %v3175
        %v3186 = vpack.c.b16 %v3178, %v3177
        %v3187 = vpack.c.b16 %v3180, %v3179
        %v3188 = vpack.c.b16 %v3182, %v3181
        %v3189 = vpack.c.b16 %v3184, %v3183
        %v3196 = vsel %vm2822, %v3164, 0
        %3198 = vmatpush.bf16.msra.mxu0 0
        %3199 = vmatpush.bf16.msra.mxu0 0
        %3200 = vmatpush.bf16.msra.mxu0 0
        %3201 = vmatpush.bf16.msra.mxu0 %v3189
        %3202 = vmatpush.bf16.msra.mxu0 %v3188
        %3203 = vmatpush.bf16.msra.mxu0 %v3187
        %3204 = vmatpush.bf16.msra.mxu0 %v3186
        %3205 = vmatpush.bf16.msra.mxu0 %v3185
        %3206 = vmatmul.bf16.gmra.mxu0 %v3196
        %v3207 = vpop.f32.mrf.mxu0
        %v3208 = vadd.f32 0.0, %v3207
        %v3209 = vpop.f32.mrf.mxu0
        %3210 = vdwg.mxu0
        %v3211 = vadd.f32 %v3106, %v3208
        %v3212 = vld [vmem:[#allocation5 + $0x3] sm:$0x1]
        %v3213 = vld [vmem:[#allocation5 + $0x7] sm:$0x1]
        %v3214 = vld [vmem:[#allocation5 + $0xb] sm:$0x1]
        %v3215 = vld [vmem:[#allocation5 + $0xf] sm:$0x1]
        %v3216 = vld [vmem:[#allocation5 + $0x13] sm:$0x1]
        %v3217 = vld [vmem:[#allocation5 + $0x17] sm:$0x1]
        %v3218 = vld [vmem:[#allocation5 + $0x1b] sm:$0x1]
        %v3219 = vld [vmem:[#allocation5 + $0x1f] sm:$0x1]
        %v3220 = vpack.c.bf16 %v3212, %v3212
        %v3221 = vpack.c.bf16 %v3213, %v3213
        %v3222 = vpack.c.bf16 %v3214, %v3214
        %v3223 = vpack.c.bf16 %v3215, %v3215
        %v3224 = vpack.c.bf16 %v3216, %v3216
        %v3225 = vpack.c.bf16 %v3217, %v3217
        %v3226 = vpack.c.bf16 %v3218, %v3218
        %v3227 = vpack.c.bf16 %v3219, %v3219
        %s3228 = scalar_lea.vmem %s7, 120
        %v3229 = vld [vmem:[%s3228] sm:$0xf]
        %v3230 = vld [vmem:[%s3228 + $0x4] sm:$0xf]
        %v3231 = vld [vmem:[%s3228 + $0x8] sm:$0xf]
        %v3232 = vld [vmem:[%s3228 + $0xc] sm:$0xf]
        %v3233 = vld [vmem:[%s3228 + $0x10] sm:$0xf]
        %v3234 = vld [vmem:[%s3228 + $0x14] sm:$0xf]
        %v3235 = vld [vmem:[%s3228 + $0x18] sm:$0xf]
        %v3236 = vld [vmem:[%s3228 + $0x1c] sm:$0xf]
        %v3237 = vld [vmem:[%s3228 + $0x20] sm:$0xf]
        %v3238 = vld [vmem:[%s3228 + $0x24] sm:$0xf]
        %v3247 = vunpack.c.l.b16 %v3220
        %v3248 = vunpack.c.l.b16 %v3221
        %v3249 = vunpack.c.l.b16 %v3222
        %v3250 = vunpack.c.l.b16 %v3223
        %v3251 = vunpack.c.l.b16 %v3224
        %v3252 = vunpack.c.l.b16 %v3225
        %v3253 = vunpack.c.l.b16 %v3226
        %v3254 = vunpack.c.l.b16 %v3227
        %v3255 = vrot.slane %v3248, 7
        %v3256 = vsel %vm2931, %v3255, %v3247
        %v3257 = vrot.slane %v3249, 6
        %v3258 = vsel %vm2934, %v3257, %v3256
        %v3259 = vrot.slane %v3250, 5
        %v3260 = vsel %vm2937, %v3259, %v3258
        %v3261 = vrot.slane %v3251, 4
        %v3262 = vsel %vm2940, %v3261, %v3260
        %v3263 = vrot.slane %v3252, 3
        %v3264 = vsel %vm2943, %v3263, %v3262
        %v3265 = vrot.slane %v3253, 2
        %v3266 = vsel %vm2946, %v3265, %v3264
        %v3267 = vrot.slane %v3254, 1
        %v3268 = vsel %vm2949, %v3267, %v3266
        %v3269 = vpack.c.b16 %v3268, %v3268
        %v3280 = vunpack.c.l.b16 %v3229
        %v3281 = vunpack.c.l.b16 %v3230
        %v3282 = vunpack.c.l.b16 %v3231
        %v3283 = vunpack.c.l.b16 %v3232
        %v3284 = vunpack.c.l.b16 %v3233
        %v3285 = vunpack.c.l.b16 %v3234
        %v3286 = vunpack.c.l.b16 %v3235
        %v3287 = vunpack.c.l.b16 %v3236
        %v3288 = vunpack.c.l.b16 %v3237
        %v3289 = vunpack.c.l.b16 %v3238
        %v3290 = vpack.c.b16 %v3281, %v3280
        %v3291 = vpack.c.b16 %v3283, %v3282
        %v3292 = vpack.c.b16 %v3285, %v3284
        %v3293 = vpack.c.b16 %v3287, %v3286
        %v3294 = vpack.c.b16 %v3289, %v3288
        %v3301 = vsel %vm2822, %v3269, 0
        %3303 = vmatpush.bf16.msra.mxu0 0
        %3304 = vmatpush.bf16.msra.mxu0 0
        %3305 = vmatpush.bf16.msra.mxu0 0
        %3306 = vmatpush.bf16.msra.mxu0 %v3294
        %3307 = vmatpush.bf16.msra.mxu0 %v3293
        %3308 = vmatpush.bf16.msra.mxu0 %v3292
        %3309 = vmatpush.bf16.msra.mxu0 %v3291
        %3310 = vmatpush.bf16.msra.mxu0 %v3290
        %3311 = vmatmul.bf16.gmra.mxu0 %v3301
        %v3312 = vpop.f32.mrf.mxu0
        %v3313 = vadd.f32 0.0, %v3312
        %v3314 = vpop.f32.mrf.mxu0
        %3315 = vdwg.mxu0
        %v3316 = vadd.f32 %v3211, %v3313
        %v3317 = vmax.f32 %v3316, 0.0
        %v3318 = vpack.c.bf16 %v3317, %v3317
        %v3319 = vld [vmem:[%s9] sm:$0xf]
        %v3320 = vld [vmem:[%s9 + $0x4] sm:$0xf]
        %v3321 = vld [vmem:[%s9 + $0x8] sm:$0xf]
        %v3322 = vld [vmem:[%s9 + $0xc] sm:$0xf]
        %v3323 = vld [vmem:[%s9 + $0x10] sm:$0xf]
        %v3324 = vld [vmem:[%s9 + $0x14] sm:$0xf]
        %v3325 = vld [vmem:[%s9 + $0x18] sm:$0xf]
        %v3326 = vld [vmem:[%s9 + $0x1c] sm:$0xf]
        %v3327 = vld [vmem:[%s9 + $0x20] sm:$0xf]
        %v3328 = vld [vmem:[%s9 + $0x24] sm:$0xf]
        %v3329 = vld [vmem:[%s9 + $0x28] sm:$0xf]
        %v3330 = vld [vmem:[%s9 + $0x2c] sm:$0xf]
        %v3331 = vld [vmem:[%s9 + $0x30] sm:$0xf]
        %v3332 = vld [vmem:[%s9 + $0x34] sm:$0xf]
        %v3333 = vld [vmem:[%s9 + $0x38] sm:$0xf]
        %v3334 = vld [vmem:[%s9 + $0x3c] sm:$0xf]
        %v3335 = vld [vmem:[%s10] sm:$0x1]
        %v3337 = vperm.slane %v3335, 0
        %v3355 = vunpack.c.l.b16 %v3319
        %v3356 = vunpack.c.l.b16 %v3320
        %v3357 = vunpack.c.l.b16 %v3321
        %v3358 = vunpack.c.l.b16 %v3322
        %v3359 = vunpack.c.l.b16 %v3323
        %v3360 = vunpack.c.l.b16 %v3324
        %v3361 = vunpack.c.l.b16 %v3325
        %v3362 = vunpack.c.l.b16 %v3326
        %v3363 = vunpack.c.l.b16 %v3327
        %v3364 = vunpack.c.l.b16 %v3328
        %v3365 = vunpack.c.l.b16 %v3329
        %v3366 = vunpack.c.l.b16 %v3330
        %v3367 = vunpack.c.l.b16 %v3331
        %v3368 = vunpack.c.l.b16 %v3332
        %v3369 = vunpack.c.l.b16 %v3333
        %v3370 = vunpack.c.l.b16 %v3334
        %v3371 = vpack.c.b16 %v3356, %v3355
        %v3372 = vpack.c.b16 %v3358, %v3357
        %v3373 = vpack.c.b16 %v3360, %v3359
        %v3374 = vpack.c.b16 %v3362, %v3361
        %v3375 = vpack.c.b16 %v3364, %v3363
        %v3376 = vpack.c.b16 %v3366, %v3365
        %v3377 = vpack.c.b16 %v3368, %v3367
        %v3378 = vpack.c.b16 %v3370, %v3369
        %3387 = vmatpush.bf16.msra.mxu0 %v3378
        %3388 = vmatpush.bf16.msra.mxu0 %v3377
        %3389 = vmatpush.bf16.msra.mxu0 %v3376
        %3390 = vmatpush.bf16.msra.mxu0 %v3375
        %3391 = vmatpush.bf16.msra.mxu0 %v3374
        %3392 = vmatpush.bf16.msra.mxu0 %v3373
        %3393 = vmatpush.bf16.msra.mxu0 %v3372
        %3394 = vmatpush.bf16.msra.mxu0 %v3371
        %3395 = vmatmul.bf16.gmra.mxu0 %v3318
        %v3396 = vpop.f32.mrf.mxu0
        %v3397 = vadd.f32 %v3337, %v3396
        %v3398 = vpop.f32.mrf.mxu0
        %3399 = vdwg.mxu0
        %3400 = vmax.xlane.f32.xlu0 %v3397
        %v3401 = vpop.xlane.xlu0 %3400
        %v3402 = vsub.f32 %v3397, %v3401
        %v3403 = vmul.f32 %v3402, 1.442695
        %v3404 = vpow.pop %v3403
        %3405 = vadd.xlane.f32.xlu0 %v3404
        %v3406 = vpop.xlane.xlu0 %3405
        %v3407 = vlog2.pop %v3406
        %v3408 = vmul.f32 %v3407, 0.6931472
        %v3409 = vsub.f32 %v3402, %v3408
        %3410 = vst [vmem:[%s382] sm:$0xff] %v3409
        %s3411 = sand.u32 %s269, 1
        %s3412 = scalar_lea.sflag [#allocation7], %s3411
        %s3413 = sand.u32 %s269, 1
        %s3414 = smul.addr %s3413, 8
        %s3415 = scalar_lea.vmem [#allocation6], %s3414
        // Predicated region
        $region65: #{mmnist_forward.1} parent=63 // pred_check
          %p3416 = pneg %p279
        $region66: #{mmnist_forward.1} parent=63 // pred_check_branch
          %3418 = sbr.rel (%p3416) target = $region68
        $region67: #{mmnist_forward.1} parent=63 // pred_region
          %3420 = vsyncadd %s3412, 0
          %s3421 = smul.addr %s25, 8
          %s3422 = scalar_lea.hbm %s11, %s3421
          %s3424 = sshll.u32 %s3415, 4
          %s3425 = int_to_ptr.vmem [resolvable:$true] %s3424
          %s3426 = sshll.u32 %s3422, 4
          %s3427 = int_to_ptr.hbm [resolvable:$true] %s3426
          %3429 = dma.vmem_to_hbm [thread:$0]  %s3425, 128, %s3427, %s3412
        $region68: #{mmnist_forward.1} parent=63 // pred_fallthru
          _
      $region64: #{mmnist_forward.1} parent=5 // pred_fallthru
        _
      %p3430 = scmp.le.s32.totalorder 2, %s20
      // Predicated region
      $region69: #{mmnist_forward.1} parent=5 // pred_check
        %p3431 = pneg %p3430
      $region70: #{mmnist_forward.1} parent=5 // pred_check_branch
        %3433 = sbr.rel (%p3431) target = $region72
      $region71: #{mmnist_forward.1} parent=5 // pred_region
        %s3434 = ssub.s32 %s20, 2
        // Predicated region
        $region73: #{mmnist_forward.1} parent=71 // pred_check
          %p3435 = pneg %p285
        $region74: #{mmnist_forward.1} parent=71 // pred_check_branch
          %3437 = sbr.rel (%p3435) target = $region76
        $region75: #{mmnist_forward.1} parent=71 // pred_region
          %s3438 = sand.u32 %s270, 1
          %s3439 = scalar_lea.sflag [#allocation7], %s3438
          %s3440 = sand.u32 %s270, 1
          %s3441 = smul.addr %s3440, 8
          %s3442 = scalar_lea.vmem [#allocation6], %s3441
          %3444 = dma.done %s3439, 128
        $region76: #{mmnist_forward.1} parent=71 // pred_fallthru
          _
      $region72: #{mmnist_forward.1} parent=5 // pred_fallthru
        _
    $region6: #{mmnist_forward.1} parent=1 // loop_footer
      %s24 = sadd.s32 1, %s20
    $region7: #{mmnist_forward.1} parent=1 // loop_footer_branch
      %19 = sbr.rel target = $region3
    $region8: #{mmnist_forward.1} parent=1 // loop_exit
      _
    %3445 = vsyncpa [#allocation7], 1
    %s3446 = scalar_lea.sflag [#allocation7], 1
    %3447 = vsyncpa %s3446, 1

</llo_original>
